<compile_context>
chip_gen: v7x
topology: tpu7x:2x2x1
jax: 0.10.0
libtpu: 0.0.40
codegen_flags: <defaults>
</compile_context>

<pallas_src>
import functools

import jax
import jax.numpy as jnp
from jax.experimental import pallas as pl
from jax.experimental.pallas import tpu as pltpu

EPS = 1e-5          # PyTorch BatchNorm2d default
LANE = 128
_VMEM_LIMIT = 32 * 1024 * 1024   # safe on v5e/v6e/v7x


# ------------------------------ small helpers ------------------------------ #

def _round_up(x, m):
    return (x + m - 1) // m * m


def _row_tile(M, target):
    """Largest divisor of M that is <= target and a multiple of 8 (else M)."""
    for t in range(min(M, target), 0, -1):
        if M % t == 0 and t % 8 == 0:
            return t
    return M


def _pick_th(Ho, Wo, target_rows=512):
    """Output rows per tile: divides Ho, keeps (th*Wo, tn) blocks ~512 rows."""
    th = max(1, min(Ho, target_rows // max(Wo, 1)))
    while Ho % th:
        th -= 1
    # keep the (th*Wo, tn) output block sublane-aligned when possible
    while (th * Wo) % 8 and th < Ho:
        th += 1
        while Ho % th:
            th += 1
    return th


# ----------------------------- Pallas kernels ------------------------------ #

def _bn_relu_kernel(x_ref, s_ref, b_ref, o_ref):
    # y = relu(x * scale + bias); scale/bias broadcast per-channel (lane dim).
    o_ref[...] = jnp.maximum(
        x_ref[...] * s_ref[...] + b_ref[...], 0.0).astype(o_ref.dtype)


def _matmul_kernel(x_ref, w_ref, o_ref):
    o_ref[...] = jnp.dot(
        x_ref[...], w_ref[...],
        preferred_element_type=jnp.float32).astype(o_ref.dtype)


def _conv3x3_kernel(*refs, stride, th, Wo, Cp, tn, bn_epi, add_res):
    """One (image, cout-tile, row-tile) step of a 3x3 conv.

    refs = x_ref (s*s, Ho+2, Wo+2, Cp) phase planes   [resident per image]
           w_ref (9, Cp, tn)                          [resident per cout tile]
           [s_ref, b_ref (1, tn)]  fused bn+relu epilogue (conv1)
           [r_ref (tm, tn)]        fused residual add      (conv2)
           o_ref (tm, tn)
    """
    x_ref, w_ref = refs[0], refs[1]
    k = 2
    if bn_epi:
        s_ref, b_ref = refs[k], refs[k + 1]
        k += 2
    if add_res:
        r_ref = refs[k]
        k += 1
    o_ref = refs[k]

    hi = pl.program_id(2)                 # output-row tile index
    tm = th * Wo
    acc = jnp.zeros((tm, tn), jnp.float32)
    for t in range(9):                    # unrolled 3x3 tap loop (MXU matmuls)
        dy, dx = divmod(t, 3)
        ph = (dy % stride) * stride + (dx % stride)
        oy, ox = dy // stride, dx // stride
        win = x_ref[ph, pl.ds(hi * th + oy, th), pl.ds(ox, Wo), :]  # (th,Wo,Cp)
        acc = acc + jnp.dot(win.reshape(tm, Cp), w_ref[t],
                            preferred_element_type=jnp.float32)
    if bn_epi:                            # fused bn2 + ReLU
        acc = jnp.maximum(acc * s_ref[...] + b_ref[...], 0.0)
    if add_res:                           # fused shortcut add
        acc = acc + r_ref[...].astype(jnp.float32)
    o_ref[...] = acc.astype(o_ref.dtype)


# ------------------------------ Pallas wrappers ---------------------------- #

def bn_relu_pallas(x2, scale, bias):
    """Tiled, lane-dense inference BN+ReLU on (M, Cp)."""
    M, Cp = x2.shape
    tm = _row_tile(M, 1024)
    return pl.pallas_call(
        _bn_relu_kernel,
        grid=(M // tm,),
        in_specs=[pl.BlockSpec((tm, Cp), lambda i: (i, 0)),
                  pl.BlockSpec((1, Cp), lambda i: (0, 0)),
                  pl.BlockSpec((1, Cp), lambda i: (0, 0))],
        out_specs=pl.BlockSpec((tm, Cp), lambda i: (i, 0)),
        out_shape=jax.ShapeDtypeStruct((M, Cp), x2.dtype),
        compiler_params=pltpu.CompilerParams(
            dimension_semantics=("parallel",),
            vmem_limit_bytes=_VMEM_LIMIT),
    )(x2, scale, bias)


def matmul_pallas(x, w):
    """Tiled (M,K)@(K,Nc) — used for the 1x1 shortcut conv (K = Cp, untiled)."""
    M, K = x.shape
    _, Nc = w.shape
    tm = _row_tile(M, 512)
    tn = 256 if Nc % 256 == 0 else LANE
    return pl.pallas_call(
        _matmul_kernel,
        grid=(Nc // tn, M // tm),          # M innermost -> weight stays resident
        in_specs=[pl.BlockSpec((tm, K), lambda j, i: (i, 0)),
                  pl.BlockSpec((K, tn), lambda j, i: (0, j))],
        out_specs=pl.BlockSpec((tm, tn), lambda j, i: (i, j)),
        out_shape=jax.ShapeDtypeStruct((M, Nc), x.dtype),
        compiler_params=pltpu.CompilerParams(
            dimension_semantics=("parallel", "parallel"),
            vmem_limit_bytes=_VMEM_LIMIT),
    )(x, w)


def _make_phases(a_img, stride, Ho, Wo):
    """(N,H,W,Cp) activation -> (N, s*s, Ho+2, Wo+2, Cp) zero-padded phase planes.

    P[:, (dy%s)*s + dx%s, r, c, :] == pad1(a)[:, r*s + dy, c*s + dx, :] so every
    tap of a stride-s 3x3 conv reads a contiguous window of one plane — no
    strided access inside the kernel, no 9x im2col blow-up in HBM.
    """
    N, H, W, Cp = a_img.shape
    s = stride
    Hp, Wp = (Ho + 2) * s, (Wo + 2) * s
    a_pad = jnp.pad(a_img, ((0, 0), (1, Hp - H - 1), (1, Wp - W - 1), (0, 0)))
    planes = [a_pad[:, py::s, px::s, :] for py in range(s) for px in range(s)]
    return jnp.stack(planes, axis=1)


def conv3x3_pallas(a_img, w9, stride, bn_scale=None, bn_bias=None, residual=None):
    """3x3 conv (padding=1) of an already-activated NHWC image, flat output."""
    N, H, W, Cp = a_img.shape
    Cop = w9.shape[2]
    s = stride
    Ho = (H - 1) // s + 1
    Wo = (W - 1) // s + 1
    P = _make_phases(a_img, s, Ho, Wo)

    tn = 256 if Cop % 256 == 0 else LANE
    th = _pick_th(Ho, Wo)
    tm = th * Wo
    n_h = Ho // th
    n_j = Cop // tn

    in_specs = [
        pl.BlockSpec((None, s * s, Ho + 2, Wo + 2, Cp),
                     lambda n, j, h: (n, 0, 0, 0, 0)),      # resident per image
        pl.BlockSpec((9, Cp, tn), lambda n, j, h: (0, 0, j)),  # resident per j
    ]
    args = [P, w9]
    if bn_scale is not None:
        in_specs += [pl.BlockSpec((1, tn), lambda n, j, h: (0, j)),
                     pl.BlockSpec((1, tn), lambda n, j, h: (0, j))]
        args += [bn_scale, bn_bias]
    if residual is not None:
        in_specs.append(pl.BlockSpec((tm, tn), lambda n, j, h: (n * n_h + h, j)))
        args.append(residual)

    kernel = functools.partial(
        _conv3x3_kernel, stride=s, th=th, Wo=Wo, Cp=Cp, tn=tn,
        bn_epi=bn_scale is not None, add_res=residual is not None)

    return pl.pallas_call(
        kernel,
        grid=(N, n_j, n_h),
        in_specs=in_specs,
        out_specs=pl.BlockSpec((tm, tn), lambda n, j, h: (n * n_h + h, j)),
        out_shape=jax.ShapeDtypeStruct((N * Ho * Wo, Cop), a_img.dtype),
        compiler_params=pltpu.CompilerParams(
            dimension_semantics=("parallel", "parallel", "parallel"),
            vmem_limit_bytes=_VMEM_LIMIT),
        cost_estimate=pl.CostEstimate(
            flops=2 * N * Ho * Wo * 9 * Cp * Cop,
            transcendentals=0,
            bytes_accessed=4 * (P.size + w9.size + N * Ho * Wo * Cop)),
    )(*args)


# ---------------------------- parameter packing ----------------------------- #

def _fold_bn(gamma, beta, mean, var, Cpad):
    scale = gamma / jnp.sqrt(var + EPS)
    bias = beta - mean * scale
    pad = Cpad - gamma.shape[0]
    scale = jnp.pad(scale, (0, pad))
    bias = jnp.pad(bias, (0, pad))
    return scale.reshape(1, Cpad), bias.reshape(1, Cpad)


def _pad_w3(w_oihw, Cp, Cop):
    Cout, Cin, _, _ = w_oihw.shape
    w = jnp.transpose(w_oihw, (2, 3, 1, 0)).reshape(9, Cin, Cout)  # (tap,Cin,Cout)
    return jnp.pad(w, ((0, 0), (0, Cp - Cin), (0, Cop - Cout)))


def _pad_w1(w_oihw, Cp, Cop):
    Cout, Cin, _, _ = w_oihw.shape
    w = jnp.transpose(w_oihw, (2, 3, 1, 0)).reshape(Cin, Cout)
    return jnp.pad(w, ((0, Cp - Cin), (0, Cop - Cout)))


# ------------------------------ PreActBlock -------------------------------- #

def preact_block_forward(x_nchw, params, stride):
    """out = conv2(relu(bn2(conv1(relu(bn1(x)))))) + shortcut   (NCHW in/out)."""
    N, Cin, H, W = x_nchw.shape
    Cout = params["w1"].shape[0]
    Cp = _round_up(Cin, LANE)
    Cop = _round_up(Cout, LANE)

    x = jnp.transpose(x_nchw, (0, 2, 3, 1))                    # NCHW -> NHWC
    x = jnp.pad(x, ((0, 0), (0, 0), (0, 0), (0, Cp - Cin)))    # lane-dense pad

    s1, b1 = _fold_bn(*params["bn1"], Cp)
    a1 = bn_relu_pallas(x.reshape(N * H * W, Cp), s1, b1).reshape(N, H, W, Cp)

    Ho = (H - 1) // stride + 1
    Wo = (W - 1) // stride + 1

    if "w_sc" in params:
        sc = matmul_pallas(
            a1[:, ::stride, ::stride, :].reshape(N * Ho * Wo, Cp),
            _pad_w1(params["w_sc"], Cp, Cop))
    else:
        sc = x.reshape(N * H * W, Cp)      # identity shortcut (Cin==Cout, stride==1)

    s2, b2 = _fold_bn(*params["bn2"], Cop)
    a2 = conv3x3_pallas(a1, _pad_w3(params["w1"], Cp, Cop), stride,
                        bn_scale=s2, bn_bias=b2)               # conv1 ∘ bn2 ∘ relu
    out = conv3x3_pallas(a2.reshape(N, Ho, Wo, Cop),
                         _pad_w3(params["w2"], Cop, Cop), 1,
                         residual=sc)                          # conv2 + shortcut

    out = out.reshape(N, Ho, Wo, Cop)[:, :, :, :Cout]          # drop lane padding
    return jnp.transpose(out, (0, 3, 1, 2))                    # NHWC -> NCHW


# ---------------------------- reference (checks) ---------------------------- #

def reference_forward(x_nchw, params, stride):
    def bn(x, g, b, m, v):
        g, b, m, v = (t[None, :, None, None] for t in (g, b, m, v))
        return (x - m) / jnp.sqrt(v + EPS) * g + b

    def conv(x, w, s, pad):
        return jax.lax.conv_general_dilated(
            x, w, (s, s), [(pad, pad), (pad, pad)],
            dimension_numbers=("NCHW", "OIHW", "NCHW"))

    a1 = jax.nn.relu(bn(x_nchw, *params["bn1"]))
    sc = conv(a1, params["w_sc"], stride, 0) if "w_sc" in params else x_nchw
    h1 = conv(a1, params["w1"], stride, 1)
    a2 = jax.nn.relu(bn(h1, *params["bn2"]))
    return conv(a2, params["w2"], 1, 1) + sc


# ---------------------------------- main ------------------------------------ #

def make_params(key, in_planes, planes, stride):
    ks = jax.random.split(key, 8)

    def bn_params(k, c):
        k1, k2, k3, k4 = jax.random.split(k, 4)
        gamma = jax.random.uniform(k1, (c,), jnp.float32, 0.5, 1.5)
        beta = 0.1 * jax.random.normal(k2, (c,), jnp.float32)
        mean = 0.1 * jax.random.normal(k3, (c,), jnp.float32)
        var = jax.random.uniform(k4, (c,), jnp.float32, 0.5, 1.5)
        return (gamma, beta, mean, var)

    params = {
        "bn1": bn_params(ks[0], in_planes),
        "bn2": bn_params(ks[1], planes),
        "w1": jax.random.normal(ks[2], (planes, in_planes, 3, 3), jnp.float32)
              * (1.0 / (3 * 3 * in_planes)) ** 0.5,
        "w2": jax.random.normal(ks[3], (planes, planes, 3, 3), jnp.float32)
              * (1.0 / (3 * 3 * planes)) ** 0.5,
    }
    if stride != 1 or in_planes != planes:
        params["w_sc"] = jax.random.normal(
            ks[4], (planes, in_planes, 1, 1), jnp.float32) * (1.0 / in_planes) ** 0.5
    return params


if __name__ == "__main__":
    key = jax.random.PRNGKey(0)
    k_x, k_p = jax.random.split(key)

    N, in_planes, H, W = 2, 4, 16, 16
    planes, stride = 8, 2            # exercises the strided 1x1 shortcut

    x = jax.random.normal(k_x, (N, in_planes, H, W), jnp.float32)
    params = make_params(k_p, in_planes, planes, stride)

    fwd = jax.jit(lambda xx, pp: preact_block_forward(xx, pp, stride))
    out = jax.block_until_ready(fwd(x, params))

    ref = jax.block_until_ready(reference_forward(x, params, stride))
    assert out.shape == ref.shape == (N, planes, H // stride, W // stride), out.shape
    assert jnp.allclose(out, ref, rtol=1e-4, atol=1e-4), float(
        jnp.max(jnp.abs(out - ref)))

    print("KERNEL_OK")
</pallas_src>

<mosaic_0001>
module attributes {stable_mosaic.version = 11 : i64} {
  func.func @_bn_relu_kernel(%arg0: i32, %arg1: memref<512x128xf32, #tpu.memory_space<vmem>>, %arg2: memref<1x128xf32, #tpu.memory_space<vmem>>, %arg3: memref<1x128xf32, #tpu.memory_space<vmem>>, %arg4: memref<512x128xf32, #tpu.memory_space<vmem>>) attributes {dimension_semantics = [#tpu.dimension_semantics<parallel>], iteration_bounds = array<i64: 1>, scalar_prefetch = 0 : i64, scratch_operands = 0 : i64, tpu.core_type = #tpu.core_type<tc>, window_params = [{transform_indices = @transform_0, window_bounds = array<i64: 512, 128>}, {pipeline_mode = #tpu.pipeline_mode<synchronous>, transform_indices = @transform_1, window_bounds = array<i64: 1, 128>}, {pipeline_mode = #tpu.pipeline_mode<synchronous>, transform_indices = @transform_2, window_bounds = array<i64: 1, 128>}, {transform_indices = @transform_3, window_bounds = array<i64: 512, 128>}]} {
    %c0 = arith.constant 0 : index
    %c0_0 = arith.constant 0 : index
    %0 = vector.load %arg1[%c0, %c0_0] : memref<512x128xf32, #tpu.memory_space<vmem>>, vector<512x128xf32>
    %c0_1 = arith.constant 0 : index
    %c0_2 = arith.constant 0 : index
    %1 = vector.load %arg2[%c0_1, %c0_2] : memref<1x128xf32, #tpu.memory_space<vmem>>, vector<1x128xf32>
    %2 = vector.broadcast %1 : vector<1x128xf32> to vector<512x128xf32>
    %3 = arith.mulf %0, %2 : vector<512x128xf32>
    %c0_3 = arith.constant 0 : index
    %c0_4 = arith.constant 0 : index
    %4 = vector.load %arg3[%c0_3, %c0_4] : memref<1x128xf32, #tpu.memory_space<vmem>>, vector<1x128xf32>
    %5 = vector.broadcast %4 : vector<1x128xf32> to vector<512x128xf32>
    %6 = arith.addf %3, %5 : vector<512x128xf32>
    %cst = arith.constant 0.000000e+00 : f32
    %7 = vector.broadcast %cst : f32 to vector<512x128xf32>
    %8 = arith.maximumf %6, %7 : vector<512x128xf32>
    %c0_5 = arith.constant 0 : index
    %c0_6 = arith.constant 0 : index
    %9 = vector.load %arg4[%c0_5, %c0_6] : memref<512x128xf32, #tpu.memory_space<vmem>>, vector<512x128xf32>
    tpu.vector_store %arg4[%c0_5, %c0_6], %8 {strides = array<i32>} : memref<512x128xf32, #tpu.memory_space<vmem>>, vector<512x128xf32>,
    return
  }
  func.func @transform_0(%arg0: i32) -> (i32, i32) {
    %c0_i32 = arith.constant 0 : i32
    %c0_i32_0 = arith.constant 0 : i32
    return %arg0, %c0_i32 : i32, i32
  }
  func.func @transform_1(%arg0: i32) -> (i32, i32) {
    %c0_i32 = arith.constant 0 : i32
    %c0_i32_0 = arith.constant 0 : i32
    %c0_i32_1 = arith.constant 0 : i32
    return %c0_i32, %c0_i32_0 : i32, i32
  }
  func.func @transform_2(%arg0: i32) -> (i32, i32) {
    %c0_i32 = arith.constant 0 : i32
    %c0_i32_0 = arith.constant 0 : i32
    %c0_i32_1 = arith.constant 0 : i32
    return %c0_i32, %c0_i32_0 : i32, i32
  }
  func.func @transform_3(%arg0: i32) -> (i32, i32) {
    %c0_i32 = arith.constant 0 : i32
    %c0_i32_0 = arith.constant 0 : i32
    return %arg0, %c0_i32 : i32, i32
  }
}

module attributes {stable_mosaic.version = 11 : i64} {
  func.func @_conv3x3_kernel(%arg0: i32, %arg1: i32, %arg2: i32, %arg3: memref<1x4x10x10x128xf32, #tpu.memory_space<vmem>>, %arg4: memref<9x128x128xf32, #tpu.memory_space<vmem>>, %arg5: memref<1x128xf32, #tpu.memory_space<vmem>>, %arg6: memref<1x128xf32, #tpu.memory_space<vmem>>, %arg7: memref<64x128xf32, #tpu.memory_space<vmem>>) attributes {dimension_semantics = [#tpu.dimension_semantics<parallel>, #tpu.dimension_semantics<parallel>, #tpu.dimension_semantics<parallel>], iteration_bounds = array<i64: 2, 1, 1>, scalar_prefetch = 0 : i64, scratch_operands = 0 : i64, tpu.core_type = #tpu.core_type<tc>, window_params = [{transform_indices = @transform_0, window_bounds = array<i64: 1, 4, 10, 10, 128>}, {transform_indices = @transform_1, window_bounds = array<i64: 9, 128, 128>}, {transform_indices = @transform_2, window_bounds = array<i64: 1, 128>}, {transform_indices = @transform_3, window_bounds = array<i64: 1, 128>}, {transform_indices = @transform_4, window_bounds = array<i64: 64, 128>}]} {
    %cst = arith.constant 0.000000e+00 : f32
    %0 = vector.broadcast %cst : f32 to vector<64x128xf32>
    %c8_i32 = arith.constant 8 : i32
    %1 = arith.muli %arg2, %c8_i32 : i32
    %c0_i32 = arith.constant 0 : i32
    %2 = arith.addi %1, %c0_i32 : i32
    %c0 = arith.constant 0 : index
    %c0_0 = arith.constant 0 : index
    %3 = arith.index_cast %2 : i32 to index
    %c0_1 = arith.constant 0 : index
    %c0_2 = arith.constant 0 : index
    %4 = vector.load %arg3[%c0, %c0_0, %3, %c0_1, %c0_2] : memref<1x4x10x10x128xf32, #tpu.memory_space<vmem>>, vector<1x1x8x8x128xf32>
    %5 = vector.shape_cast %4 : vector<1x1x8x8x128xf32> to vector<8x8x128xf32>
    %6 = vector.shape_cast %5 : vector<8x8x128xf32> to vector<64x128xf32>
    %c0_3 = arith.constant 0 : index
    %c0_4 = arith.constant 0 : index
    %c0_5 = arith.constant 0 : index
    %7 = vector.load %arg4[%c0_3, %c0_4, %c0_5] : memref<9x128x128xf32, #tpu.memory_space<vmem>>, vector<1x128x128xf32>
    %8 = vector.shape_cast %7 : vector<1x128x128xf32> to vector<128x128xf32>
    %cst_6 = arith.constant dense<0.000000e+00> : vector<64x128xf32>
    %9 = tpu.matmul %6, %8, %cst_6 {dimension_numbers = #tpu.dot_dimension_numbers<[1], [0], [0], [1], [0, 0, 1, 1], [], []>} : vector<64x128xf32>, vector<128x128xf32>, vector<64x128xf32> -> vector<64x128xf32>
    %10 = arith.addf %0, %9 : vector<64x128xf32>
    %c8_i32_7 = arith.constant 8 : i32
    %11 = arith.muli %arg2, %c8_i32_7 : i32
    %c0_i32_8 = arith.constant 0 : i32
    %12 = arith.addi %11, %c0_i32_8 : i32
    %c0_9 = arith.constant 0 : index
    %c1 = arith.constant 1 : index
    %13 = arith.index_cast %12 : i32 to index
    %c0_10 = arith.constant 0 : index
    %c0_11 = arith.constant 0 : index
    %14 = vector.load %arg3[%c0_9, %c1, %13, %c0_10, %c0_11] : memref<1x4x10x10x128xf32, #tpu.memory_space<vmem>>, vector<1x1x8x8x128xf32>
    %15 = vector.shape_cast %14 : vector<1x1x8x8x128xf32> to vector<8x8x128xf32>
    %16 = vector.shape_cast %15 : vector<8x8x128xf32> to vector<64x128xf32>
    %c1_12 = arith.constant 1 : index
    %c0_13 = arith.constant 0 : index
    %c0_14 = arith.constant 0 : index
    %17 = vector.load %arg4[%c1_12, %c0_13, %c0_14] : memref<9x128x128xf32, #tpu.memory_space<vmem>>, vector<1x128x128xf32>
    %18 = vector.shape_cast %17 : vector<1x128x128xf32> to vector<128x128xf32>
    %cst_15 = arith.constant dense<0.000000e+00> : vector<64x128xf32>
    %19 = tpu.matmul %16, %18, %cst_15 {dimension_numbers = #tpu.dot_dimension_numbers<[1], [0], [0], [1], [0, 0, 1, 1], [], []>} : vector<64x128xf32>, vector<128x128xf32>, vector<64x128xf32> -> vector<64x128xf32>
    %20 = arith.addf %10, %19 : vector<64x128xf32>
    %c8_i32_16 = arith.constant 8 : i32
    %21 = arith.muli %arg2, %c8_i32_16 : i32
    %c0_i32_17 = arith.constant 0 : i32
    %22 = arith.addi %21, %c0_i32_17 : i32
    %c0_18 = arith.constant 0 : index
    %c0_19 = arith.constant 0 : index
    %23 = arith.index_cast %22 : i32 to index
    %c1_20 = arith.constant 1 : index
    %c0_21 = arith.constant 0 : index
    %24 = vector.load %arg3[%c0_18, %c0_19, %23, %c1_20, %c0_21] : memref<1x4x10x10x128xf32, #tpu.memory_space<vmem>>, vector<1x1x8x8x128xf32>
    %25 = vector.shape_cast %24 : vector<1x1x8x8x128xf32> to vector<8x8x128xf32>
    %26 = vector.shape_cast %25 : vector<8x8x128xf32> to vector<64x128xf32>
    %c2 = arith.constant 2 : index
    %c0_22 = arith.constant 0 : index
    %c0_23 = arith.constant 0 : index
    %27 = vector.load %arg4[%c2, %c0_22, %c0_23] : memref<9x128x128xf32, #tpu.memory_space<vmem>>, vector<1x128x128xf32>
    %28 = vector.shape_cast %27 : vector<1x128x128xf32> to vector<128x128xf32>
    %cst_24 = arith.constant dense<0.000000e+00> : vector<64x128xf32>
    %29 = tpu.matmul %26, %28, %cst_24 {dimension_numbers = #tpu.dot_dimension_numbers<[1], [0], [0], [1], [0, 0, 1, 1], [], []>} : vector<64x128xf32>, vector<128x128xf32>, vector<64x128xf32> -> vector<64x128xf32>
    %30 = arith.addf %20, %29 : vector<64x128xf32>
    %c8_i32_25 = arith.constant 8 : i32
    %31 = arith.muli %arg2, %c8_i32_25 : i32
    %c0_i32_26 = arith.constant 0 : i32
    %32 = arith.addi %31, %c0_i32_26 : i32
    %c0_27 = arith.constant 0 : index
    %c2_28 = arith.constant 2 : index
    %33 = arith.index_cast %32 : i32 to index
    %c0_29 = arith.constant 0 : index
    %c0_30 = arith.constant 0 : index
    %34 = vector.load %arg3[%c0_27, %c2_28, %33, %c0_29, %c0_30] : memref<1x4x10x10x128xf32, #tpu.memory_space<vmem>>, vector<1x1x8x8x128xf32>
    %35 = vector.shape_cast %34 : vector<1x1x8x8x128xf32> to vector<8x8x128xf32>
    %36 = vector.shape_cast %35 : vector<8x8x128xf32> to vector<64x128xf32>
    %c3 = arith.constant 3 : index
    %c0_31 = arith.constant 0 : index
    %c0_32 = arith.constant 0 : index
    %37 = vector.load %arg4[%c3, %c0_31, %c0_32] : memref<9x128x128xf32, #tpu.memory_space<vmem>>, vector<1x128x128xf32>
    %38 = vector.shape_cast %37 : vector<1x128x128xf32> to vector<128x128xf32>
    %cst_33 = arith.constant dense<0.000000e+00> : vector<64x128xf32>
    %39 = tpu.matmul %36, %38, %cst_33 {dimension_numbers = #tpu.dot_dimension_numbers<[1], [0], [0], [1], [0, 0, 1, 1], [], []>} : vector<64x128xf32>, vector<128x128xf32>, vector<64x128xf32> -> vector<64x128xf32>
    %40 = arith.addf %30, %39 : vector<64x128xf32>
    %c8_i32_34 = arith.constant 8 : i32
    %41 = arith.muli %arg2, %c8_i32_34 : i32
    %c0_i32_35 = arith.constant 0 : i32
    %42 = arith.addi %41, %c0_i32_35 : i32
    %c0_36 = arith.constant 0 : index
    %c3_37 = arith.constant 3 : index
    %43 = arith.index_cast %42 : i32 to index
    %c0_38 = arith.constant 0 : index
    %c0_39 = arith.constant 0 : index
    %44 = vector.load %arg3[%c0_36, %c3_37, %43, %c0_38, %c0_39] : memref<1x4x10x10x128xf32, #tpu.memory_space<vmem>>, vector<1x1x8x8x128xf32>
    %45 = vector.shape_cast %44 : vector<1x1x8x8x128xf32> to vector<8x8x128xf32>
    %46 = vector.shape_cast %45 : vector<8x8x128xf32> to vector<64x128xf32>
    %c4 = arith.constant 4 : index
    %c0_40 = arith.constant 0 : index
    %c0_41 = arith.constant 0 : index
    %47 = vector.load %arg4[%c4, %c0_40, %c0_41] : memref<9x128x128xf32, #tpu.memory_space<vmem>>, vector<1x128x128xf32>
    %48 = vector.shape_cast %47 : vector<1x128x128xf32> to vector<128x128xf32>
    %cst_42 = arith.constant dense<0.000000e+00> : vector<64x128xf32>
    %49 = tpu.matmul %46, %48, %cst_42 {dimension_numbers = #tpu.dot_dimension_numbers<[1], [0], [0], [1], [0, 0, 1, 1], [], []>} : vector<64x128xf32>, vector<128x128xf32>, vector<64x128xf32> -> vector<64x128xf32>
    %50 = arith.addf %40, %49 : vector<64x128xf32>
    %c8_i32_43 = arith.constant 8 : i32
    %51 = arith.muli %arg2, %c8_i32_43 : i32
    %c0_i32_44 = arith.constant 0 : i32
    %52 = arith.addi %51, %c0_i32_44 : i32
    %c0_45 = arith.constant 0 : index
    %c2_46 = arith.constant 2 : index
    %53 = arith.index_cast %52 : i32 to index
    %c1_47 = arith.constant 1 : index
    %c0_48 = arith.constant 0 : index
    %54 = vector.load %arg3[%c0_45, %c2_46, %53, %c1_47, %c0_48] : memref<1x4x10x10x128xf32, #tpu.memory_space<vmem>>, vector<1x1x8x8x128xf32>
    %55 = vector.shape_cast %54 : vector<1x1x8x8x128xf32> to vector<8x8x128xf32>
    %56 = vector.shape_cast %55 : vector<8x8x128xf32> to vector<64x128xf32>
    %c5 = arith.constant 5 : index
    %c0_49 = arith.constant 0 : index
    %c0_50 = arith.constant 0 : index
    %57 = vector.load %arg4[%c5, %c0_49, %c0_50] : memref<9x128x128xf32, #tpu.memory_space<vmem>>, vector<1x128x128xf32>
    %58 = vector.shape_cast %57 : vector<1x128x128xf32> to vector<128x128xf32>
    %cst_51 = arith.constant dense<0.000000e+00> : vector<64x128xf32>
    %59 = tpu.matmul %56, %58, %cst_51 {dimension_numbers = #tpu.dot_dimension_numbers<[1], [0], [0], [1], [0, 0, 1, 1], [], []>} : vector<64x128xf32>, vector<128x128xf32>, vector<64x128xf32> -> vector<64x128xf32>
    %60 = arith.addf %50, %59 : vector<64x128xf32>
    %c8_i32_52 = arith.constant 8 : i32
    %61 = arith.muli %arg2, %c8_i32_52 : i32
    %c1_i32 = arith.constant 1 : i32
    %62 = arith.addi %61, %c1_i32 : i32
    %c0_53 = arith.constant 0 : index
    %c0_54 = arith.constant 0 : index
    %63 = arith.index_cast %62 : i32 to index
    %c0_55 = arith.constant 0 : index
    %c0_56 = arith.constant 0 : index
    %64 = vector.load %arg3[%c0_53, %c0_54, %63, %c0_55, %c0_56] : memref<1x4x10x10x128xf32, #tpu.memory_space<vmem>>, vector<1x1x8x8x128xf32>
    %65 = vector.shape_cast %64 : vector<1x1x8x8x128xf32> to vector<8x8x128xf32>
    %66 = vector.shape_cast %65 : vector<8x8x128xf32> to vector<64x128xf32>
    %c6 = arith.constant 6 : index
    %c0_57 = arith.constant 0 : index
    %c0_58 = arith.constant 0 : index
    %67 = vector.load %arg4[%c6, %c0_57, %c0_58] : memref<9x128x128xf32, #tpu.memory_space<vmem>>, vector<1x128x128xf32>
    %68 = vector.shape_cast %67 : vector<1x128x128xf32> to vector<128x128xf32>
    %cst_59 = arith.constant dense<0.000000e+00> : vector<64x128xf32>
    %69 = tpu.matmul %66, %68, %cst_59 {dimension_numbers = #tpu.dot_dimension_numbers<[1], [0], [0], [1], [0, 0, 1, 1], [], []>} : vector<64x128xf32>, vector<128x128xf32>, vector<64x128xf32> -> vector<64x128xf32>
    %70 = arith.addf %60, %69 : vector<64x128xf32>
    %c8_i32_60 = arith.constant 8 : i32
    %71 = arith.muli %arg2, %c8_i32_60 : i32
    %c1_i32_61 = arith.constant 1 : i32
    %72 = arith.addi %71, %c1_i32_61 : i32
    %c0_62 = arith.constant 0 : index
    %c1_63 = arith.constant 1 : index
    %73 = arith.index_cast %72 : i32 to index
    %c0_64 = arith.constant 0 : index
    %c0_65 = arith.constant 0 : index
    %74 = vector.load %arg3[%c0_62, %c1_63, %73, %c0_64, %c0_65] : memref<1x4x10x10x128xf32, #tpu.memory_space<vmem>>, vector<1x1x8x8x128xf32>
    %75 = vector.shape_cast %74 : vector<1x1x8x8x128xf32> to vector<8x8x128xf32>
    %76 = vector.shape_cast %75 : vector<8x8x128xf32> to vector<64x128xf32>
    %c7 = arith.constant 7 : index
    %c0_66 = arith.constant 0 : index
    %c0_67 = arith.constant 0 : index
    %77 = vector.load %arg4[%c7, %c0_66, %c0_67] : memref<9x128x128xf32, #tpu.memory_space<vmem>>, vector<1x128x128xf32>
    %78 = vector.shape_cast %77 : vector<1x128x128xf32> to vector<128x128xf32>
    %cst_68 = arith.constant dense<0.000000e+00> : vector<64x128xf32>
    %79 = tpu.matmul %76, %78, %cst_68 {dimension_numbers = #tpu.dot_dimension_numbers<[1], [0], [0], [1], [0, 0, 1, 1], [], []>} : vector<64x128xf32>, vector<128x128xf32>, vector<64x128xf32> -> vector<64x128xf32>
    %80 = arith.addf %70, %79 : vector<64x128xf32>
    %c8_i32_69 = arith.constant 8 : i32
    %81 = arith.muli %arg2, %c8_i32_69 : i32
    %c1_i32_70 = arith.constant 1 : i32
    %82 = arith.addi %81, %c1_i32_70 : i32
    %c0_71 = arith.constant 0 : index
    %c0_72 = arith.constant 0 : index
    %83 = arith.index_cast %82 : i32 to index
    %c1_73 = arith.constant 1 : index
    %c0_74 = arith.constant 0 : index
    %84 = vector.load %arg3[%c0_71, %c0_72, %83, %c1_73, %c0_74] : memref<1x4x10x10x128xf32, #tpu.memory_space<vmem>>, vector<1x1x8x8x128xf32>
    %85 = vector.shape_cast %84 : vector<1x1x8x8x128xf32> to vector<8x8x128xf32>
    %86 = vector.shape_cast %85 : vector<8x8x128xf32> to vector<64x128xf32>
    %c8 = arith.constant 8 : index
    %c0_75 = arith.constant 0 : index
    %c0_76 = arith.constant 0 : index
    %87 = vector.load %arg4[%c8, %c0_75, %c0_76] : memref<9x128x128xf32, #tpu.memory_space<vmem>>, vector<1x128x128xf32>
    %88 = vector.shape_cast %87 : vector<1x128x128xf32> to vector<128x128xf32>
    %cst_77 = arith.constant dense<0.000000e+00> : vector<64x128xf32>
    %89 = tpu.matmul %86, %88, %cst_77 {dimension_numbers = #tpu.dot_dimension_numbers<[1], [0], [0], [1], [0, 0, 1, 1], [], []>} : vector<64x128xf32>, vector<128x128xf32>, vector<64x128xf32> -> vector<64x128xf32>
    %90 = arith.addf %80, %89 : vector<64x128xf32>
    %c0_78 = arith.constant 0 : index
    %c0_79 = arith.constant 0 : index
    %91 = vector.load %arg5[%c0_78, %c0_79] : memref<1x128xf32, #tpu.memory_space<vmem>>, vector<1x128xf32>
    %92 = vector.broadcast %91 : vector<1x128xf32> to vector<64x128xf32>
    %93 = arith.mulf %90, %92 : vector<64x128xf32>
    %c0_80 = arith.constant 0 : index
    %c0_81 = arith.constant 0 : index
    %94 = vector.load %arg6[%c0_80, %c0_81] : memref<1x128xf32, #tpu.memory_space<vmem>>, vector<1x128xf32>
    %95 = vector.broadcast %94 : vector<1x128xf32> to vector<64x128xf32>
    %96 = arith.addf %93, %95 : vector<64x128xf32>
    %cst_82 = arith.constant 0.000000e+00 : f32
    %97 = vector.broadcast %cst_82 : f32 to vector<64x128xf32>
    %98 = arith.maximumf %96, %97 : vector<64x128xf32>
    %c0_83 = arith.constant 0 : index
    %c0_84 = arith.constant 0 : index
    %99 = vector.load %arg7[%c0_83, %c0_84] : memref<64x128xf32, #tpu.memory_space<vmem>>, vector<64x128xf32>
    tpu.vector_store %arg7[%c0_83, %c0_84], %98 {strides = array<i32>} : memref<64x128xf32, #tpu.memory_space<vmem>>, vector<64x128xf32>,
    return
  }
  func.func @transform_0(%arg0: i32, %arg1: i32, %arg2: i32) -> (i32, i32, i32, i32, i32) {
    %c0_i32 = arith.constant 0 : i32
    %c0_i32_0 = arith.constant 0 : i32
    %c0_i32_1 = arith.constant 0 : i32
    %c0_i32_2 = arith.constant 0 : i32
    %c0_i32_3 = arith.constant 0 : i32
    return %arg0, %c0_i32, %c0_i32_0, %c0_i32_1, %c0_i32_2 : i32, i32, i32, i32, i32
  }
  func.func @transform_1(%arg0: i32, %arg1: i32, %arg2: i32) -> (i32, i32, i32) {
    %c0_i32 = arith.constant 0 : i32
    %c0_i32_0 = arith.constant 0 : i32
    %c0_i32_1 = arith.constant 0 : i32
    return %c0_i32, %c0_i32_0, %arg1 : i32, i32, i32
  }
  func.func @transform_2(%arg0: i32, %arg1: i32, %arg2: i32) -> (i32, i32) {
    %c0_i32 = arith.constant 0 : i32
    %c0_i32_0 = arith.constant 0 : i32
    return %c0_i32, %arg1 : i32, i32
  }
  func.func @transform_3(%arg0: i32, %arg1: i32, %arg2: i32) -> (i32, i32) {
    %c0_i32 = arith.constant 0 : i32
    %c0_i32_0 = arith.constant 0 : i32
    return %c0_i32, %arg1 : i32, i32
  }
  func.func @transform_4(%arg0: i32, %arg1: i32, %arg2: i32) -> (i32, i32) {
    %c1_i32 = arith.constant 1 : i32
    %0 = arith.muli %arg0, %c1_i32 : i32
    %1 = arith.addi %0, %arg2 : i32
    %c0_i32 = arith.constant 0 : i32
    return %1, %arg1 : i32, i32
  }
}

module attributes {stable_mosaic.version = 11 : i64} {
  func.func @_matmul_kernel(%arg0: i32, %arg1: i32, %arg2: memref<128x128xf32, #tpu.memory_space<vmem>>, %arg3: memref<128x128xf32, #tpu.memory_space<vmem>>, %arg4: memref<128x128xf32, #tpu.memory_space<vmem>>) attributes {dimension_semantics = [#tpu.dimension_semantics<parallel>, #tpu.dimension_semantics<parallel>], iteration_bounds = array<i64: 1, 1>, scalar_prefetch = 0 : i64, scratch_operands = 0 : i64, tpu.core_type = #tpu.core_type<tc>, window_params = [{transform_indices = @transform_0, window_bounds = array<i64: 128, 128>}, {transform_indices = @transform_1, window_bounds = array<i64: 128, 128>}, {transform_indices = @transform_2, window_bounds = array<i64: 128, 128>}]} {
    %c0 = arith.constant 0 : index
    %c0_0 = arith.constant 0 : index
    %0 = vector.load %arg2[%c0, %c0_0] : memref<128x128xf32, #tpu.memory_space<vmem>>, vector<128x128xf32>
    %c0_1 = arith.constant 0 : index
    %c0_2 = arith.constant 0 : index
    %1 = vector.load %arg3[%c0_1, %c0_2] : memref<128x128xf32, #tpu.memory_space<vmem>>, vector<128x128xf32>
    %cst = arith.constant dense<0.000000e+00> : vector<128x128xf32>
    %2 = tpu.matmul %0, %1, %cst {dimension_numbers = #tpu.dot_dimension_numbers<[1], [0], [0], [1], [0, 0, 1, 1], [], []>} : vector<128x128xf32>, vector<128x128xf32>, vector<128x128xf32> -> vector<128x128xf32>
    %c0_3 = arith.constant 0 : index
    %c0_4 = arith.constant 0 : index
    %3 = vector.load %arg4[%c0_3, %c0_4] : memref<128x128xf32, #tpu.memory_space<vmem>>, vector<128x128xf32>
    tpu.vector_store %arg4[%c0_3, %c0_4], %2 {strides = array<i32>} : memref<128x128xf32, #tpu.memory_space<vmem>>, vector<128x128xf32>,
    return
  }
  func.func @transform_0(%arg0: i32, %arg1: i32) -> (i32, i32) {
    %c0_i32 = arith.constant 0 : i32
    %c0_i32_0 = arith.constant 0 : i32
    return %arg1, %c0_i32 : i32, i32
  }
  func.func @transform_1(%arg0: i32, %arg1: i32) -> (i32, i32) {
    %c0_i32 = arith.constant 0 : i32
    %c0_i32_0 = arith.constant 0 : i32
    return %c0_i32, %arg0 : i32, i32
  }
  func.func @transform_2(%arg0: i32, %arg1: i32) -> (i32, i32) {
    %c0_i32 = arith.constant 0 : i32
    return %arg1, %arg0 : i32, i32
  }
}

module attributes {stable_mosaic.version = 11 : i64} {
  func.func @_conv3x3_kernel(%arg0: i32, %arg1: i32, %arg2: i32, %arg3: memref<1x1x10x10x128xf32, #tpu.memory_space<vmem>>, %arg4: memref<9x128x128xf32, #tpu.memory_space<vmem>>, %arg5: memref<64x128xf32, #tpu.memory_space<vmem>>, %arg6: memref<64x128xf32, #tpu.memory_space<vmem>>) attributes {dimension_semantics = [#tpu.dimension_semantics<parallel>, #tpu.dimension_semantics<parallel>, #tpu.dimension_semantics<parallel>], iteration_bounds = array<i64: 2, 1, 1>, scalar_prefetch = 0 : i64, scratch_operands = 0 : i64, tpu.core_type = #tpu.core_type<tc>, window_params = [{transform_indices = @transform_0, window_bounds = array<i64: 1, 1, 10, 10, 128>}, {transform_indices = @transform_1, window_bounds = array<i64: 9, 128, 128>}, {transform_indices = @transform_2, window_bounds = array<i64: 64, 128>}, {transform_indices = @transform_3, window_bounds = array<i64: 64, 128>}]} {
    %cst = arith.constant 0.000000e+00 : f32
    %0 = vector.broadcast %cst : f32 to vector<64x128xf32>
    %c8_i32 = arith.constant 8 : i32
    %1 = arith.muli %arg2, %c8_i32 : i32
    %c0_i32 = arith.constant 0 : i32
    %2 = arith.addi %1, %c0_i32 : i32
    %c0 = arith.constant 0 : index
    %c0_0 = arith.constant 0 : index
    %3 = arith.index_cast %2 : i32 to index
    %c0_1 = arith.constant 0 : index
    %c0_2 = arith.constant 0 : index
    %4 = vector.load %arg3[%c0, %c0_0, %3, %c0_1, %c0_2] : memref<1x1x10x10x128xf32, #tpu.memory_space<vmem>>, vector<1x1x8x8x128xf32>
    %5 = vector.shape_cast %4 : vector<1x1x8x8x128xf32> to vector<8x8x128xf32>
    %6 = vector.shape_cast %5 : vector<8x8x128xf32> to vector<64x128xf32>
    %c0_3 = arith.constant 0 : index
    %c0_4 = arith.constant 0 : index
    %c0_5 = arith.constant 0 : index
    %7 = vector.load %arg4[%c0_3, %c0_4, %c0_5] : memref<9x128x128xf32, #tpu.memory_space<vmem>>, vector<1x128x128xf32>
    %8 = vector.shape_cast %7 : vector<1x128x128xf32> to vector<128x128xf32>
    %cst_6 = arith.constant dense<0.000000e+00> : vector<64x128xf32>
    %9 = tpu.matmul %6, %8, %cst_6 {dimension_numbers = #tpu.dot_dimension_numbers<[1], [0], [0], [1], [0, 0, 1, 1], [], []>} : vector<64x128xf32>, vector<128x128xf32>, vector<64x128xf32> -> vector<64x128xf32>
    %10 = arith.addf %0, %9 : vector<64x128xf32>
    %c8_i32_7 = arith.constant 8 : i32
    %11 = arith.muli %arg2, %c8_i32_7 : i32
    %c0_i32_8 = arith.constant 0 : i32
    %12 = arith.addi %11, %c0_i32_8 : i32
    %c0_9 = arith.constant 0 : index
    %c0_10 = arith.constant 0 : index
    %13 = arith.index_cast %12 : i32 to index
    %c1 = arith.constant 1 : index
    %c0_11 = arith.constant 0 : index
    %14 = vector.load %arg3[%c0_9, %c0_10, %13, %c1, %c0_11] : memref<1x1x10x10x128xf32, #tpu.memory_space<vmem>>, vector<1x1x8x8x128xf32>
    %15 = vector.shape_cast %14 : vector<1x1x8x8x128xf32> to vector<8x8x128xf32>
    %16 = vector.shape_cast %15 : vector<8x8x128xf32> to vector<64x128xf32>
    %c1_12 = arith.constant 1 : index
    %c0_13 = arith.constant 0 : index
    %c0_14 = arith.constant 0 : index
    %17 = vector.load %arg4[%c1_12, %c0_13, %c0_14] : memref<9x128x128xf32, #tpu.memory_space<vmem>>, vector<1x128x128xf32>
    %18 = vector.shape_cast %17 : vector<1x128x128xf32> to vector<128x128xf32>
    %cst_15 = arith.constant dense<0.000000e+00> : vector<64x128xf32>
    %19 = tpu.matmul %16, %18, %cst_15 {dimension_numbers = #tpu.dot_dimension_numbers<[1], [0], [0], [1], [0, 0, 1, 1], [], []>} : vector<64x128xf32>, vector<128x128xf32>, vector<64x128xf32> -> vector<64x128xf32>
    %20 = arith.addf %10, %19 : vector<64x128xf32>
    %c8_i32_16 = arith.constant 8 : i32
    %21 = arith.muli %arg2, %c8_i32_16 : i32
    %c0_i32_17 = arith.constant 0 : i32
    %22 = arith.addi %21, %c0_i32_17 : i32
    %c0_18 = arith.constant 0 : index
    %c0_19 = arith.constant 0 : index
    %23 = arith.index_cast %22 : i32 to index
    %c2 = arith.constant 2 : index
    %c0_20 = arith.constant 0 : index
    %24 = vector.load %arg3[%c0_18, %c0_19, %23, %c2, %c0_20] : memref<1x1x10x10x128xf32, #tpu.memory_space<vmem>>, vector<1x1x8x8x128xf32>
    %25 = vector.shape_cast %24 : vector<1x1x8x8x128xf32> to vector<8x8x128xf32>
    %26 = vector.shape_cast %25 : vector<8x8x128xf32> to vector<64x128xf32>
    %c2_21 = arith.constant 2 : index
    %c0_22 = arith.constant 0 : index
    %c0_23 = arith.constant 0 : index
    %27 = vector.load %arg4[%c2_21, %c0_22, %c0_23] : memref<9x128x128xf32, #tpu.memory_space<vmem>>, vector<1x128x128xf32>
    %28 = vector.shape_cast %27 : vector<1x128x128xf32> to vector<128x128xf32>
    %cst_24 = arith.constant dense<0.000000e+00> : vector<64x128xf32>
    %29 = tpu.matmul %26, %28, %cst_24 {dimension_numbers = #tpu.dot_dimension_numbers<[1], [0], [0], [1], [0, 0, 1, 1], [], []>} : vector<64x128xf32>, vector<128x128xf32>, vector<64x128xf32> -> vector<64x128xf32>
    %30 = arith.addf %20, %29 : vector<64x128xf32>
    %c8_i32_25 = arith.constant 8 : i32
    %31 = arith.muli %arg2, %c8_i32_25 : i32
    %c1_i32 = arith.constant 1 : i32
    %32 = arith.addi %31, %c1_i32 : i32
    %c0_26 = arith.constant 0 : index
    %c0_27 = arith.constant 0 : index
    %33 = arith.index_cast %32 : i32 to index
    %c0_28 = arith.constant 0 : index
    %c0_29 = arith.constant 0 : index
    %34 = vector.load %arg3[%c0_26, %c0_27, %33, %c0_28, %c0_29] : memref<1x1x10x10x128xf32, #tpu.memory_space<vmem>>, vector<1x1x8x8x128xf32>
    %35 = vector.shape_cast %34 : vector<1x1x8x8x128xf32> to vector<8x8x128xf32>
    %36 = vector.shape_cast %35 : vector<8x8x128xf32> to vector<64x128xf32>
    %c3 = arith.constant 3 : index
    %c0_30 = arith.constant 0 : index
    %c0_31 = arith.constant 0 : index
    %37 = vector.load %arg4[%c3, %c0_30, %c0_31] : memref<9x128x128xf32, #tpu.memory_space<vmem>>, vector<1x128x128xf32>
    %38 = vector.shape_cast %37 : vector<1x128x128xf32> to vector<128x128xf32>
    %cst_32 = arith.constant dense<0.000000e+00> : vector<64x128xf32>
    %39 = tpu.matmul %36, %38, %cst_32 {dimension_numbers = #tpu.dot_dimension_numbers<[1], [0], [0], [1], [0, 0, 1, 1], [], []>} : vector<64x128xf32>, vector<128x128xf32>, vector<64x128xf32> -> vector<64x128xf32>
    %40 = arith.addf %30, %39 : vector<64x128xf32>
    %c8_i32_33 = arith.constant 8 : i32
    %41 = arith.muli %arg2, %c8_i32_33 : i32
    %c1_i32_34 = arith.constant 1 : i32
    %42 = arith.addi %41, %c1_i32_34 : i32
    %c0_35 = arith.constant 0 : index
    %c0_36 = arith.constant 0 : index
    %43 = arith.index_cast %42 : i32 to index
    %c1_37 = arith.constant 1 : index
    %c0_38 = arith.constant 0 : index
    %44 = vector.load %arg3[%c0_35, %c0_36, %43, %c1_37, %c0_38] : memref<1x1x10x10x128xf32, #tpu.memory_space<vmem>>, vector<1x1x8x8x128xf32>
    %45 = vector.shape_cast %44 : vector<1x1x8x8x128xf32> to vector<8x8x128xf32>
    %46 = vector.shape_cast %45 : vector<8x8x128xf32> to vector<64x128xf32>
    %c4 = arith.constant 4 : index
    %c0_39 = arith.constant 0 : index
    %c0_40 = arith.constant 0 : index
    %47 = vector.load %arg4[%c4, %c0_39, %c0_40] : memref<9x128x128xf32, #tpu.memory_space<vmem>>, vector<1x128x128xf32>
    %48 = vector.shape_cast %47 : vector<1x128x128xf32> to vector<128x128xf32>
    %cst_41 = arith.constant dense<0.000000e+00> : vector<64x128xf32>
    %49 = tpu.matmul %46, %48, %cst_41 {dimension_numbers = #tpu.dot_dimension_numbers<[1], [0], [0], [1], [0, 0, 1, 1], [], []>} : vector<64x128xf32>, vector<128x128xf32>, vector<64x128xf32> -> vector<64x128xf32>
    %50 = arith.addf %40, %49 : vector<64x128xf32>
    %c8_i32_42 = arith.constant 8 : i32
    %51 = arith.muli %arg2, %c8_i32_42 : i32
    %c1_i32_43 = arith.constant 1 : i32
    %52 = arith.addi %51, %c1_i32_43 : i32
    %c0_44 = arith.constant 0 : index
    %c0_45 = arith.constant 0 : index
    %53 = arith.index_cast %52 : i32 to index
    %c2_46 = arith.constant 2 : index
    %c0_47 = arith.constant 0 : index
    %54 = vector.load %arg3[%c0_44, %c0_45, %53, %c2_46, %c0_47] : memref<1x1x10x10x128xf32, #tpu.memory_space<vmem>>, vector<1x1x8x8x128xf32>
    %55 = vector.shape_cast %54 : vector<1x1x8x8x128xf32> to vector<8x8x128xf32>
    %56 = vector.shape_cast %55 : vector<8x8x128xf32> to vector<64x128xf32>
    %c5 = arith.constant 5 : index
    %c0_48 = arith.constant 0 : index
    %c0_49 = arith.constant 0 : index
    %57 = vector.load %arg4[%c5, %c0_48, %c0_49] : memref<9x128x128xf32, #tpu.memory_space<vmem>>, vector<1x128x128xf32>
    %58 = vector.shape_cast %57 : vector<1x128x128xf32> to vector<128x128xf32>
    %cst_50 = arith.constant dense<0.000000e+00> : vector<64x128xf32>
    %59 = tpu.matmul %56, %58, %cst_50 {dimension_numbers = #tpu.dot_dimension_numbers<[1], [0], [0], [1], [0, 0, 1, 1], [], []>} : vector<64x128xf32>, vector<128x128xf32>, vector<64x128xf32> -> vector<64x128xf32>
    %60 = arith.addf %50, %59 : vector<64x128xf32>
    %c8_i32_51 = arith.constant 8 : i32
    %61 = arith.muli %arg2, %c8_i32_51 : i32
    %c2_i32 = arith.constant 2 : i32
    %62 = arith.addi %61, %c2_i32 : i32
    %c0_52 = arith.constant 0 : index
    %c0_53 = arith.constant 0 : index
    %63 = arith.index_cast %62 : i32 to index
    %c0_54 = arith.constant 0 : index
    %c0_55 = arith.constant 0 : index
    %64 = vector.load %arg3[%c0_52, %c0_53, %63, %c0_54, %c0_55] : memref<1x1x10x10x128xf32, #tpu.memory_space<vmem>>, vector<1x1x8x8x128xf32>
    %65 = vector.shape_cast %64 : vector<1x1x8x8x128xf32> to vector<8x8x128xf32>
    %66 = vector.shape_cast %65 : vector<8x8x128xf32> to vector<64x128xf32>
    %c6 = arith.constant 6 : index
    %c0_56 = arith.constant 0 : index
    %c0_57 = arith.constant 0 : index
    %67 = vector.load %arg4[%c6, %c0_56, %c0_57] : memref<9x128x128xf32, #tpu.memory_space<vmem>>, vector<1x128x128xf32>
    %68 = vector.shape_cast %67 : vector<1x128x128xf32> to vector<128x128xf32>
    %cst_58 = arith.constant dense<0.000000e+00> : vector<64x128xf32>
    %69 = tpu.matmul %66, %68, %cst_58 {dimension_numbers = #tpu.dot_dimension_numbers<[1], [0], [0], [1], [0, 0, 1, 1], [], []>} : vector<64x128xf32>, vector<128x128xf32>, vector<64x128xf32> -> vector<64x128xf32>
    %70 = arith.addf %60, %69 : vector<64x128xf32>
    %c8_i32_59 = arith.constant 8 : i32
    %71 = arith.muli %arg2, %c8_i32_59 : i32
    %c2_i32_60 = arith.constant 2 : i32
    %72 = arith.addi %71, %c2_i32_60 : i32
    %c0_61 = arith.constant 0 : index
    %c0_62 = arith.constant 0 : index
    %73 = arith.index_cast %72 : i32 to index
    %c1_63 = arith.constant 1 : index
    %c0_64 = arith.constant 0 : index
    %74 = vector.load %arg3[%c0_61, %c0_62, %73, %c1_63, %c0_64] : memref<1x1x10x10x128xf32, #tpu.memory_space<vmem>>, vector<1x1x8x8x128xf32>
    %75 = vector.shape_cast %74 : vector<1x1x8x8x128xf32> to vector<8x8x128xf32>
    %76 = vector.shape_cast %75 : vector<8x8x128xf32> to vector<64x128xf32>
    %c7 = arith.constant 7 : index
    %c0_65 = arith.constant 0 : index
    %c0_66 = arith.constant 0 : index
    %77 = vector.load %arg4[%c7, %c0_65, %c0_66] : memref<9x128x128xf32, #tpu.memory_space<vmem>>, vector<1x128x128xf32>
    %78 = vector.shape_cast %77 : vector<1x128x128xf32> to vector<128x128xf32>
    %cst_67 = arith.constant dense<0.000000e+00> : vector<64x128xf32>
    %79 = tpu.matmul %76, %78, %cst_67 {dimension_numbers = #tpu.dot_dimension_numbers<[1], [0], [0], [1], [0, 0, 1, 1], [], []>} : vector<64x128xf32>, vector<128x128xf32>, vector<64x128xf32> -> vector<64x128xf32>
    %80 = arith.addf %70, %79 : vector<64x128xf32>
    %c8_i32_68 = arith.constant 8 : i32
    %81 = arith.muli %arg2, %c8_i32_68 : i32
    %c2_i32_69 = arith.constant 2 : i32
    %82 = arith.addi %81, %c2_i32_69 : i32
    %c0_70 = arith.constant 0 : index
    %c0_71 = arith.constant 0 : index
    %83 = arith.index_cast %82 : i32 to index
    %c2_72 = arith.constant 2 : index
    %c0_73 = arith.constant 0 : index
    %84 = vector.load %arg3[%c0_70, %c0_71, %83, %c2_72, %c0_73] : memref<1x1x10x10x128xf32, #tpu.memory_space<vmem>>, vector<1x1x8x8x128xf32>
    %85 = vector.shape_cast %84 : vector<1x1x8x8x128xf32> to vector<8x8x128xf32>
    %86 = vector.shape_cast %85 : vector<8x8x128xf32> to vector<64x128xf32>
    %c8 = arith.constant 8 : index
    %c0_74 = arith.constant 0 : index
    %c0_75 = arith.constant 0 : index
    %87 = vector.load %arg4[%c8, %c0_74, %c0_75] : memref<9x128x128xf32, #tpu.memory_space<vmem>>, vector<1x128x128xf32>
    %88 = vector.shape_cast %87 : vector<1x128x128xf32> to vector<128x128xf32>
    %cst_76 = arith.constant dense<0.000000e+00> : vector<64x128xf32>
    %89 = tpu.matmul %86, %88, %cst_76 {dimension_numbers = #tpu.dot_dimension_numbers<[1], [0], [0], [1], [0, 0, 1, 1], [], []>} : vector<64x128xf32>, vector<128x128xf32>, vector<64x128xf32> -> vector<64x128xf32>
    %90 = arith.addf %80, %89 : vector<64x128xf32>
    %c0_77 = arith.constant 0 : index
    %c0_78 = arith.constant 0 : index
    %91 = vector.load %arg5[%c0_77, %c0_78] : memref<64x128xf32, #tpu.memory_space<vmem>>, vector<64x128xf32>
    %92 = arith.addf %90, %91 : vector<64x128xf32>
    %c0_79 = arith.constant 0 : index
    %c0_80 = arith.constant 0 : index
    %93 = vector.load %arg6[%c0_79, %c0_80] : memref<64x128xf32, #tpu.memory_space<vmem>>, vector<64x128xf32>
    tpu.vector_store %arg6[%c0_79, %c0_80], %92 {strides = array<i32>} : memref<64x128xf32, #tpu.memory_space<vmem>>, vector<64x128xf32>,
    return
  }
  func.func @transform_0(%arg0: i32, %arg1: i32, %arg2: i32) -> (i32, i32, i32, i32, i32) {
    %c0_i32 = arith.constant 0 : i32
    %c0_i32_0 = arith.constant 0 : i32
    %c0_i32_1 = arith.constant 0 : i32
    %c0_i32_2 = arith.constant 0 : i32
    %c0_i32_3 = arith.constant 0 : i32
    return %arg0, %c0_i32, %c0_i32_0, %c0_i32_1, %c0_i32_2 : i32, i32, i32, i32, i32
  }
  func.func @transform_1(%arg0: i32, %arg1: i32, %arg2: i32) -> (i32, i32, i32) {
    %c0_i32 = arith.constant 0 : i32
    %c0_i32_0 = arith.constant 0 : i32
    %c0_i32_1 = arith.constant 0 : i32
    return %c0_i32, %c0_i32_0, %arg1 : i32, i32, i32
  }
  func.func @transform_2(%arg0: i32, %arg1: i32, %arg2: i32) -> (i32, i32) {
    %c1_i32 = arith.constant 1 : i32
    %0 = arith.muli %arg0, %c1_i32 : i32
    %1 = arith.addi %0, %arg2 : i32
    %c0_i32 = arith.constant 0 : i32
    return %1, %arg1 : i32, i32
  }
  func.func @transform_3(%arg0: i32, %arg1: i32, %arg2: i32) -> (i32, i32) {
    %c1_i32 = arith.constant 1 : i32
    %0 = arith.muli %arg0, %c1_i32 : i32
    %1 = arith.addi %0, %arg2 : i32
    %c0_i32 = arith.constant 0 : i32
    return %1, %arg1 : i32, i32
  }
}

</mosaic_0001>

<llo_original>
// kernel: _lambda_.5
$region0: #{_lambda_.5}
  #allocation0 [shape = 'u32[]', space=smem, size = 0x4, offset = 0x4, fixed_abs, tag = 'smem constant byte address 0x4 - core index']
  #allocation1 [shape = 'u32[144,128]{1,0:T(1,128)}', space=vmem, size = 0x12000, scoped, tag = 'internal scratch']
  %s0 = inlined_call_operand.vmem [shape: f32[128,128], index: 0, kind: input, shape index: {}]
  %s1 = inlined_call_operand.vmem [shape: f32[128,128], index: 1, kind: input, shape index: {}]
  %s2 = inlined_call_operand.vmem [shape: f32[128,128], index: 2, kind: output, shape index: {}]
  %s3 = sld [smem:[#allocation0]]
  $region18: #{_lambda_.5} parent=0
    _
  %s5 = ssub.s32 1, %s3
  %s6 = scalar_select 0, %s5, %s3
  // Predicated region
  $region2: #{_lambda_.5} parent=0 // pred_check
    _
  $region3: #{_lambda_.5} parent=0 // pred_check_branch
    %8 = sbr.rel (0) target = $region5
  $region4: #{_lambda_.5} parent=0 // pred_region
    _
  $region5: #{_lambda_.5} parent=0 // pred_fallthru
    _
  // Predicated region
  $region6: #{_lambda_.5} parent=0 // pred_check
    _
  $region7: #{_lambda_.5} parent=0 // pred_check_branch
    %10 = sbr.rel (0) target = $region9
  $region8: #{_lambda_.5} parent=0 // pred_region
    _
  $region9: #{_lambda_.5} parent=0 // pred_fallthru
    _
  %v11 = vld [vmem:[%s0] sm:$0xff]
  %v12 = vld [vmem:[%s0 + $0x8] sm:$0xff]
  %v13 = vld [vmem:[%s0 + $0x10] sm:$0xff]
  %v14 = vld [vmem:[%s0 + $0x18] sm:$0xff]
  %v15 = vld [vmem:[%s0 + $0x20] sm:$0xff]
  %v16 = vld [vmem:[%s0 + $0x28] sm:$0xff]
  %v17 = vld [vmem:[%s0 + $0x30] sm:$0xff]
  %v18 = vld [vmem:[%s0 + $0x38] sm:$0xff]
  %v19 = vld [vmem:[%s0 + $0x40] sm:$0xff]
  %v20 = vld [vmem:[%s0 + $0x48] sm:$0xff]
  %v21 = vld [vmem:[%s0 + $0x50] sm:$0xff]
  %v22 = vld [vmem:[%s0 + $0x58] sm:$0xff]
  %v23 = vld [vmem:[%s0 + $0x60] sm:$0xff]
  %v24 = vld [vmem:[%s0 + $0x68] sm:$0xff]
  %v25 = vld [vmem:[%s0 + $0x70] sm:$0xff]
  %v26 = vld [vmem:[%s0 + $0x78] sm:$0xff]
  %v27 = vld [vmem:[%s1] sm:$0xff]
  %v28 = vld [vmem:[%s1 + $0x8] sm:$0xff]
  %v29 = vld [vmem:[%s1 + $0x10] sm:$0xff]
  %v30 = vld [vmem:[%s1 + $0x18] sm:$0xff]
  %v31 = vld [vmem:[%s1 + $0x20] sm:$0xff]
  %v32 = vld [vmem:[%s1 + $0x28] sm:$0xff]
  %v33 = vld [vmem:[%s1 + $0x30] sm:$0xff]
  %v34 = vld [vmem:[%s1 + $0x38] sm:$0xff]
  %v35 = vld [vmem:[%s1 + $0x40] sm:$0xff]
  %v36 = vld [vmem:[%s1 + $0x48] sm:$0xff]
  %v37 = vld [vmem:[%s1 + $0x50] sm:$0xff]
  %v38 = vld [vmem:[%s1 + $0x58] sm:$0xff]
  %v39 = vld [vmem:[%s1 + $0x60] sm:$0xff]
  %v40 = vld [vmem:[%s1 + $0x68] sm:$0xff]
  %v41 = vld [vmem:[%s1 + $0x70] sm:$0xff]
  %v42 = vld [vmem:[%s1 + $0x78] sm:$0xff]
  %43 = vmatprep.subr.mxu0 0.0
  %44 = vmatpush1.msra.mxu0 %v27
  %45 = vmatprep.subr.mxu0 0.0
  %46 = vmatpush1.msra.mxu0 %v28
  %47 = vmatprep.subr.mxu0 0.0
  %48 = vmatpush1.msra.mxu0 %v29
  %49 = vmatprep.subr.mxu0 0.0
  %50 = vmatpush1.msra.mxu0 %v30
  %51 = vmatprep.subr.mxu0 0.0
  %52 = vmatpush1.msra.mxu0 %v31
  %53 = vmatprep.subr.mxu0 0.0
  %54 = vmatpush1.msra.mxu0 %v32
  %55 = vmatprep.subr.mxu0 0.0
  %56 = vmatpush1.msra.mxu0 %v33
  %57 = vmatprep.subr.mxu0 0.0
  %58 = vmatpush1.msra.mxu0 %v34
  %59 = vmatprep.subr.mxu0 0.0
  %60 = vmatpush1.msra.mxu0 %v35
  %61 = vmatprep.subr.mxu0 0.0
  %62 = vmatpush1.msra.mxu0 %v36
  %63 = vmatprep.subr.mxu0 0.0
  %64 = vmatpush1.msra.mxu0 %v37
  %65 = vmatprep.subr.mxu0 0.0
  %66 = vmatpush1.msra.mxu0 %v38
  %67 = vmatprep.subr.mxu0 0.0
  %68 = vmatpush1.msra.mxu0 %v39
  %69 = vmatprep.subr.mxu0 0.0
  %70 = vmatpush1.msra.mxu0 %v40
  %71 = vmatprep.subr.mxu0 0.0
  %72 = vmatpush1.msra.mxu0 %v41
  %73 = vmatprep.subr.mxu0 0.0
  %74 = vmatpush1.msra.mxu0 %v42
  %75 = vmatprep.subr.mxu0 0.0
  %76 = vmatpush1.msra.mxu0 0.0
  %77 = vmatprep.subr.mxu0 0.0
  %78 = vmatpush1.msra.mxu0 0.0
  %79 = vmatprep.subr.mxu0 0.0
  %80 = vmatpush1.msra.mxu0 0.0
  %81 = vmatprep.subr.mxu0 0.0
  %82 = vmatpush1.msra.mxu0 0.0
  %83 = vmatprep.subr.mxu0 0.0
  %84 = vmatpush1.msra.mxu0 0.0
  %85 = vmatprep.subr.mxu0 0.0
  %86 = vmatpush1.msra.mxu0 0.0
  %87 = vmatprep.subr.mxu0 0.0
  %88 = vmatpush1.msra.mxu0 0.0
  %89 = vmatprep.subr.mxu0 0.0
  %90 = vmatpush1.msra.mxu0 0.0
  %91 = vmatprep.subr.mxu0 0.0
  %92 = vmatpush1.msra.mxu0 0.0
  %93 = vmatprep.subr.mxu0 0.0
  %94 = vmatpush1.msra.mxu0 0.0
  %95 = vmatprep.subr.mxu0 0.0
  %96 = vmatpush1.msra.mxu0 0.0
  %97 = vmatprep.subr.mxu0 0.0
  %98 = vmatpush1.msra.mxu0 0.0
  %99 = vmatprep.subr.mxu0 0.0
  %100 = vmatpush1.msra.mxu0 0.0
  %101 = vmatprep.subr.mxu0 0.0
  %102 = vmatpush1.msra.mxu0 0.0
  %103 = vmatprep.subr.mxu0 0.0
  %104 = vmatpush1.msra.mxu0 0.0
  %105 = vmatprep.subr.mxu0 0.0
  %106 = vmatpush1.msra.mxu0 0.0
  %107 = vmatprep.mubr.f32.mxu0 0.0
  %108 = vmatmul.mubr.f32.gmra.mrb[0].mxu0 %v11
  %v109 = vpop.f32.mrb[0].mxu0
  %v110 = vadd.f32 0.0, %v109
  %v111 = vpop.f32.mrb[0].mxu0
  %112 = vmatprep.mubr.f32.mxu0 0.0
  %113 = vmatmul.mubr.f32.gmra.mrb[0].mxu0 %v12
  %v114 = vpop.f32.mrb[0].mxu0
  %v115 = vadd.f32 0.0, %v114
  %v116 = vpop.f32.mrb[0].mxu0
  %117 = vmatprep.mubr.f32.mxu0 0.0
  %118 = vmatmul.mubr.f32.gmra.mrb[0].mxu0 %v13
  %v119 = vpop.f32.mrb[0].mxu0
  %v120 = vadd.f32 0.0, %v119
  %v121 = vpop.f32.mrb[0].mxu0
  %122 = vmatprep.mubr.f32.mxu0 0.0
  %123 = vmatmul.mubr.f32.gmra.mrb[0].mxu0 %v14
  %v124 = vpop.f32.mrb[0].mxu0
  %v125 = vadd.f32 0.0, %v124
  %v126 = vpop.f32.mrb[0].mxu0
  %127 = vmatprep.mubr.f32.mxu0 0.0
  %128 = vmatmul.mubr.f32.gmra.mrb[0].mxu0 %v15
  %v129 = vpop.f32.mrb[0].mxu0
  %v130 = vadd.f32 0.0, %v129
  %v131 = vpop.f32.mrb[0].mxu0
  %132 = vmatprep.mubr.f32.mxu0 0.0
  %133 = vmatmul.mubr.f32.gmra.mrb[0].mxu0 %v16
  %v134 = vpop.f32.mrb[0].mxu0
  %v135 = vadd.f32 0.0, %v134
  %v136 = vpop.f32.mrb[0].mxu0
  %137 = vmatprep.mubr.f32.mxu0 0.0
  %138 = vmatmul.mubr.f32.gmra.mrb[0].mxu0 %v17
  %v139 = vpop.f32.mrb[0].mxu0
  %v140 = vadd.f32 0.0, %v139
  %v141 = vpop.f32.mrb[0].mxu0
  %142 = vmatprep.mubr.f32.mxu0 0.0
  %143 = vmatmul.mubr.f32.gmra.mrb[0].mxu0 %v18
  %v144 = vpop.f32.mrb[0].mxu0
  %v145 = vadd.f32 0.0, %v144
  %v146 = vpop.f32.mrb[0].mxu0
  %147 = vmatprep.mubr.f32.mxu0 0.0
  %148 = vmatmul.mubr.f32.gmra.mrb[0].mxu0 %v19
  %v149 = vpop.f32.mrb[0].mxu0
  %v150 = vadd.f32 0.0, %v149
  %v151 = vpop.f32.mrb[0].mxu0
  %152 = vmatprep.mubr.f32.mxu0 0.0
  %153 = vmatmul.mubr.f32.gmra.mrb[0].mxu0 %v20
  %v154 = vpop.f32.mrb[0].mxu0
  %v155 = vadd.f32 0.0, %v154
  %v156 = vpop.f32.mrb[0].mxu0
  %157 = vmatprep.mubr.f32.mxu0 0.0
  %158 = vmatmul.mubr.f32.gmra.mrb[0].mxu0 %v21
  %v159 = vpop.f32.mrb[0].mxu0
  %v160 = vadd.f32 0.0, %v159
  %v161 = vpop.f32.mrb[0].mxu0
  %162 = vmatprep.mubr.f32.mxu0 0.0
  %163 = vmatmul.mubr.f32.gmra.mrb[0].mxu0 %v22
  %v164 = vpop.f32.mrb[0].mxu0
  %v165 = vadd.f32 0.0, %v164
  %v166 = vpop.f32.mrb[0].mxu0
  %167 = vmatprep.mubr.f32.mxu0 0.0
  %168 = vmatmul.mubr.f32.gmra.mrb[0].mxu0 %v23
  %v169 = vpop.f32.mrb[0].mxu0
  %v170 = vadd.f32 0.0, %v169
  %v171 = vpop.f32.mrb[0].mxu0
  %172 = vmatprep.mubr.f32.mxu0 0.0
  %173 = vmatmul.mubr.f32.gmra.mrb[0].mxu0 %v24
  %v174 = vpop.f32.mrb[0].mxu0
  %v175 = vadd.f32 0.0, %v174
  %v176 = vpop.f32.mrb[0].mxu0
  %177 = vmatprep.mubr.f32.mxu0 0.0
  %178 = vmatmul.mubr.f32.gmra.mrb[0].mxu0 %v25
  %v179 = vpop.f32.mrb[0].mxu0
  %v180 = vadd.f32 0.0, %v179
  %v181 = vpop.f32.mrb[0].mxu0
  %182 = vmatprep.mubr.f32.mxu0 0.0
  %183 = vmatmul.mubr.f32.gmra.mrb[0].mxu0 %v26
  %v184 = vpop.f32.mrb[0].mxu0
  %v185 = vadd.f32 0.0, %v184
  %v186 = vpop.f32.mrb[0].mxu0
  %187 = vdwg.mxu0
  %188 = vst [vmem:[%s2] sm:$0xff] %v110
  %189 = vst [vmem:[%s2 + $0x8] sm:$0xff] %v115
  %190 = vst [vmem:[%s2 + $0x10] sm:$0xff] %v120
  %191 = vst [vmem:[%s2 + $0x18] sm:$0xff] %v125
  %192 = vst [vmem:[%s2 + $0x20] sm:$0xff] %v130
  %193 = vst [vmem:[%s2 + $0x28] sm:$0xff] %v135
  %194 = vst [vmem:[%s2 + $0x30] sm:$0xff] %v140
  %195 = vst [vmem:[%s2 + $0x38] sm:$0xff] %v145
  %196 = vst [vmem:[%s2 + $0x40] sm:$0xff] %v150
  %197 = vst [vmem:[%s2 + $0x48] sm:$0xff] %v155
  %198 = vst [vmem:[%s2 + $0x50] sm:$0xff] %v160
  %199 = vst [vmem:[%s2 + $0x58] sm:$0xff] %v165
  %200 = vst [vmem:[%s2 + $0x60] sm:$0xff] %v170
  %201 = vst [vmem:[%s2 + $0x68] sm:$0xff] %v175
  %202 = vst [vmem:[%s2 + $0x70] sm:$0xff] %v180
  %203 = vst [vmem:[%s2 + $0x78] sm:$0xff] %v185
  // Predicated region
  $region10: #{_lambda_.5} parent=0 // pred_check
    _
  $region11: #{_lambda_.5} parent=0 // pred_check_branch
    %205 = sbr.rel (0) target = $region13
  $region12: #{_lambda_.5} parent=0 // pred_region
    _
  $region13: #{_lambda_.5} parent=0 // pred_fallthru
    _
  // Predicated region
  $region14: #{_lambda_.5} parent=0 // pred_check
    _
  $region15: #{_lambda_.5} parent=0 // pred_check_branch
    %207 = sbr.rel (0) target = $region17
  $region16: #{_lambda_.5} parent=0 // pred_region
    _
  $region17: #{_lambda_.5} parent=0 // pred_fallthru
    _

// kernel: _lambda_.4
$region0: #{_lambda_.4}
  #allocation0 [shape = 'u32[]', space=smem, size = 0x4, offset = 0x4, fixed_abs, tag = 'smem constant byte address 0x4 - core index']
  #allocation1 [shape = 'u32[144,128]{1,0:T(1,128)}', space=vmem, size = 0x12000, scoped, tag = 'internal scratch']
  %s0 = inlined_call_operand.vmem [shape: f32[512,128], index: 0, kind: input, shape index: {}]
  %s1 = inlined_call_operand.vmem [shape: f32[1,128], index: 1, kind: input, shape index: {}]
  %s2 = inlined_call_operand.vmem [shape: f32[1,128], index: 2, kind: input, shape index: {}]
  %s3 = inlined_call_operand.vmem [shape: f32[512,128], index: 3, kind: output, shape index: {}]
  %s4 = sld [smem:[#allocation0]]
  $region22: #{_lambda_.4} parent=0
    _
  %s6 = ssub.s32 1, %s4
  %s7 = scalar_select 0, %s6, %s4
  // Predicated region
  $region2: #{_lambda_.4} parent=0 // pred_check
    _
  $region3: #{_lambda_.4} parent=0 // pred_check_branch
    %9 = sbr.rel (0) target = $region5
  $region4: #{_lambda_.4} parent=0 // pred_region
    _
  $region5: #{_lambda_.4} parent=0 // pred_fallthru
    _
  // Predicated region
  $region6: #{_lambda_.4} parent=0 // pred_check
    _
  $region7: #{_lambda_.4} parent=0 // pred_check_branch
    %11 = sbr.rel (0) target = $region9
  $region8: #{_lambda_.4} parent=0 // pred_region
    _
  $region9: #{_lambda_.4} parent=0 // pred_fallthru
    _
  // Predicated region
  $region10: #{_lambda_.4} parent=0 // pred_check
    _
  $region11: #{_lambda_.4} parent=0 // pred_check_branch
    %13 = sbr.rel (0) target = $region13
  $region12: #{_lambda_.4} parent=0 // pred_region
    _
  $region13: #{_lambda_.4} parent=0 // pred_fallthru
    _
  %v14 = vld [vmem:[%s0] sm:$0xff]
  %v15 = vld [vmem:[%s0 + $0x8] sm:$0xff]
  %v16 = vld [vmem:[%s0 + $0x10] sm:$0xff]
  %v17 = vld [vmem:[%s0 + $0x18] sm:$0xff]
  %v18 = vld [vmem:[%s0 + $0x20] sm:$0xff]
  %v19 = vld [vmem:[%s0 + $0x28] sm:$0xff]
  %v20 = vld [vmem:[%s0 + $0x30] sm:$0xff]
  %v21 = vld [vmem:[%s0 + $0x38] sm:$0xff]
  %v22 = vld [vmem:[%s0 + $0x40] sm:$0xff]
  %v23 = vld [vmem:[%s0 + $0x48] sm:$0xff]
  %v24 = vld [vmem:[%s0 + $0x50] sm:$0xff]
  %v25 = vld [vmem:[%s0 + $0x58] sm:$0xff]
  %v26 = vld [vmem:[%s0 + $0x60] sm:$0xff]
  %v27 = vld [vmem:[%s0 + $0x68] sm:$0xff]
  %v28 = vld [vmem:[%s0 + $0x70] sm:$0xff]
  %v29 = vld [vmem:[%s0 + $0x78] sm:$0xff]
  %v30 = vld [vmem:[%s0 + $0x80] sm:$0xff]
  %v31 = vld [vmem:[%s0 + $0x88] sm:$0xff]
  %v32 = vld [vmem:[%s0 + $0x90] sm:$0xff]
  %v33 = vld [vmem:[%s0 + $0x98] sm:$0xff]
  %v34 = vld [vmem:[%s0 + $0xa0] sm:$0xff]
  %v35 = vld [vmem:[%s0 + $0xa8] sm:$0xff]
  %v36 = vld [vmem:[%s0 + $0xb0] sm:$0xff]
  %v37 = vld [vmem:[%s0 + $0xb8] sm:$0xff]
  %v38 = vld [vmem:[%s0 + $0xc0] sm:$0xff]
  %v39 = vld [vmem:[%s0 + $0xc8] sm:$0xff]
  %v40 = vld [vmem:[%s0 + $0xd0] sm:$0xff]
  %v41 = vld [vmem:[%s0 + $0xd8] sm:$0xff]
  %v42 = vld [vmem:[%s0 + $0xe0] sm:$0xff]
  %v43 = vld [vmem:[%s0 + $0xe8] sm:$0xff]
  %v44 = vld [vmem:[%s0 + $0xf0] sm:$0xff]
  %v45 = vld [vmem:[%s0 + $0xf8] sm:$0xff]
  %v46 = vld [vmem:[%s0 + $0x100] sm:$0xff]
  %v47 = vld [vmem:[%s0 + $0x108] sm:$0xff]
  %v48 = vld [vmem:[%s0 + $0x110] sm:$0xff]
  %v49 = vld [vmem:[%s0 + $0x118] sm:$0xff]
  %v50 = vld [vmem:[%s0 + $0x120] sm:$0xff]
  %v51 = vld [vmem:[%s0 + $0x128] sm:$0xff]
  %v52 = vld [vmem:[%s0 + $0x130] sm:$0xff]
  %v53 = vld [vmem:[%s0 + $0x138] sm:$0xff]
  %v54 = vld [vmem:[%s0 + $0x140] sm:$0xff]
  %v55 = vld [vmem:[%s0 + $0x148] sm:$0xff]
  %v56 = vld [vmem:[%s0 + $0x150] sm:$0xff]
  %v57 = vld [vmem:[%s0 + $0x158] sm:$0xff]
  %v58 = vld [vmem:[%s0 + $0x160] sm:$0xff]
  %v59 = vld [vmem:[%s0 + $0x168] sm:$0xff]
  %v60 = vld [vmem:[%s0 + $0x170] sm:$0xff]
  %v61 = vld [vmem:[%s0 + $0x178] sm:$0xff]
  %v62 = vld [vmem:[%s0 + $0x180] sm:$0xff]
  %v63 = vld [vmem:[%s0 + $0x188] sm:$0xff]
  %v64 = vld [vmem:[%s0 + $0x190] sm:$0xff]
  %v65 = vld [vmem:[%s0 + $0x198] sm:$0xff]
  %v66 = vld [vmem:[%s0 + $0x1a0] sm:$0xff]
  %v67 = vld [vmem:[%s0 + $0x1a8] sm:$0xff]
  %v68 = vld [vmem:[%s0 + $0x1b0] sm:$0xff]
  %v69 = vld [vmem:[%s0 + $0x1b8] sm:$0xff]
  %v70 = vld [vmem:[%s0 + $0x1c0] sm:$0xff]
  %v71 = vld [vmem:[%s0 + $0x1c8] sm:$0xff]
  %v72 = vld [vmem:[%s0 + $0x1d0] sm:$0xff]
  %v73 = vld [vmem:[%s0 + $0x1d8] sm:$0xff]
  %v74 = vld [vmem:[%s0 + $0x1e0] sm:$0xff]
  %v75 = vld [vmem:[%s0 + $0x1e8] sm:$0xff]
  %v76 = vld [vmem:[%s0 + $0x1f0] sm:$0xff]
  %v77 = vld [vmem:[%s0 + $0x1f8] sm:$0xff]
  %v78 = vld [vmem:[%s1] sm:$0x1]
  %v80 = vlaneseq
  %v81 = vshrl.u32 %v80, 7
  %v82 = vsub.s32 0, %v81
  %v83 = vrot.slane %v78, %v82
  %v85 = vmul.f32 %v14, %v83
  %v86 = vmul.f32 %v15, %v83
  %v87 = vmul.f32 %v16, %v83
  %v88 = vmul.f32 %v17, %v83
  %v89 = vmul.f32 %v18, %v83
  %v90 = vmul.f32 %v19, %v83
  %v91 = vmul.f32 %v20, %v83
  %v92 = vmul.f32 %v21, %v83
  %v93 = vmul.f32 %v22, %v83
  %v94 = vmul.f32 %v23, %v83
  %v95 = vmul.f32 %v24, %v83
  %v96 = vmul.f32 %v25, %v83
  %v97 = vmul.f32 %v26, %v83
  %v98 = vmul.f32 %v27, %v83
  %v99 = vmul.f32 %v28, %v83
  %v100 = vmul.f32 %v29, %v83
  %v101 = vmul.f32 %v30, %v83
  %v102 = vmul.f32 %v31, %v83
  %v103 = vmul.f32 %v32, %v83
  %v104 = vmul.f32 %v33, %v83
  %v105 = vmul.f32 %v34, %v83
  %v106 = vmul.f32 %v35, %v83
  %v107 = vmul.f32 %v36, %v83
  %v108 = vmul.f32 %v37, %v83
  %v109 = vmul.f32 %v38, %v83
  %v110 = vmul.f32 %v39, %v83
  %v111 = vmul.f32 %v40, %v83
  %v112 = vmul.f32 %v41, %v83
  %v113 = vmul.f32 %v42, %v83
  %v114 = vmul.f32 %v43, %v83
  %v115 = vmul.f32 %v44, %v83
  %v116 = vmul.f32 %v45, %v83
  %v117 = vmul.f32 %v46, %v83
  %v118 = vmul.f32 %v47, %v83
  %v119 = vmul.f32 %v48, %v83
  %v120 = vmul.f32 %v49, %v83
  %v121 = vmul.f32 %v50, %v83
  %v122 = vmul.f32 %v51, %v83
  %v123 = vmul.f32 %v52, %v83
  %v124 = vmul.f32 %v53, %v83
  %v125 = vmul.f32 %v54, %v83
  %v126 = vmul.f32 %v55, %v83
  %v127 = vmul.f32 %v56, %v83
  %v128 = vmul.f32 %v57, %v83
  %v129 = vmul.f32 %v58, %v83
  %v130 = vmul.f32 %v59, %v83
  %v131 = vmul.f32 %v60, %v83
  %v132 = vmul.f32 %v61, %v83
  %v133 = vmul.f32 %v62, %v83
  %v134 = vmul.f32 %v63, %v83
  %v135 = vmul.f32 %v64, %v83
  %v136 = vmul.f32 %v65, %v83
  %v137 = vmul.f32 %v66, %v83
  %v138 = vmul.f32 %v67, %v83
  %v139 = vmul.f32 %v68, %v83
  %v140 = vmul.f32 %v69, %v83
  %v141 = vmul.f32 %v70, %v83
  %v142 = vmul.f32 %v71, %v83
  %v143 = vmul.f32 %v72, %v83
  %v144 = vmul.f32 %v73, %v83
  %v145 = vmul.f32 %v74, %v83
  %v146 = vmul.f32 %v75, %v83
  %v147 = vmul.f32 %v76, %v83
  %v148 = vmul.f32 %v77, %v83
  %v149 = vld [vmem:[%s2] sm:$0x1]
  %v151 = vlaneseq
  %v152 = vshrl.u32 %v151, 7
  %v153 = vsub.s32 0, %v152
  %v154 = vrot.slane %v149, %v153
  %v156 = vadd.f32 %v85, %v154
  %v157 = vadd.f32 %v86, %v154
  %v158 = vadd.f32 %v87, %v154
  %v159 = vadd.f32 %v88, %v154
  %v160 = vadd.f32 %v89, %v154
  %v161 = vadd.f32 %v90, %v154
  %v162 = vadd.f32 %v91, %v154
  %v163 = vadd.f32 %v92, %v154
  %v164 = vadd.f32 %v93, %v154
  %v165 = vadd.f32 %v94, %v154
  %v166 = vadd.f32 %v95, %v154
  %v167 = vadd.f32 %v96, %v154
  %v168 = vadd.f32 %v97, %v154
  %v169 = vadd.f32 %v98, %v154
  %v170 = vadd.f32 %v99, %v154
  %v171 = vadd.f32 %v100, %v154
  %v172 = vadd.f32 %v101, %v154
  %v173 = vadd.f32 %v102, %v154
  %v174 = vadd.f32 %v103, %v154
  %v175 = vadd.f32 %v104, %v154
  %v176 = vadd.f32 %v105, %v154
  %v177 = vadd.f32 %v106, %v154
  %v178 = vadd.f32 %v107, %v154
  %v179 = vadd.f32 %v108, %v154
  %v180 = vadd.f32 %v109, %v154
  %v181 = vadd.f32 %v110, %v154
  %v182 = vadd.f32 %v111, %v154
  %v183 = vadd.f32 %v112, %v154
  %v184 = vadd.f32 %v113, %v154
  %v185 = vadd.f32 %v114, %v154
  %v186 = vadd.f32 %v115, %v154
  %v187 = vadd.f32 %v116, %v154
  %v188 = vadd.f32 %v117, %v154
  %v189 = vadd.f32 %v118, %v154
  %v190 = vadd.f32 %v119, %v154
  %v191 = vadd.f32 %v120, %v154
  %v192 = vadd.f32 %v121, %v154
  %v193 = vadd.f32 %v122, %v154
  %v194 = vadd.f32 %v123, %v154
  %v195 = vadd.f32 %v124, %v154
  %v196 = vadd.f32 %v125, %v154
  %v197 = vadd.f32 %v126, %v154
  %v198 = vadd.f32 %v127, %v154
  %v199 = vadd.f32 %v128, %v154
  %v200 = vadd.f32 %v129, %v154
  %v201 = vadd.f32 %v130, %v154
  %v202 = vadd.f32 %v131, %v154
  %v203 = vadd.f32 %v132, %v154
  %v204 = vadd.f32 %v133, %v154
  %v205 = vadd.f32 %v134, %v154
  %v206 = vadd.f32 %v135, %v154
  %v207 = vadd.f32 %v136, %v154
  %v208 = vadd.f32 %v137, %v154
  %v209 = vadd.f32 %v138, %v154
  %v210 = vadd.f32 %v139, %v154
  %v211 = vadd.f32 %v140, %v154
  %v212 = vadd.f32 %v141, %v154
  %v213 = vadd.f32 %v142, %v154
  %v214 = vadd.f32 %v143, %v154
  %v215 = vadd.f32 %v144, %v154
  %v216 = vadd.f32 %v145, %v154
  %v217 = vadd.f32 %v146, %v154
  %v218 = vadd.f32 %v147, %v154
  %v219 = vadd.f32 %v148, %v154
  %v220 = vmax.f32 %v156, 0.0
  %v221 = vmax.f32 %v157, 0.0
  %v222 = vmax.f32 %v158, 0.0
  %v223 = vmax.f32 %v159, 0.0
  %v224 = vmax.f32 %v160, 0.0
  %v225 = vmax.f32 %v161, 0.0
  %v226 = vmax.f32 %v162, 0.0
  %v227 = vmax.f32 %v163, 0.0
  %v228 = vmax.f32 %v164, 0.0
  %v229 = vmax.f32 %v165, 0.0
  %v230 = vmax.f32 %v166, 0.0
  %v231 = vmax.f32 %v167, 0.0
  %v232 = vmax.f32 %v168, 0.0
  %v233 = vmax.f32 %v169, 0.0
  %v234 = vmax.f32 %v170, 0.0
  %v235 = vmax.f32 %v171, 0.0
  %v236 = vmax.f32 %v172, 0.0
  %v237 = vmax.f32 %v173, 0.0
  %v238 = vmax.f32 %v174, 0.0
  %v239 = vmax.f32 %v175, 0.0
  %v240 = vmax.f32 %v176, 0.0
  %v241 = vmax.f32 %v177, 0.0
  %v242 = vmax.f32 %v178, 0.0
  %v243 = vmax.f32 %v179, 0.0
  %v244 = vmax.f32 %v180, 0.0
  %v245 = vmax.f32 %v181, 0.0
  %v246 = vmax.f32 %v182, 0.0
  %v247 = vmax.f32 %v183, 0.0
  %v248 = vmax.f32 %v184, 0.0
  %v249 = vmax.f32 %v185, 0.0
  %v250 = vmax.f32 %v186, 0.0
  %v251 = vmax.f32 %v187, 0.0
  %v252 = vmax.f32 %v188, 0.0
  %v253 = vmax.f32 %v189, 0.0
  %v254 = vmax.f32 %v190, 0.0
  %v255 = vmax.f32 %v191, 0.0
  %v256 = vmax.f32 %v192, 0.0
  %v257 = vmax.f32 %v193, 0.0
  %v258 = vmax.f32 %v194, 0.0
  %v259 = vmax.f32 %v195, 0.0
  %v260 = vmax.f32 %v196, 0.0
  %v261 = vmax.f32 %v197, 0.0
  %v262 = vmax.f32 %v198, 0.0
  %v263 = vmax.f32 %v199, 0.0
  %v264 = vmax.f32 %v200, 0.0
  %v265 = vmax.f32 %v201, 0.0
  %v266 = vmax.f32 %v202, 0.0
  %v267 = vmax.f32 %v203, 0.0
  %v268 = vmax.f32 %v204, 0.0
  %v269 = vmax.f32 %v205, 0.0
  %v270 = vmax.f32 %v206, 0.0
  %v271 = vmax.f32 %v207, 0.0
  %v272 = vmax.f32 %v208, 0.0
  %v273 = vmax.f32 %v209, 0.0
  %v274 = vmax.f32 %v210, 0.0
  %v275 = vmax.f32 %v211, 0.0
  %v276 = vmax.f32 %v212, 0.0
  %v277 = vmax.f32 %v213, 0.0
  %v278 = vmax.f32 %v214, 0.0
  %v279 = vmax.f32 %v215, 0.0
  %v280 = vmax.f32 %v216, 0.0
  %v281 = vmax.f32 %v217, 0.0
  %v282 = vmax.f32 %v218, 0.0
  %v283 = vmax.f32 %v219, 0.0
  %284 = vst [vmem:[%s3] sm:$0xff] %v220
  %285 = vst [vmem:[%s3 + $0x8] sm:$0xff] %v221
  %286 = vst [vmem:[%s3 + $0x10] sm:$0xff] %v222
  %287 = vst [vmem:[%s3 + $0x18] sm:$0xff] %v223
  %288 = vst [vmem:[%s3 + $0x20] sm:$0xff] %v224
  %289 = vst [vmem:[%s3 + $0x28] sm:$0xff] %v225
  %290 = vst [vmem:[%s3 + $0x30] sm:$0xff] %v226
  %291 = vst [vmem:[%s3 + $0x38] sm:$0xff] %v227
  %292 = vst [vmem:[%s3 + $0x40] sm:$0xff] %v228
  %293 = vst [vmem:[%s3 + $0x48] sm:$0xff] %v229
  %294 = vst [vmem:[%s3 + $0x50] sm:$0xff] %v230
  %295 = vst [vmem:[%s3 + $0x58] sm:$0xff] %v231
  %296 = vst [vmem:[%s3 + $0x60] sm:$0xff] %v232
  %297 = vst [vmem:[%s3 + $0x68] sm:$0xff] %v233
  %298 = vst [vmem:[%s3 + $0x70] sm:$0xff] %v234
  %299 = vst [vmem:[%s3 + $0x78] sm:$0xff] %v235
  %300 = vst [vmem:[%s3 + $0x80] sm:$0xff] %v236
  %301 = vst [vmem:[%s3 + $0x88] sm:$0xff] %v237
  %302 = vst [vmem:[%s3 + $0x90] sm:$0xff] %v238
  %303 = vst [vmem:[%s3 + $0x98] sm:$0xff] %v239
  %304 = vst [vmem:[%s3 + $0xa0] sm:$0xff] %v240
  %305 = vst [vmem:[%s3 + $0xa8] sm:$0xff] %v241
  %306 = vst [vmem:[%s3 + $0xb0] sm:$0xff] %v242
  %307 = vst [vmem:[%s3 + $0xb8] sm:$0xff] %v243
  %308 = vst [vmem:[%s3 + $0xc0] sm:$0xff] %v244
  %309 = vst [vmem:[%s3 + $0xc8] sm:$0xff] %v245
  %310 = vst [vmem:[%s3 + $0xd0] sm:$0xff] %v246
  %311 = vst [vmem:[%s3 + $0xd8] sm:$0xff] %v247
  %312 = vst [vmem:[%s3 + $0xe0] sm:$0xff] %v248
  %313 = vst [vmem:[%s3 + $0xe8] sm:$0xff] %v249
  %314 = vst [vmem:[%s3 + $0xf0] sm:$0xff] %v250
  %315 = vst [vmem:[%s3 + $0xf8] sm:$0xff] %v251
  %316 = vst [vmem:[%s3 + $0x100] sm:$0xff] %v252
  %317 = vst [vmem:[%s3 + $0x108] sm:$0xff] %v253
  %318 = vst [vmem:[%s3 + $0x110] sm:$0xff] %v254
  %319 = vst [vmem:[%s3 + $0x118] sm:$0xff] %v255
  %320 = vst [vmem:[%s3 + $0x120] sm:$0xff] %v256
  %321 = vst [vmem:[%s3 + $0x128] sm:$0xff] %v257
  %322 = vst [vmem:[%s3 + $0x130] sm:$0xff] %v258
  %323 = vst [vmem:[%s3 + $0x138] sm:$0xff] %v259
  %324 = vst [vmem:[%s3 + $0x140] sm:$0xff] %v260
  %325 = vst [vmem:[%s3 + $0x148] sm:$0xff] %v261
  %326 = vst [vmem:[%s3 + $0x150] sm:$0xff] %v262
  %327 = vst [vmem:[%s3 + $0x158] sm:$0xff] %v263
  %328 = vst [vmem:[%s3 + $0x160] sm:$0xff] %v264
  %329 = vst [vmem:[%s3 + $0x168] sm:$0xff] %v265
  %330 = vst [vmem:[%s3 + $0x170] sm:$0xff] %v266
  %331 = vst [vmem:[%s3 + $0x178] sm:$0xff] %v267
  %332 = vst [vmem:[%s3 + $0x180] sm:$0xff] %v268
  %333 = vst [vmem:[%s3 + $0x188] sm:$0xff] %v269
  %334 = vst [vmem:[%s3 + $0x190] sm:$0xff] %v270
  %335 = vst [vmem:[%s3 + $0x198] sm:$0xff] %v271
  %336 = vst [vmem:[%s3 + $0x1a0] sm:$0xff] %v272
  %337 = vst [vmem:[%s3 + $0x1a8] sm:$0xff] %v273
  %338 = vst [vmem:[%s3 + $0x1b0] sm:$0xff] %v274
  %339 = vst [vmem:[%s3 + $0x1b8] sm:$0xff] %v275
  %340 = vst [vmem:[%s3 + $0x1c0] sm:$0xff] %v276
  %341 = vst [vmem:[%s3 + $0x1c8] sm:$0xff] %v277
  %342 = vst [vmem:[%s3 + $0x1d0] sm:$0xff] %v278
  %343 = vst [vmem:[%s3 + $0x1d8] sm:$0xff] %v279
  %344 = vst [vmem:[%s3 + $0x1e0] sm:$0xff] %v280
  %345 = vst [vmem:[%s3 + $0x1e8] sm:$0xff] %v281
  %346 = vst [vmem:[%s3 + $0x1f0] sm:$0xff] %v282
  %347 = vst [vmem:[%s3 + $0x1f8] sm:$0xff] %v283
  // Predicated region
  $region14: #{_lambda_.4} parent=0 // pred_check
    _
  $region15: #{_lambda_.4} parent=0 // pred_check_branch
    %349 = sbr.rel (0) target = $region17
  $region16: #{_lambda_.4} parent=0 // pred_region
    _
  $region17: #{_lambda_.4} parent=0 // pred_fallthru
    _
  // Predicated region
  $region18: #{_lambda_.4} parent=0 // pred_check
    _
  $region19: #{_lambda_.4} parent=0 // pred_check_branch
    %351 = sbr.rel (0) target = $region21
  $region20: #{_lambda_.4} parent=0 // pred_region
    _
  $region21: #{_lambda_.4} parent=0 // pred_fallthru
    _

// kernel: _lambda_.6
$region0: #{_lambda_.6}
  #allocation0 [shape = 'u32[]', space=smem, size = 0x4, offset = 0x4, fixed_abs, tag = 'smem constant byte address 0x4 - core index']
  #allocation1 [shape = 'u32[144,128]{1,0:T(1,128)}', space=vmem, size = 0x12000, scoped, tag = 'internal scratch']
  %s0 = inlined_call_operand.vmem [shape: f32[2,4,10,10,128], index: 0, kind: input, shape index: {}]
  %s1 = inlined_call_operand.vmem [shape: f32[9,128,128], index: 1, kind: input, shape index: {}]
  %s2 = inlined_call_operand.vmem [shape: f32[1,128], index: 2, kind: input, shape index: {}]
  %s3 = inlined_call_operand.vmem [shape: f32[1,128], index: 3, kind: input, shape index: {}]
  %s4 = inlined_call_operand.vmem [shape: f32[128,128], index: 4, kind: output, shape index: {}]
  %s5 = sld [smem:[#allocation0]]
  $region49: #{_lambda_.6} parent=0
    _
  %s7 = ssub.s32 1, %s5
  %s8 = scalar_select 0, %s7, %s5
  loop: start=0, step=1, limit=4
  $region2: #{_lambda_.6} parent=0 // loop_pre_header
    _
  $region3: #{_lambda_.6} parent=0 // loop_header
    %s10 = sphi 0, %s14
    %p11 = scmp.ge.s32.totalorder %s10, 4
    %s17 = sphi 0, %s36
    %s18 = sphi 0, %s32
    %s19 = sphi 0, %s28
    %s20 = sphi 0, %s17
    %s21 = sphi 0, %s18
    %s22 = sphi 0, %s19
    %s23 = sphi 0, %s20
    %s24 = sphi 0, %s21
    %s25 = sphi 0, %s22
    %s39 = sphi 0, %s41
    %s42 = sphi 0, %s39
    %s43 = sphi 0, %s42
    %s59 = sphi 0, %s43
    %s65 = sphi 0, %s67
    %s68 = sphi 0, %s65
    %s69 = sphi 0, %s68
    %s85 = sphi 0, %s69
    %s91 = sphi 0, %s93
    %s94 = sphi 0, %s91
    %s95 = sphi 0, %s94
    %s111 = sphi 0, %s95
    %s117 = sphi 0, %s119
    %s120 = sphi 0, %s117
    %s121 = sphi 0, %s120
    %s137 = sphi 0, %s121
    %s147 = sphi 0, %s149
    %s150 = sphi 0, %s147
    %s151 = sphi 0, %s150
    %s167 = sphi 0, %s151
  $region4: #{_lambda_.6} parent=0 // loop_header_branch
    %13 = sbr.rel (%p11) target = $region8
  $region5: #{_lambda_.6} parent=0 // loop_body
    %s15 = ssub.s32 %s10, 1
    %s16 = ssub.s32 %s10, 2
    %s26 = sadd.s32 1, %s19
    %p27 = scmp.ge.s32.totalorder %s26, 1
    %s28 = scalar_select %p27, 0, %s26
    %s29 = sadd.s32 1, %s18
    %s30 = scalar_select %p27, %s29, %s18
    %p31 = scmp.ge.s32.totalorder %s30, 1
    %s32 = scalar_select %p31, 0, %s30
    %s33 = sadd.s32 1, %s17
    %s34 = scalar_select %p31, %s33, %s17
    %p35 = scmp.ge.s32.totalorder %s34, 2
    %s36 = scalar_select %p35, 0, %s34
    %s37 = ssub.s32 %s17, %s36
    %p38 = scmp.eq.s32.totalorder %s37, 0
    %s40 = sadd.s32 %s39, 1
    %s41 = scalar_select %p38, %s39, %s40
    %p44 = pneg %p38
    %p45 = scmp.eq.s32.totalorder %s10, 1
    %p46 = por %p44, %p45
    %p47 = scmp.ne.s32.totalorder %s39, %s42
    %p48 = scmp.eq.s32.totalorder %s10, 0
    %p49 = por %p47, %p48
    %p50 = scmp.ne.s32.totalorder %s39, %s42
    %p51 = scmp.eq.s32.totalorder %s15, 1
    %p52 = por %p50, %p51
    %p53 = scmp.ne.s32.totalorder %s42, %s43
    %p54 = scmp.eq.s32.totalorder %s15, 0
    %p55 = por %p53, %p54
    %p56 = scmp.ne.s32.totalorder %s42, %s43
    %p57 = scmp.eq.s32.totalorder %s16, 1
    %p58 = por %p56, %p57
    %p60 = scmp.ne.s32.totalorder %s43, %s59
    %p61 = scmp.eq.s32.totalorder %s16, 0
    %p62 = por %p60, %p61
    %s63 = ssub.s32 %s18, %s32
    %p64 = scmp.eq.s32.totalorder %s63, 0
    %s66 = sadd.s32 %s65, 1
    %s67 = scalar_select %p64, %s65, %s66
    %p70 = pneg %p64
    %p71 = scmp.eq.s32.totalorder %s10, 1
    %p72 = por %p70, %p71
    %p73 = scmp.ne.s32.totalorder %s65, %s68
    %p74 = scmp.eq.s32.totalorder %s10, 0
    %p75 = por %p73, %p74
    %p76 = scmp.ne.s32.totalorder %s65, %s68
    %p77 = scmp.eq.s32.totalorder %s15, 1
    %p78 = por %p76, %p77
    %p79 = scmp.ne.s32.totalorder %s68, %s69
    %p80 = scmp.eq.s32.totalorder %s15, 0
    %p81 = por %p79, %p80
    %p82 = scmp.ne.s32.totalorder %s68, %s69
    %p83 = scmp.eq.s32.totalorder %s16, 1
    %p84 = por %p82, %p83
    %p86 = scmp.ne.s32.totalorder %s69, %s85
    %p87 = scmp.eq.s32.totalorder %s16, 0
    %p88 = por %p86, %p87
    %s89 = ssub.s32 %s18, %s32
    %p90 = scmp.eq.s32.totalorder %s89, 0
    %s92 = sadd.s32 %s91, 1
    %s93 = scalar_select %p90, %s91, %s92
    %p96 = pneg %p90
    %p97 = scmp.eq.s32.totalorder %s10, 1
    %p98 = por %p96, %p97
    %p99 = scmp.ne.s32.totalorder %s91, %s94
    %p100 = scmp.eq.s32.totalorder %s10, 0
    %p101 = por %p99, %p100
    %p102 = scmp.ne.s32.totalorder %s91, %s94
    %p103 = scmp.eq.s32.totalorder %s15, 1
    %p104 = por %p102, %p103
    %p105 = scmp.ne.s32.totalorder %s94, %s95
    %p106 = scmp.eq.s32.totalorder %s15, 0
    %p107 = por %p105, %p106
    %p108 = scmp.ne.s32.totalorder %s94, %s95
    %p109 = scmp.eq.s32.totalorder %s16, 1
    %p110 = por %p108, %p109
    %p112 = scmp.ne.s32.totalorder %s95, %s111
    %p113 = scmp.eq.s32.totalorder %s16, 0
    %p114 = por %p112, %p113
    %s115 = ssub.s32 %s18, %s32
    %p116 = scmp.eq.s32.totalorder %s115, 0
    %s118 = sadd.s32 %s117, 1
    %s119 = scalar_select %p116, %s117, %s118
    %p122 = pneg %p116
    %p123 = scmp.eq.s32.totalorder %s10, 1
    %p124 = por %p122, %p123
    %p125 = scmp.ne.s32.totalorder %s117, %s120
    %p126 = scmp.eq.s32.totalorder %s10, 0
    %p127 = por %p125, %p126
    %p128 = scmp.ne.s32.totalorder %s117, %s120
    %p129 = scmp.eq.s32.totalorder %s15, 1
    %p130 = por %p128, %p129
    %p131 = scmp.ne.s32.totalorder %s120, %s121
    %p132 = scmp.eq.s32.totalorder %s15, 0
    %p133 = por %p131, %p132
    %p134 = scmp.ne.s32.totalorder %s120, %s121
    %p135 = scmp.eq.s32.totalorder %s16, 1
    %p136 = por %p134, %p135
    %p138 = scmp.ne.s32.totalorder %s121, %s137
    %p139 = scmp.eq.s32.totalorder %s16, 0
    %p140 = por %p138, %p139
    %s141 = sadd.s32 %s17, %s19
    %s142 = sadd.s32 %s36, %s28
    %s143 = ssub.s32 %s141, %s142
    %s144 = ssub.s32 %s18, %s32
    %s145 = sor.u32 %s143, %s144
    %p146 = scmp.eq.s32.totalorder %s145, 0
    %s148 = sadd.s32 %s147, 1
    %s149 = scalar_select %p146, %s147, %s148
    %p152 = pneg %p146
    %p153 = scmp.eq.s32.totalorder %s10, 1
    %p154 = por %p152, %p153
    %p155 = scmp.ne.s32.totalorder %s147, %s150
    %p156 = scmp.eq.s32.totalorder %s10, 0
    %p157 = por %p155, %p156
    %p158 = scmp.ne.s32.totalorder %s147, %s150
    %p159 = scmp.eq.s32.totalorder %s15, 1
    %p160 = por %p158, %p159
    %p161 = scmp.ne.s32.totalorder %s150, %s151
    %p162 = scmp.eq.s32.totalorder %s15, 0
    %p163 = por %p161, %p162
    %p164 = scmp.ne.s32.totalorder %s150, %s151
    %p165 = scmp.eq.s32.totalorder %s16, 1
    %p166 = por %p164, %p165
    %p168 = scmp.ne.s32.totalorder %s151, %s167
    %p169 = scmp.eq.s32.totalorder %s16, 0
    %p170 = por %p168, %p169
    %p171 = scmp.le.s32.totalorder 1, %s10
    %p172 = scmp.lt.s32.totalorder %s10, 3
    %p173 = pnand %p171, %p172
    %p174 = pneg %p173
    // Predicated region
    $region9: #{_lambda_.6} parent=5 // pred_check
      _
    $region10: #{_lambda_.6} parent=5 // pred_check_branch
      %176 = sbr.rel (%p173) target = $region12
    $region11: #{_lambda_.6} parent=5 // pred_region
      %s177 = ssub.s32 %s10, 1
      // Predicated region
      $region13: #{_lambda_.6} parent=11 // pred_check
        %p178 = pneg %p81
      $region14: #{_lambda_.6} parent=11 // pred_check_branch
        %180 = sbr.rel (%p178) target = $region16
      $region15: #{_lambda_.6} parent=11 // pred_region
        %p181 = scmp.lt.s32.totalorder %s21, 0
        %s182 = scalar_select %p181, %s21, 0
        %s183 = smul.addr %s182, 8
        %s184 = scalar_lea.vmem %s1, %s183
      $region16: #{_lambda_.6} parent=11 // pred_fallthru
        _
      // Predicated region
      $region17: #{_lambda_.6} parent=11 // pred_check
        %p185 = pneg %p107
      $region18: #{_lambda_.6} parent=11 // pred_check_branch
        %187 = sbr.rel (%p185) target = $region20
      $region19: #{_lambda_.6} parent=11 // pred_region
        %p188 = scmp.lt.s32.totalorder %s21, 0
        %s189 = scalar_select %p188, %s21, 0
        %s190 = scalar_lea.vmem %s2, %s189
      $region20: #{_lambda_.6} parent=11 // pred_fallthru
        _
      // Predicated region
      $region21: #{_lambda_.6} parent=11 // pred_check
        %p191 = pneg %p133
      $region22: #{_lambda_.6} parent=11 // pred_check_branch
        %193 = sbr.rel (%p191) target = $region24
      $region23: #{_lambda_.6} parent=11 // pred_region
        %p194 = scmp.lt.s32.totalorder %s21, 0
        %s195 = scalar_select %p194, %s21, 0
        %s196 = scalar_lea.vmem %s3, %s195
      $region24: #{_lambda_.6} parent=11 // pred_fallthru
        _
    $region12: #{_lambda_.6} parent=5 // pred_fallthru
      _
    %p197 = scmp.lt.s32.totalorder %s10, 2
    // Predicated region
    $region25: #{_lambda_.6} parent=5 // pred_check
      %p198 = pneg %p197
    $region26: #{_lambda_.6} parent=5 // pred_check_branch
      %200 = sbr.rel (%p198) target = $region28
    $region27: #{_lambda_.6} parent=5 // pred_region
      // Predicated region
      $region29: #{_lambda_.6} parent=27 // pred_check
        %p201 = pneg %p49
      $region30: #{_lambda_.6} parent=27 // pred_check_branch
        %203 = sbr.rel (%p201) target = $region32
      $region31: #{_lambda_.6} parent=27 // pred_region
        %p204 = scmp.lt.s32.totalorder %s17, 1
        %s205 = scalar_select %p204, %s17, 1
        %s206 = smul.addr %s205, 80
        %s207 = smul.addr %s206, 8
        %s208 = scalar_lea.vmem %s0, %s207
      $region32: #{_lambda_.6} parent=27 // pred_fallthru
        _
    $region28: #{_lambda_.6} parent=5 // pred_fallthru
      _
    %p209 = scmp.le.s32.totalorder 1, %s10
    %p210 = scmp.lt.s32.totalorder %s10, 3
    %p211 = pnand %p209, %p210
    %p212 = pneg %p211
    // Predicated region
    $region33: #{_lambda_.6} parent=5 // pred_check
      _
    $region34: #{_lambda_.6} parent=5 // pred_check_branch
      %214 = sbr.rel (%p211) target = $region36
    $region35: #{_lambda_.6} parent=5 // pred_region
      %s215 = ssub.s32 %s10, 1
      %p216 = scmp.lt.s32.totalorder %s20, 1
      %s217 = scalar_select %p216, %s20, 1
      %s218 = smul.addr %s217, 80
      %s219 = smul.addr %s218, 8
      %s220 = scalar_lea.vmem %s0, %s219
      %p221 = pneg %p55
      %p222 = pneg %p52
      %p223 = scmp.lt.s32.totalorder %s21, 0
      %s224 = scalar_select %p223, %s21, 0
      %s225 = smul.addr %s224, 8
      %s226 = scalar_lea.vmem %s1, %s225
      %p227 = pneg %p81
      %p228 = pneg %p78
      %p229 = scmp.lt.s32.totalorder %s21, 0
      %s230 = scalar_select %p229, %s21, 0
      %s231 = scalar_lea.vmem %s2, %s230
      %p232 = pneg %p107
      %p233 = pneg %p104
      %p234 = scmp.lt.s32.totalorder %s21, 0
      %s235 = scalar_select %p234, %s21, 0
      %s236 = scalar_lea.vmem %s3, %s235
      %p237 = pneg %p133
      %p238 = pneg %p130
      %p239 = pneg %p163
      %p240 = pneg %p160
      %s241 = sadd.s32 %s20, %s22
      %s242 = smul.u32 8, %s241
      %p243 = scmp.lt.s32.totalorder %s242, 15
      %s244 = scalar_select %p243, %s242, 15
      %p245 = scmp.lt.s32.totalorder %s21, 0
      %s246 = scalar_select %p245, %s21, 0
      %s247 = sadd.s32 %s246, %s244
      %s248 = smul.addr %s247, 8
      %s249 = scalar_lea.vmem %s4, %s248
      %p250 = scmp.lt.s32.totalorder %s20, 1
      %s251 = scalar_select %p250, %s20, 1
      %s252 = smul.addr %s251, 80
      %s253 = smul.addr %s252, 8
      %s254 = scalar_lea.vmem %s0, %s253
      %p255 = scmp.lt.s32.totalorder %s21, 0
      %s256 = scalar_select %p255, %s21, 0
      %s257 = smul.addr %s256, 8
      %s258 = scalar_lea.vmem %s1, %s257
      %p259 = scmp.lt.s32.totalorder %s21, 0
      %s260 = scalar_select %p259, %s21, 0
      %s261 = scalar_lea.vmem %s2, %s260
      %p262 = scmp.lt.s32.totalorder %s21, 0
      %s263 = scalar_select %p262, %s21, 0
      %s264 = scalar_lea.vmem %s3, %s263
      %s265 = sadd.s32 %s20, %s22
      %s266 = smul.u32 8, %s265
      %p267 = scmp.lt.s32.totalorder %s266, 15
      %s268 = scalar_select %p267, %s266, 15
      %p269 = scmp.lt.s32.totalorder %s21, 0
      %s270 = scalar_select %p269, %s21, 0
      %s271 = sadd.s32 %s270, %s268
      %s272 = smul.addr %s271, 8
      %s273 = scalar_lea.vmem %s4, %s272
      %s274 = sadd.s32 %s20, %s22
      %s275 = smul.u32 8, %s274
      %s276 = smul.u32 %s22, 8
      %s277 = smul.u32 %s276, 16
      %s278 = scalar_lea.vmem %s254, %s277
      %v279 = vld [vmem:[%s278] sm:$0xff]
      %v280 = vld [vmem:[%s278 + $0x10] sm:$0xff]
      %v281 = vld [vmem:[%s278 + $0x20] sm:$0xff]
      %v282 = vld [vmem:[%s278 + $0x30] sm:$0xff]
      %v283 = vld [vmem:[%s278 + $0x40] sm:$0xff]
      %v284 = vld [vmem:[%s278 + $0x50] sm:$0xff]
      %v285 = vld [vmem:[%s278 + $0x60] sm:$0xff]
      %v286 = vld [vmem:[%s278 + $0x70] sm:$0xff]
      %v287 = vld [vmem:[%s258] sm:$0xff]
      %v288 = vld [vmem:[%s258 + $0x8] sm:$0xff]
      %v289 = vld [vmem:[%s258 + $0x10] sm:$0xff]
      %v290 = vld [vmem:[%s258 + $0x18] sm:$0xff]
      %v291 = vld [vmem:[%s258 + $0x20] sm:$0xff]
      %v292 = vld [vmem:[%s258 + $0x28] sm:$0xff]
      %v293 = vld [vmem:[%s258 + $0x30] sm:$0xff]
      %v294 = vld [vmem:[%s258 + $0x38] sm:$0xff]
      %v295 = vld [vmem:[%s258 + $0x40] sm:$0xff]
      %v296 = vld [vmem:[%s258 + $0x48] sm:$0xff]
      %v297 = vld [vmem:[%s258 + $0x50] sm:$0xff]
      %v298 = vld [vmem:[%s258 + $0x58] sm:$0xff]
      %v299 = vld [vmem:[%s258 + $0x60] sm:$0xff]
      %v300 = vld [vmem:[%s258 + $0x68] sm:$0xff]
      %v301 = vld [vmem:[%s258 + $0x70] sm:$0xff]
      %v302 = vld [vmem:[%s258 + $0x78] sm:$0xff]
      %s303 = sadd.s32 %s277, 160
      %s304 = scalar_lea.vmem %s254, %s303
      %v305 = vld [vmem:[%s304] sm:$0xff]
      %v306 = vld [vmem:[%s304 + $0x10] sm:$0xff]
      %v307 = vld [vmem:[%s304 + $0x20] sm:$0xff]
      %v308 = vld [vmem:[%s304 + $0x30] sm:$0xff]
      %v309 = vld [vmem:[%s304 + $0x40] sm:$0xff]
      %v310 = vld [vmem:[%s304 + $0x50] sm:$0xff]
      %v311 = vld [vmem:[%s304 + $0x60] sm:$0xff]
      %v312 = vld [vmem:[%s304 + $0x70] sm:$0xff]
      %s313 = scalar_lea.vmem %s258, 128
      %v314 = vld [vmem:[%s313] sm:$0xff]
      %v315 = vld [vmem:[%s313 + $0x8] sm:$0xff]
      %v316 = vld [vmem:[%s313 + $0x10] sm:$0xff]
      %v317 = vld [vmem:[%s313 + $0x18] sm:$0xff]
      %v318 = vld [vmem:[%s313 + $0x20] sm:$0xff]
      %v319 = vld [vmem:[%s313 + $0x28] sm:$0xff]
      %v320 = vld [vmem:[%s313 + $0x30] sm:$0xff]
      %v321 = vld [vmem:[%s313 + $0x38] sm:$0xff]
      %v322 = vld [vmem:[%s313 + $0x40] sm:$0xff]
      %v323 = vld [vmem:[%s313 + $0x48] sm:$0xff]
      %v324 = vld [vmem:[%s313 + $0x50] sm:$0xff]
      %v325 = vld [vmem:[%s313 + $0x58] sm:$0xff]
      %v326 = vld [vmem:[%s313 + $0x60] sm:$0xff]
      %v327 = vld [vmem:[%s313 + $0x68] sm:$0xff]
      %v328 = vld [vmem:[%s313 + $0x70] sm:$0xff]
      %v329 = vld [vmem:[%s313 + $0x78] sm:$0xff]
      %330 = vmatprep.subr.mxu0 0.0
      %331 = vmatpush1.msra.mxu0 %v314
      %332 = vmatprep.subr.mxu0 0.0
      %333 = vmatpush1.msra.mxu0 %v315
      %334 = vmatprep.subr.mxu0 0.0
      %335 = vmatpush1.msra.mxu0 %v316
      %336 = vmatprep.subr.mxu0 0.0
      %337 = vmatpush1.msra.mxu0 %v317
      %338 = vmatprep.subr.mxu0 0.0
      %339 = vmatpush1.msra.mxu0 %v318
      %340 = vmatprep.subr.mxu0 0.0
      %341 = vmatpush1.msra.mxu0 %v319
      %342 = vmatprep.subr.mxu0 0.0
      %343 = vmatpush1.msra.mxu0 %v320
      %344 = vmatprep.subr.mxu0 0.0
      %345 = vmatpush1.msra.mxu0 %v321
      %346 = vmatprep.subr.mxu0 0.0
      %347 = vmatpush1.msra.mxu0 %v322
      %348 = vmatprep.subr.mxu0 0.0
      %349 = vmatpush1.msra.mxu0 %v323
      %350 = vmatprep.subr.mxu0 0.0
      %351 = vmatpush1.msra.mxu0 %v324
      %352 = vmatprep.subr.mxu0 0.0
      %353 = vmatpush1.msra.mxu0 %v325
      %354 = vmatprep.subr.mxu0 0.0
      %355 = vmatpush1.msra.mxu0 %v326
      %356 = vmatprep.subr.mxu0 0.0
      %357 = vmatpush1.msra.mxu0 %v327
      %358 = vmatprep.subr.mxu0 0.0
      %359 = vmatpush1.msra.mxu0 %v328
      %360 = vmatprep.subr.mxu0 0.0
      %361 = vmatpush1.msra.mxu0 %v329
      %362 = vmatprep.subr.mxu0 0.0
      %363 = vmatpush1.msra.mxu0 0.0
      %364 = vmatprep.subr.mxu0 0.0
      %365 = vmatpush1.msra.mxu0 0.0
      %366 = vmatprep.subr.mxu0 0.0
      %367 = vmatpush1.msra.mxu0 0.0
      %368 = vmatprep.subr.mxu0 0.0
      %369 = vmatpush1.msra.mxu0 0.0
      %370 = vmatprep.subr.mxu0 0.0
      %371 = vmatpush1.msra.mxu0 0.0
      %372 = vmatprep.subr.mxu0 0.0
      %373 = vmatpush1.msra.mxu0 0.0
      %374 = vmatprep.subr.mxu0 0.0
      %375 = vmatpush1.msra.mxu0 0.0
      %376 = vmatprep.subr.mxu0 0.0
      %377 = vmatpush1.msra.mxu0 0.0
      %378 = vmatprep.subr.mxu0 0.0
      %379 = vmatpush1.msra.mxu0 0.0
      %380 = vmatprep.subr.mxu0 0.0
      %381 = vmatpush1.msra.mxu0 0.0
      %382 = vmatprep.subr.mxu0 0.0
      %383 = vmatpush1.msra.mxu0 0.0
      %384 = vmatprep.subr.mxu0 0.0
      %385 = vmatpush1.msra.mxu0 0.0
      %386 = vmatprep.subr.mxu0 0.0
      %387 = vmatpush1.msra.mxu0 0.0
      %388 = vmatprep.subr.mxu0 0.0
      %389 = vmatpush1.msra.mxu0 0.0
      %390 = vmatprep.subr.mxu0 0.0
      %391 = vmatpush1.msra.mxu0 0.0
      %392 = vmatprep.subr.mxu0 0.0
      %393 = vmatpush1.msra.mxu0 0.0
      %394 = vmatprep.mubr.f32.mxu0 0.0
      %395 = vmatmul.mubr.f32.gmra.mrb[0].mxu0 %v305
      %v396 = vpop.f32.mrb[0].mxu0
      %v397 = vadd.f32 0.0, %v396
      %v398 = vpop.f32.mrb[0].mxu0
      %399 = vmatprep.mubr.f32.mxu0 0.0
      %400 = vmatmul.mubr.f32.gmra.mrb[0].mxu0 %v306
      %v401 = vpop.f32.mrb[0].mxu0
      %v402 = vadd.f32 0.0, %v401
      %v403 = vpop.f32.mrb[0].mxu0
      %404 = vmatprep.mubr.f32.mxu0 0.0
      %405 = vmatmul.mubr.f32.gmra.mrb[0].mxu0 %v307
      %v406 = vpop.f32.mrb[0].mxu0
      %v407 = vadd.f32 0.0, %v406
      %v408 = vpop.f32.mrb[0].mxu0
      %409 = vmatprep.mubr.f32.mxu0 0.0
      %410 = vmatmul.mubr.f32.gmra.mrb[0].mxu0 %v308
      %v411 = vpop.f32.mrb[0].mxu0
      %v412 = vadd.f32 0.0, %v411
      %v413 = vpop.f32.mrb[0].mxu0
      %414 = vmatprep.mubr.f32.mxu0 0.0
      %415 = vmatmul.mubr.f32.gmra.mrb[0].mxu0 %v309
      %v416 = vpop.f32.mrb[0].mxu0
      %v417 = vadd.f32 0.0, %v416
      %v418 = vpop.f32.mrb[0].mxu0
      %419 = vmatprep.mubr.f32.mxu0 0.0
      %420 = vmatmul.mubr.f32.gmra.mrb[0].mxu0 %v310
      %v421 = vpop.f32.mrb[0].mxu0
      %v422 = vadd.f32 0.0, %v421
      %v423 = vpop.f32.mrb[0].mxu0
      %424 = vmatprep.mubr.f32.mxu0 0.0
      %425 = vmatmul.mubr.f32.gmra.mrb[0].mxu0 %v311
      %v426 = vpop.f32.mrb[0].mxu0
      %v427 = vadd.f32 0.0, %v426
      %v428 = vpop.f32.mrb[0].mxu0
      %429 = vmatprep.mubr.f32.mxu0 0.0
      %430 = vmatmul.mubr.f32.gmra.mrb[0].mxu0 %v312
      %v431 = vpop.f32.mrb[0].mxu0
      %v432 = vadd.f32 0.0, %v431
      %v433 = vpop.f32.mrb[0].mxu0
      %434 = vdwg.mxu0
      %435 = vmatprep.subr.mxu0 0.0
      %436 = vmatpush1.msra.mxu0 %v287
      %437 = vmatprep.subr.mxu0 0.0
      %438 = vmatpush1.msra.mxu0 %v288
      %439 = vmatprep.subr.mxu0 0.0
      %440 = vmatpush1.msra.mxu0 %v289
      %441 = vmatprep.subr.mxu0 0.0
      %442 = vmatpush1.msra.mxu0 %v290
      %443 = vmatprep.subr.mxu0 0.0
      %444 = vmatpush1.msra.mxu0 %v291
      %445 = vmatprep.subr.mxu0 0.0
      %446 = vmatpush1.msra.mxu0 %v292
      %447 = vmatprep.subr.mxu0 0.0
      %448 = vmatpush1.msra.mxu0 %v293
      %449 = vmatprep.subr.mxu0 0.0
      %450 = vmatpush1.msra.mxu0 %v294
      %451 = vmatprep.subr.mxu0 0.0
      %452 = vmatpush1.msra.mxu0 %v295
      %453 = vmatprep.subr.mxu0 0.0
      %454 = vmatpush1.msra.mxu0 %v296
      %455 = vmatprep.subr.mxu0 0.0
      %456 = vmatpush1.msra.mxu0 %v297
      %457 = vmatprep.subr.mxu0 0.0
      %458 = vmatpush1.msra.mxu0 %v298
      %459 = vmatprep.subr.mxu0 0.0
      %460 = vmatpush1.msra.mxu0 %v299
      %461 = vmatprep.subr.mxu0 0.0
      %462 = vmatpush1.msra.mxu0 %v300
      %463 = vmatprep.subr.mxu0 0.0
      %464 = vmatpush1.msra.mxu0 %v301
      %465 = vmatprep.subr.mxu0 0.0
      %466 = vmatpush1.msra.mxu0 %v302
      %467 = vmatprep.subr.mxu0 0.0
      %468 = vmatpush1.msra.mxu0 0.0
      %469 = vmatprep.subr.mxu0 0.0
      %470 = vmatpush1.msra.mxu0 0.0
      %471 = vmatprep.subr.mxu0 0.0
      %472 = vmatpush1.msra.mxu0 0.0
      %473 = vmatprep.subr.mxu0 0.0
      %474 = vmatpush1.msra.mxu0 0.0
      %475 = vmatprep.subr.mxu0 0.0
      %476 = vmatpush1.msra.mxu0 0.0
      %477 = vmatprep.subr.mxu0 0.0
      %478 = vmatpush1.msra.mxu0 0.0
      %479 = vmatprep.subr.mxu0 0.0
      %480 = vmatpush1.msra.mxu0 0.0
      %481 = vmatprep.subr.mxu0 0.0
      %482 = vmatpush1.msra.mxu0 0.0
      %483 = vmatprep.subr.mxu0 0.0
      %484 = vmatpush1.msra.mxu0 0.0
      %485 = vmatprep.subr.mxu0 0.0
      %486 = vmatpush1.msra.mxu0 0.0
      %487 = vmatprep.subr.mxu0 0.0
      %488 = vmatpush1.msra.mxu0 0.0
      %489 = vmatprep.subr.mxu0 0.0
      %490 = vmatpush1.msra.mxu0 0.0
      %491 = vmatprep.subr.mxu0 0.0
      %492 = vmatpush1.msra.mxu0 0.0
      %493 = vmatprep.subr.mxu0 0.0
      %494 = vmatpush1.msra.mxu0 0.0
      %495 = vmatprep.subr.mxu0 0.0
      %496 = vmatpush1.msra.mxu0 0.0
      %497 = vmatprep.subr.mxu0 0.0
      %498 = vmatpush1.msra.mxu0 0.0
      %499 = vmatprep.mubr.f32.mxu0 0.0
      %500 = vmatmul.mubr.f32.gmra.mrb[0].mxu0 %v279
      %v501 = vpop.f32.mrb[0].mxu0
      %v502 = vadd.f32 %v397, %v501
      %v503 = vpop.f32.mrb[0].mxu0
      %504 = vmatprep.mubr.f32.mxu0 0.0
      %505 = vmatmul.mubr.f32.gmra.mrb[0].mxu0 %v280
      %v506 = vpop.f32.mrb[0].mxu0
      %v507 = vadd.f32 %v402, %v506
      %v508 = vpop.f32.mrb[0].mxu0
      %509 = vmatprep.mubr.f32.mxu0 0.0
      %510 = vmatmul.mubr.f32.gmra.mrb[0].mxu0 %v281
      %v511 = vpop.f32.mrb[0].mxu0
      %v512 = vadd.f32 %v407, %v511
      %v513 = vpop.f32.mrb[0].mxu0
      %514 = vmatprep.mubr.f32.mxu0 0.0
      %515 = vmatmul.mubr.f32.gmra.mrb[0].mxu0 %v282
      %v516 = vpop.f32.mrb[0].mxu0
      %v517 = vadd.f32 %v412, %v516
      %v518 = vpop.f32.mrb[0].mxu0
      %519 = vmatprep.mubr.f32.mxu0 0.0
      %520 = vmatmul.mubr.f32.gmra.mrb[0].mxu0 %v283
      %v521 = vpop.f32.mrb[0].mxu0
      %v522 = vadd.f32 %v417, %v521
      %v523 = vpop.f32.mrb[0].mxu0
      %524 = vmatprep.mubr.f32.mxu0 0.0
      %525 = vmatmul.mubr.f32.gmra.mrb[0].mxu0 %v284
      %v526 = vpop.f32.mrb[0].mxu0
      %v527 = vadd.f32 %v422, %v526
      %v528 = vpop.f32.mrb[0].mxu0
      %529 = vmatprep.mubr.f32.mxu0 0.0
      %530 = vmatmul.mubr.f32.gmra.mrb[0].mxu0 %v285
      %v531 = vpop.f32.mrb[0].mxu0
      %v532 = vadd.f32 %v427, %v531
      %v533 = vpop.f32.mrb[0].mxu0
      %534 = vmatprep.mubr.f32.mxu0 0.0
      %535 = vmatmul.mubr.f32.gmra.mrb[0].mxu0 %v286
      %v536 = vpop.f32.mrb[0].mxu0
      %v537 = vadd.f32 %v432, %v536
      %v538 = vpop.f32.mrb[0].mxu0
      %539 = vdwg.mxu0
      %v540 = vld [vmem:[%s278 + $0x1] sm:$0xff]
      %v541 = vld [vmem:[%s278 + $0x11] sm:$0xff]
      %v542 = vld [vmem:[%s278 + $0x21] sm:$0xff]
      %v543 = vld [vmem:[%s278 + $0x31] sm:$0xff]
      %v544 = vld [vmem:[%s278 + $0x41] sm:$0xff]
      %v545 = vld [vmem:[%s278 + $0x51] sm:$0xff]
      %v546 = vld [vmem:[%s278 + $0x61] sm:$0xff]
      %v547 = vld [vmem:[%s278 + $0x71] sm:$0xff]
      %s548 = scalar_lea.vmem %s258, 256
      %v549 = vld [vmem:[%s548] sm:$0xff]
      %v550 = vld [vmem:[%s548 + $0x8] sm:$0xff]
      %v551 = vld [vmem:[%s548 + $0x10] sm:$0xff]
      %v552 = vld [vmem:[%s548 + $0x18] sm:$0xff]
      %v553 = vld [vmem:[%s548 + $0x20] sm:$0xff]
      %v554 = vld [vmem:[%s548 + $0x28] sm:$0xff]
      %v555 = vld [vmem:[%s548 + $0x30] sm:$0xff]
      %v556 = vld [vmem:[%s548 + $0x38] sm:$0xff]
      %v557 = vld [vmem:[%s548 + $0x40] sm:$0xff]
      %v558 = vld [vmem:[%s548 + $0x48] sm:$0xff]
      %v559 = vld [vmem:[%s548 + $0x50] sm:$0xff]
      %v560 = vld [vmem:[%s548 + $0x58] sm:$0xff]
      %v561 = vld [vmem:[%s548 + $0x60] sm:$0xff]
      %v562 = vld [vmem:[%s548 + $0x68] sm:$0xff]
      %v563 = vld [vmem:[%s548 + $0x70] sm:$0xff]
      %v564 = vld [vmem:[%s548 + $0x78] sm:$0xff]
      %565 = vmatprep.subr.mxu0 0.0
      %566 = vmatpush1.msra.mxu0 %v549
      %567 = vmatprep.subr.mxu0 0.0
      %568 = vmatpush1.msra.mxu0 %v550
      %569 = vmatprep.subr.mxu0 0.0
      %570 = vmatpush1.msra.mxu0 %v551
      %571 = vmatprep.subr.mxu0 0.0
      %572 = vmatpush1.msra.mxu0 %v552
      %573 = vmatprep.subr.mxu0 0.0
      %574 = vmatpush1.msra.mxu0 %v553
      %575 = vmatprep.subr.mxu0 0.0
      %576 = vmatpush1.msra.mxu0 %v554
      %577 = vmatprep.subr.mxu0 0.0
      %578 = vmatpush1.msra.mxu0 %v555
      %579 = vmatprep.subr.mxu0 0.0
      %580 = vmatpush1.msra.mxu0 %v556
      %581 = vmatprep.subr.mxu0 0.0
      %582 = vmatpush1.msra.mxu0 %v557
      %583 = vmatprep.subr.mxu0 0.0
      %584 = vmatpush1.msra.mxu0 %v558
      %585 = vmatprep.subr.mxu0 0.0
      %586 = vmatpush1.msra.mxu0 %v559
      %587 = vmatprep.subr.mxu0 0.0
      %588 = vmatpush1.msra.mxu0 %v560
      %589 = vmatprep.subr.mxu0 0.0
      %590 = vmatpush1.msra.mxu0 %v561
      %591 = vmatprep.subr.mxu0 0.0
      %592 = vmatpush1.msra.mxu0 %v562
      %593 = vmatprep.subr.mxu0 0.0
      %594 = vmatpush1.msra.mxu0 %v563
      %595 = vmatprep.subr.mxu0 0.0
      %596 = vmatpush1.msra.mxu0 %v564
      %597 = vmatprep.subr.mxu0 0.0
      %598 = vmatpush1.msra.mxu0 0.0
      %599 = vmatprep.subr.mxu0 0.0
      %600 = vmatpush1.msra.mxu0 0.0
      %601 = vmatprep.subr.mxu0 0.0
      %602 = vmatpush1.msra.mxu0 0.0
      %603 = vmatprep.subr.mxu0 0.0
      %604 = vmatpush1.msra.mxu0 0.0
      %605 = vmatprep.subr.mxu0 0.0
      %606 = vmatpush1.msra.mxu0 0.0
      %607 = vmatprep.subr.mxu0 0.0
      %608 = vmatpush1.msra.mxu0 0.0
      %609 = vmatprep.subr.mxu0 0.0
      %610 = vmatpush1.msra.mxu0 0.0
      %611 = vmatprep.subr.mxu0 0.0
      %612 = vmatpush1.msra.mxu0 0.0
      %613 = vmatprep.subr.mxu0 0.0
      %614 = vmatpush1.msra.mxu0 0.0
      %615 = vmatprep.subr.mxu0 0.0
      %616 = vmatpush1.msra.mxu0 0.0
      %617 = vmatprep.subr.mxu0 0.0
      %618 = vmatpush1.msra.mxu0 0.0
      %619 = vmatprep.subr.mxu0 0.0
      %620 = vmatpush1.msra.mxu0 0.0
      %621 = vmatprep.subr.mxu0 0.0
      %622 = vmatpush1.msra.mxu0 0.0
      %623 = vmatprep.subr.mxu0 0.0
      %624 = vmatpush1.msra.mxu0 0.0
      %625 = vmatprep.subr.mxu0 0.0
      %626 = vmatpush1.msra.mxu0 0.0
      %627 = vmatprep.subr.mxu0 0.0
      %628 = vmatpush1.msra.mxu0 0.0
      %629 = vmatprep.mubr.f32.mxu0 0.0
      %630 = vmatmul.mubr.f32.gmra.mrb[0].mxu0 %v540
      %v631 = vpop.f32.mrb[0].mxu0
      %v632 = vadd.f32 0.0, %v631
      %v633 = vpop.f32.mrb[0].mxu0
      %634 = vmatprep.mubr.f32.mxu0 0.0
      %635 = vmatmul.mubr.f32.gmra.mrb[0].mxu0 %v541
      %v636 = vpop.f32.mrb[0].mxu0
      %v637 = vadd.f32 0.0, %v636
      %v638 = vpop.f32.mrb[0].mxu0
      %639 = vmatprep.mubr.f32.mxu0 0.0
      %640 = vmatmul.mubr.f32.gmra.mrb[0].mxu0 %v542
      %v641 = vpop.f32.mrb[0].mxu0
      %v642 = vadd.f32 0.0, %v641
      %v643 = vpop.f32.mrb[0].mxu0
      %644 = vmatprep.mubr.f32.mxu0 0.0
      %645 = vmatmul.mubr.f32.gmra.mrb[0].mxu0 %v543
      %v646 = vpop.f32.mrb[0].mxu0
      %v647 = vadd.f32 0.0, %v646
      %v648 = vpop.f32.mrb[0].mxu0
      %649 = vmatprep.mubr.f32.mxu0 0.0
      %650 = vmatmul.mubr.f32.gmra.mrb[0].mxu0 %v544
      %v651 = vpop.f32.mrb[0].mxu0
      %v652 = vadd.f32 0.0, %v651
      %v653 = vpop.f32.mrb[0].mxu0
      %654 = vmatprep.mubr.f32.mxu0 0.0
      %655 = vmatmul.mubr.f32.gmra.mrb[0].mxu0 %v545
      %v656 = vpop.f32.mrb[0].mxu0
      %v657 = vadd.f32 0.0, %v656
      %v658 = vpop.f32.mrb[0].mxu0
      %659 = vmatprep.mubr.f32.mxu0 0.0
      %660 = vmatmul.mubr.f32.gmra.mrb[0].mxu0 %v546
      %v661 = vpop.f32.mrb[0].mxu0
      %v662 = vadd.f32 0.0, %v661
      %v663 = vpop.f32.mrb[0].mxu0
      %664 = vmatprep.mubr.f32.mxu0 0.0
      %665 = vmatmul.mubr.f32.gmra.mrb[0].mxu0 %v547
      %v666 = vpop.f32.mrb[0].mxu0
      %v667 = vadd.f32 0.0, %v666
      %v668 = vpop.f32.mrb[0].mxu0
      %669 = vdwg.mxu0
      %v670 = vadd.f32 %v502, %v632
      %v671 = vadd.f32 %v507, %v637
      %v672 = vadd.f32 %v512, %v642
      %v673 = vadd.f32 %v517, %v647
      %v674 = vadd.f32 %v522, %v652
      %v675 = vadd.f32 %v527, %v657
      %v676 = vadd.f32 %v532, %v662
      %v677 = vadd.f32 %v537, %v667
      %s678 = sadd.s32 %s277, 320
      %s679 = scalar_lea.vmem %s254, %s678
      %v680 = vld [vmem:[%s679] sm:$0xff]
      %v681 = vld [vmem:[%s679 + $0x10] sm:$0xff]
      %v682 = vld [vmem:[%s679 + $0x20] sm:$0xff]
      %v683 = vld [vmem:[%s679 + $0x30] sm:$0xff]
      %v684 = vld [vmem:[%s679 + $0x40] sm:$0xff]
      %v685 = vld [vmem:[%s679 + $0x50] sm:$0xff]
      %v686 = vld [vmem:[%s679 + $0x60] sm:$0xff]
      %v687 = vld [vmem:[%s679 + $0x70] sm:$0xff]
      %s688 = scalar_lea.vmem %s258, 384
      %v689 = vld [vmem:[%s688] sm:$0xff]
      %v690 = vld [vmem:[%s688 + $0x8] sm:$0xff]
      %v691 = vld [vmem:[%s688 + $0x10] sm:$0xff]
      %v692 = vld [vmem:[%s688 + $0x18] sm:$0xff]
      %v693 = vld [vmem:[%s688 + $0x20] sm:$0xff]
      %v694 = vld [vmem:[%s688 + $0x28] sm:$0xff]
      %v695 = vld [vmem:[%s688 + $0x30] sm:$0xff]
      %v696 = vld [vmem:[%s688 + $0x38] sm:$0xff]
      %v697 = vld [vmem:[%s688 + $0x40] sm:$0xff]
      %v698 = vld [vmem:[%s688 + $0x48] sm:$0xff]
      %v699 = vld [vmem:[%s688 + $0x50] sm:$0xff]
      %v700 = vld [vmem:[%s688 + $0x58] sm:$0xff]
      %v701 = vld [vmem:[%s688 + $0x60] sm:$0xff]
      %v702 = vld [vmem:[%s688 + $0x68] sm:$0xff]
      %v703 = vld [vmem:[%s688 + $0x70] sm:$0xff]
      %v704 = vld [vmem:[%s688 + $0x78] sm:$0xff]
      %705 = vmatprep.subr.mxu0 0.0
      %706 = vmatpush1.msra.mxu0 %v689
      %707 = vmatprep.subr.mxu0 0.0
      %708 = vmatpush1.msra.mxu0 %v690
      %709 = vmatprep.subr.mxu0 0.0
      %710 = vmatpush1.msra.mxu0 %v691
      %711 = vmatprep.subr.mxu0 0.0
      %712 = vmatpush1.msra.mxu0 %v692
      %713 = vmatprep.subr.mxu0 0.0
      %714 = vmatpush1.msra.mxu0 %v693
      %715 = vmatprep.subr.mxu0 0.0
      %716 = vmatpush1.msra.mxu0 %v694
      %717 = vmatprep.subr.mxu0 0.0
      %718 = vmatpush1.msra.mxu0 %v695
      %719 = vmatprep.subr.mxu0 0.0
      %720 = vmatpush1.msra.mxu0 %v696
      %721 = vmatprep.subr.mxu0 0.0
      %722 = vmatpush1.msra.mxu0 %v697
      %723 = vmatprep.subr.mxu0 0.0
      %724 = vmatpush1.msra.mxu0 %v698
      %725 = vmatprep.subr.mxu0 0.0
      %726 = vmatpush1.msra.mxu0 %v699
      %727 = vmatprep.subr.mxu0 0.0
      %728 = vmatpush1.msra.mxu0 %v700
      %729 = vmatprep.subr.mxu0 0.0
      %730 = vmatpush1.msra.mxu0 %v701
      %731 = vmatprep.subr.mxu0 0.0
      %732 = vmatpush1.msra.mxu0 %v702
      %733 = vmatprep.subr.mxu0 0.0
      %734 = vmatpush1.msra.mxu0 %v703
      %735 = vmatprep.subr.mxu0 0.0
      %736 = vmatpush1.msra.mxu0 %v704
      %737 = vmatprep.subr.mxu0 0.0
      %738 = vmatpush1.msra.mxu0 0.0
      %739 = vmatprep.subr.mxu0 0.0
      %740 = vmatpush1.msra.mxu0 0.0
      %741 = vmatprep.subr.mxu0 0.0
      %742 = vmatpush1.msra.mxu0 0.0
      %743 = vmatprep.subr.mxu0 0.0
      %744 = vmatpush1.msra.mxu0 0.0
      %745 = vmatprep.subr.mxu0 0.0
      %746 = vmatpush1.msra.mxu0 0.0
      %747 = vmatprep.subr.mxu0 0.0
      %748 = vmatpush1.msra.mxu0 0.0
      %749 = vmatprep.subr.mxu0 0.0
      %750 = vmatpush1.msra.mxu0 0.0
      %751 = vmatprep.subr.mxu0 0.0
      %752 = vmatpush1.msra.mxu0 0.0
      %753 = vmatprep.subr.mxu0 0.0
      %754 = vmatpush1.msra.mxu0 0.0
      %755 = vmatprep.subr.mxu0 0.0
      %756 = vmatpush1.msra.mxu0 0.0
      %757 = vmatprep.subr.mxu0 0.0
      %758 = vmatpush1.msra.mxu0 0.0
      %759 = vmatprep.subr.mxu0 0.0
      %760 = vmatpush1.msra.mxu0 0.0
      %761 = vmatprep.subr.mxu0 0.0
      %762 = vmatpush1.msra.mxu0 0.0
      %763 = vmatprep.subr.mxu0 0.0
      %764 = vmatpush1.msra.mxu0 0.0
      %765 = vmatprep.subr.mxu0 0.0
      %766 = vmatpush1.msra.mxu0 0.0
      %767 = vmatprep.subr.mxu0 0.0
      %768 = vmatpush1.msra.mxu0 0.0
      %769 = vmatprep.mubr.f32.mxu0 0.0
      %770 = vmatmul.mubr.f32.gmra.mrb[0].mxu0 %v680
      %v771 = vpop.f32.mrb[0].mxu0
      %v772 = vadd.f32 0.0, %v771
      %v773 = vpop.f32.mrb[0].mxu0
      %774 = vmatprep.mubr.f32.mxu0 0.0
      %775 = vmatmul.mubr.f32.gmra.mrb[0].mxu0 %v681
      %v776 = vpop.f32.mrb[0].mxu0
      %v777 = vadd.f32 0.0, %v776
      %v778 = vpop.f32.mrb[0].mxu0
      %779 = vmatprep.mubr.f32.mxu0 0.0
      %780 = vmatmul.mubr.f32.gmra.mrb[0].mxu0 %v682
      %v781 = vpop.f32.mrb[0].mxu0
      %v782 = vadd.f32 0.0, %v781
      %v783 = vpop.f32.mrb[0].mxu0
      %784 = vmatprep.mubr.f32.mxu0 0.0
      %785 = vmatmul.mubr.f32.gmra.mrb[0].mxu0 %v683
      %v786 = vpop.f32.mrb[0].mxu0
      %v787 = vadd.f32 0.0, %v786
      %v788 = vpop.f32.mrb[0].mxu0
      %789 = vmatprep.mubr.f32.mxu0 0.0
      %790 = vmatmul.mubr.f32.gmra.mrb[0].mxu0 %v684
      %v791 = vpop.f32.mrb[0].mxu0
      %v792 = vadd.f32 0.0, %v791
      %v793 = vpop.f32.mrb[0].mxu0
      %794 = vmatprep.mubr.f32.mxu0 0.0
      %795 = vmatmul.mubr.f32.gmra.mrb[0].mxu0 %v685
      %v796 = vpop.f32.mrb[0].mxu0
      %v797 = vadd.f32 0.0, %v796
      %v798 = vpop.f32.mrb[0].mxu0
      %799 = vmatprep.mubr.f32.mxu0 0.0
      %800 = vmatmul.mubr.f32.gmra.mrb[0].mxu0 %v686
      %v801 = vpop.f32.mrb[0].mxu0
      %v802 = vadd.f32 0.0, %v801
      %v803 = vpop.f32.mrb[0].mxu0
      %804 = vmatprep.mubr.f32.mxu0 0.0
      %805 = vmatmul.mubr.f32.gmra.mrb[0].mxu0 %v687
      %v806 = vpop.f32.mrb[0].mxu0
      %v807 = vadd.f32 0.0, %v806
      %v808 = vpop.f32.mrb[0].mxu0
      %809 = vdwg.mxu0
      %v810 = vadd.f32 %v670, %v772
      %v811 = vadd.f32 %v671, %v777
      %v812 = vadd.f32 %v672, %v782
      %v813 = vadd.f32 %v673, %v787
      %v814 = vadd.f32 %v674, %v792
      %v815 = vadd.f32 %v675, %v797
      %v816 = vadd.f32 %v676, %v802
      %v817 = vadd.f32 %v677, %v807
      %s818 = sadd.s32 %s277, 480
      %s819 = scalar_lea.vmem %s254, %s818
      %v820 = vld [vmem:[%s819] sm:$0xff]
      %v821 = vld [vmem:[%s819 + $0x10] sm:$0xff]
      %v822 = vld [vmem:[%s819 + $0x20] sm:$0xff]
      %v823 = vld [vmem:[%s819 + $0x30] sm:$0xff]
      %v824 = vld [vmem:[%s819 + $0x40] sm:$0xff]
      %v825 = vld [vmem:[%s819 + $0x50] sm:$0xff]
      %v826 = vld [vmem:[%s819 + $0x60] sm:$0xff]
      %v827 = vld [vmem:[%s819 + $0x70] sm:$0xff]
      %s828 = scalar_lea.vmem %s258, 512
      %v829 = vld [vmem:[%s828] sm:$0xff]
      %v830 = vld [vmem:[%s828 + $0x8] sm:$0xff]
      %v831 = vld [vmem:[%s828 + $0x10] sm:$0xff]
      %v832 = vld [vmem:[%s828 + $0x18] sm:$0xff]
      %v833 = vld [vmem:[%s828 + $0x20] sm:$0xff]
      %v834 = vld [vmem:[%s828 + $0x28] sm:$0xff]
      %v835 = vld [vmem:[%s828 + $0x30] sm:$0xff]
      %v836 = vld [vmem:[%s828 + $0x38] sm:$0xff]
      %v837 = vld [vmem:[%s828 + $0x40] sm:$0xff]
      %v838 = vld [vmem:[%s828 + $0x48] sm:$0xff]
      %v839 = vld [vmem:[%s828 + $0x50] sm:$0xff]
      %v840 = vld [vmem:[%s828 + $0x58] sm:$0xff]
      %v841 = vld [vmem:[%s828 + $0x60] sm:$0xff]
      %v842 = vld [vmem:[%s828 + $0x68] sm:$0xff]
      %v843 = vld [vmem:[%s828 + $0x70] sm:$0xff]
      %v844 = vld [vmem:[%s828 + $0x78] sm:$0xff]
      %845 = vmatprep.subr.mxu0 0.0
      %846 = vmatpush1.msra.mxu0 %v829
      %847 = vmatprep.subr.mxu0 0.0
      %848 = vmatpush1.msra.mxu0 %v830
      %849 = vmatprep.subr.mxu0 0.0
      %850 = vmatpush1.msra.mxu0 %v831
      %851 = vmatprep.subr.mxu0 0.0
      %852 = vmatpush1.msra.mxu0 %v832
      %853 = vmatprep.subr.mxu0 0.0
      %854 = vmatpush1.msra.mxu0 %v833
      %855 = vmatprep.subr.mxu0 0.0
      %856 = vmatpush1.msra.mxu0 %v834
      %857 = vmatprep.subr.mxu0 0.0
      %858 = vmatpush1.msra.mxu0 %v835
      %859 = vmatprep.subr.mxu0 0.0
      %860 = vmatpush1.msra.mxu0 %v836
      %861 = vmatprep.subr.mxu0 0.0
      %862 = vmatpush1.msra.mxu0 %v837
      %863 = vmatprep.subr.mxu0 0.0
      %864 = vmatpush1.msra.mxu0 %v838
      %865 = vmatprep.subr.mxu0 0.0
      %866 = vmatpush1.msra.mxu0 %v839
      %867 = vmatprep.subr.mxu0 0.0
      %868 = vmatpush1.msra.mxu0 %v840
      %869 = vmatprep.subr.mxu0 0.0
      %870 = vmatpush1.msra.mxu0 %v841
      %871 = vmatprep.subr.mxu0 0.0
      %872 = vmatpush1.msra.mxu0 %v842
      %873 = vmatprep.subr.mxu0 0.0
      %874 = vmatpush1.msra.mxu0 %v843
      %875 = vmatprep.subr.mxu0 0.0
      %876 = vmatpush1.msra.mxu0 %v844
      %877 = vmatprep.subr.mxu0 0.0
      %878 = vmatpush1.msra.mxu0 0.0
      %879 = vmatprep.subr.mxu0 0.0
      %880 = vmatpush1.msra.mxu0 0.0
      %881 = vmatprep.subr.mxu0 0.0
      %882 = vmatpush1.msra.mxu0 0.0
      %883 = vmatprep.subr.mxu0 0.0
      %884 = vmatpush1.msra.mxu0 0.0
      %885 = vmatprep.subr.mxu0 0.0
      %886 = vmatpush1.msra.mxu0 0.0
      %887 = vmatprep.subr.mxu0 0.0
      %888 = vmatpush1.msra.mxu0 0.0
      %889 = vmatprep.subr.mxu0 0.0
      %890 = vmatpush1.msra.mxu0 0.0
      %891 = vmatprep.subr.mxu0 0.0
      %892 = vmatpush1.msra.mxu0 0.0
      %893 = vmatprep.subr.mxu0 0.0
      %894 = vmatpush1.msra.mxu0 0.0
      %895 = vmatprep.subr.mxu0 0.0
      %896 = vmatpush1.msra.mxu0 0.0
      %897 = vmatprep.subr.mxu0 0.0
      %898 = vmatpush1.msra.mxu0 0.0
      %899 = vmatprep.subr.mxu0 0.0
      %900 = vmatpush1.msra.mxu0 0.0
      %901 = vmatprep.subr.mxu0 0.0
      %902 = vmatpush1.msra.mxu0 0.0
      %903 = vmatprep.subr.mxu0 0.0
      %904 = vmatpush1.msra.mxu0 0.0
      %905 = vmatprep.subr.mxu0 0.0
      %906 = vmatpush1.msra.mxu0 0.0
      %907 = vmatprep.subr.mxu0 0.0
      %908 = vmatpush1.msra.mxu0 0.0
      %909 = vmatprep.mubr.f32.mxu0 0.0
      %910 = vmatmul.mubr.f32.gmra.mrb[0].mxu0 %v820
      %v911 = vpop.f32.mrb[0].mxu0
      %v912 = vadd.f32 0.0, %v911
      %v913 = vpop.f32.mrb[0].mxu0
      %914 = vmatprep.mubr.f32.mxu0 0.0
      %915 = vmatmul.mubr.f32.gmra.mrb[0].mxu0 %v821
      %v916 = vpop.f32.mrb[0].mxu0
      %v917 = vadd.f32 0.0, %v916
      %v918 = vpop.f32.mrb[0].mxu0
      %919 = vmatprep.mubr.f32.mxu0 0.0
      %920 = vmatmul.mubr.f32.gmra.mrb[0].mxu0 %v822
      %v921 = vpop.f32.mrb[0].mxu0
      %v922 = vadd.f32 0.0, %v921
      %v923 = vpop.f32.mrb[0].mxu0
      %924 = vmatprep.mubr.f32.mxu0 0.0
      %925 = vmatmul.mubr.f32.gmra.mrb[0].mxu0 %v823
      %v926 = vpop.f32.mrb[0].mxu0
      %v927 = vadd.f32 0.0, %v926
      %v928 = vpop.f32.mrb[0].mxu0
      %929 = vmatprep.mubr.f32.mxu0 0.0
      %930 = vmatmul.mubr.f32.gmra.mrb[0].mxu0 %v824
      %v931 = vpop.f32.mrb[0].mxu0
      %v932 = vadd.f32 0.0, %v931
      %v933 = vpop.f32.mrb[0].mxu0
      %934 = vmatprep.mubr.f32.mxu0 0.0
      %935 = vmatmul.mubr.f32.gmra.mrb[0].mxu0 %v825
      %v936 = vpop.f32.mrb[0].mxu0
      %v937 = vadd.f32 0.0, %v936
      %v938 = vpop.f32.mrb[0].mxu0
      %939 = vmatprep.mubr.f32.mxu0 0.0
      %940 = vmatmul.mubr.f32.gmra.mrb[0].mxu0 %v826
      %v941 = vpop.f32.mrb[0].mxu0
      %v942 = vadd.f32 0.0, %v941
      %v943 = vpop.f32.mrb[0].mxu0
      %944 = vmatprep.mubr.f32.mxu0 0.0
      %945 = vmatmul.mubr.f32.gmra.mrb[0].mxu0 %v827
      %v946 = vpop.f32.mrb[0].mxu0
      %v947 = vadd.f32 0.0, %v946
      %v948 = vpop.f32.mrb[0].mxu0
      %949 = vdwg.mxu0
      %v950 = vadd.f32 %v810, %v912
      %v951 = vadd.f32 %v811, %v917
      %v952 = vadd.f32 %v812, %v922
      %v953 = vadd.f32 %v813, %v927
      %v954 = vadd.f32 %v814, %v932
      %v955 = vadd.f32 %v815, %v937
      %v956 = vadd.f32 %v816, %v942
      %v957 = vadd.f32 %v817, %v947
      %v958 = vld [vmem:[%s679 + $0x1] sm:$0xff]
      %v959 = vld [vmem:[%s679 + $0x11] sm:$0xff]
      %v960 = vld [vmem:[%s679 + $0x21] sm:$0xff]
      %v961 = vld [vmem:[%s679 + $0x31] sm:$0xff]
      %v962 = vld [vmem:[%s679 + $0x41] sm:$0xff]
      %v963 = vld [vmem:[%s679 + $0x51] sm:$0xff]
      %v964 = vld [vmem:[%s679 + $0x61] sm:$0xff]
      %v965 = vld [vmem:[%s679 + $0x71] sm:$0xff]
      %s966 = scalar_lea.vmem %s258, 640
      %v967 = vld [vmem:[%s966] sm:$0xff]
      %v968 = vld [vmem:[%s966 + $0x8] sm:$0xff]
      %v969 = vld [vmem:[%s966 + $0x10] sm:$0xff]
      %v970 = vld [vmem:[%s966 + $0x18] sm:$0xff]
      %v971 = vld [vmem:[%s966 + $0x20] sm:$0xff]
      %v972 = vld [vmem:[%s966 + $0x28] sm:$0xff]
      %v973 = vld [vmem:[%s966 + $0x30] sm:$0xff]
      %v974 = vld [vmem:[%s966 + $0x38] sm:$0xff]
      %v975 = vld [vmem:[%s966 + $0x40] sm:$0xff]
      %v976 = vld [vmem:[%s966 + $0x48] sm:$0xff]
      %v977 = vld [vmem:[%s966 + $0x50] sm:$0xff]
      %v978 = vld [vmem:[%s966 + $0x58] sm:$0xff]
      %v979 = vld [vmem:[%s966 + $0x60] sm:$0xff]
      %v980 = vld [vmem:[%s966 + $0x68] sm:$0xff]
      %v981 = vld [vmem:[%s966 + $0x70] sm:$0xff]
      %v982 = vld [vmem:[%s966 + $0x78] sm:$0xff]
      %983 = vmatprep.subr.mxu0 0.0
      %984 = vmatpush1.msra.mxu0 %v967
      %985 = vmatprep.subr.mxu0 0.0
      %986 = vmatpush1.msra.mxu0 %v968
      %987 = vmatprep.subr.mxu0 0.0
      %988 = vmatpush1.msra.mxu0 %v969
      %989 = vmatprep.subr.mxu0 0.0
      %990 = vmatpush1.msra.mxu0 %v970
      %991 = vmatprep.subr.mxu0 0.0
      %992 = vmatpush1.msra.mxu0 %v971
      %993 = vmatprep.subr.mxu0 0.0
      %994 = vmatpush1.msra.mxu0 %v972
      %995 = vmatprep.subr.mxu0 0.0
      %996 = vmatpush1.msra.mxu0 %v973
      %997 = vmatprep.subr.mxu0 0.0
      %998 = vmatpush1.msra.mxu0 %v974
      %999 = vmatprep.subr.mxu0 0.0
      %1000 = vmatpush1.msra.mxu0 %v975
      %1001 = vmatprep.subr.mxu0 0.0
      %1002 = vmatpush1.msra.mxu0 %v976
      %1003 = vmatprep.subr.mxu0 0.0
      %1004 = vmatpush1.msra.mxu0 %v977
      %1005 = vmatprep.subr.mxu0 0.0
      %1006 = vmatpush1.msra.mxu0 %v978
      %1007 = vmatprep.subr.mxu0 0.0
      %1008 = vmatpush1.msra.mxu0 %v979
      %1009 = vmatprep.subr.mxu0 0.0
      %1010 = vmatpush1.msra.mxu0 %v980
      %1011 = vmatprep.subr.mxu0 0.0
      %1012 = vmatpush1.msra.mxu0 %v981
      %1013 = vmatprep.subr.mxu0 0.0
      %1014 = vmatpush1.msra.mxu0 %v982
      %1015 = vmatprep.subr.mxu0 0.0
      %1016 = vmatpush1.msra.mxu0 0.0
      %1017 = vmatprep.subr.mxu0 0.0
      %1018 = vmatpush1.msra.mxu0 0.0
      %1019 = vmatprep.subr.mxu0 0.0
      %1020 = vmatpush1.msra.mxu0 0.0
      %1021 = vmatprep.subr.mxu0 0.0
      %1022 = vmatpush1.msra.mxu0 0.0
      %1023 = vmatprep.subr.mxu0 0.0
      %1024 = vmatpush1.msra.mxu0 0.0
      %1025 = vmatprep.subr.mxu0 0.0
      %1026 = vmatpush1.msra.mxu0 0.0
      %1027 = vmatprep.subr.mxu0 0.0
      %1028 = vmatpush1.msra.mxu0 0.0
      %1029 = vmatprep.subr.mxu0 0.0
      %1030 = vmatpush1.msra.mxu0 0.0
      %1031 = vmatprep.subr.mxu0 0.0
      %1032 = vmatpush1.msra.mxu0 0.0
      %1033 = vmatprep.subr.mxu0 0.0
      %1034 = vmatpush1.msra.mxu0 0.0
      %1035 = vmatprep.subr.mxu0 0.0
      %1036 = vmatpush1.msra.mxu0 0.0
      %1037 = vmatprep.subr.mxu0 0.0
      %1038 = vmatpush1.msra.mxu0 0.0
      %1039 = vmatprep.subr.mxu0 0.0
      %1040 = vmatpush1.msra.mxu0 0.0
      %1041 = vmatprep.subr.mxu0 0.0
      %1042 = vmatpush1.msra.mxu0 0.0
      %1043 = vmatprep.subr.mxu0 0.0
      %1044 = vmatpush1.msra.mxu0 0.0
      %1045 = vmatprep.subr.mxu0 0.0
      %1046 = vmatpush1.msra.mxu0 0.0
      %1047 = vmatprep.mubr.f32.mxu0 0.0
      %1048 = vmatmul.mubr.f32.gmra.mrb[0].mxu0 %v958
      %v1049 = vpop.f32.mrb[0].mxu0
      %v1050 = vadd.f32 0.0, %v1049
      %v1051 = vpop.f32.mrb[0].mxu0
      %1052 = vmatprep.mubr.f32.mxu0 0.0
      %1053 = vmatmul.mubr.f32.gmra.mrb[0].mxu0 %v959
      %v1054 = vpop.f32.mrb[0].mxu0
      %v1055 = vadd.f32 0.0, %v1054
      %v1056 = vpop.f32.mrb[0].mxu0
      %1057 = vmatprep.mubr.f32.mxu0 0.0
      %1058 = vmatmul.mubr.f32.gmra.mrb[0].mxu0 %v960
      %v1059 = vpop.f32.mrb[0].mxu0
      %v1060 = vadd.f32 0.0, %v1059
      %v1061 = vpop.f32.mrb[0].mxu0
      %1062 = vmatprep.mubr.f32.mxu0 0.0
      %1063 = vmatmul.mubr.f32.gmra.mrb[0].mxu0 %v961
      %v1064 = vpop.f32.mrb[0].mxu0
      %v1065 = vadd.f32 0.0, %v1064
      %v1066 = vpop.f32.mrb[0].mxu0
      %1067 = vmatprep.mubr.f32.mxu0 0.0
      %1068 = vmatmul.mubr.f32.gmra.mrb[0].mxu0 %v962
      %v1069 = vpop.f32.mrb[0].mxu0
      %v1070 = vadd.f32 0.0, %v1069
      %v1071 = vpop.f32.mrb[0].mxu0
      %1072 = vmatprep.mubr.f32.mxu0 0.0
      %1073 = vmatmul.mubr.f32.gmra.mrb[0].mxu0 %v963
      %v1074 = vpop.f32.mrb[0].mxu0
      %v1075 = vadd.f32 0.0, %v1074
      %v1076 = vpop.f32.mrb[0].mxu0
      %1077 = vmatprep.mubr.f32.mxu0 0.0
      %1078 = vmatmul.mubr.f32.gmra.mrb[0].mxu0 %v964
      %v1079 = vpop.f32.mrb[0].mxu0
      %v1080 = vadd.f32 0.0, %v1079
      %v1081 = vpop.f32.mrb[0].mxu0
      %1082 = vmatprep.mubr.f32.mxu0 0.0
      %1083 = vmatmul.mubr.f32.gmra.mrb[0].mxu0 %v965
      %v1084 = vpop.f32.mrb[0].mxu0
      %v1085 = vadd.f32 0.0, %v1084
      %v1086 = vpop.f32.mrb[0].mxu0
      %1087 = vdwg.mxu0
      %v1088 = vadd.f32 %v950, %v1050
      %v1089 = vadd.f32 %v951, %v1055
      %v1090 = vadd.f32 %v952, %v1060
      %v1091 = vadd.f32 %v953, %v1065
      %v1092 = vadd.f32 %v954, %v1070
      %v1093 = vadd.f32 %v955, %v1075
      %v1094 = vadd.f32 %v956, %v1080
      %v1095 = vadd.f32 %v957, %v1085
      %s1096 = sadd.s32 %s276, 1
      %s1097 = smul.u32 %s1096, 16
      %s1098 = scalar_lea.vmem %s254, %s1097
      %v1099 = vld [vmem:[%s1098] sm:$0xff]
      %v1100 = vld [vmem:[%s1098 + $0x10] sm:$0xff]
      %v1101 = vld [vmem:[%s1098 + $0x20] sm:$0xff]
      %v1102 = vld [vmem:[%s1098 + $0x30] sm:$0xff]
      %v1103 = vld [vmem:[%s1098 + $0x40] sm:$0xff]
      %v1104 = vld [vmem:[%s1098 + $0x50] sm:$0xff]
      %v1105 = vld [vmem:[%s1098 + $0x60] sm:$0xff]
      %v1106 = vld [vmem:[%s1098 + $0x70] sm:$0xff]
      %s1107 = scalar_lea.vmem %s258, 768
      %v1108 = vld [vmem:[%s1107] sm:$0xff]
      %v1109 = vld [vmem:[%s1107 + $0x8] sm:$0xff]
      %v1110 = vld [vmem:[%s1107 + $0x10] sm:$0xff]
      %v1111 = vld [vmem:[%s1107 + $0x18] sm:$0xff]
      %v1112 = vld [vmem:[%s1107 + $0x20] sm:$0xff]
      %v1113 = vld [vmem:[%s1107 + $0x28] sm:$0xff]
      %v1114 = vld [vmem:[%s1107 + $0x30] sm:$0xff]
      %v1115 = vld [vmem:[%s1107 + $0x38] sm:$0xff]
      %v1116 = vld [vmem:[%s1107 + $0x40] sm:$0xff]
      %v1117 = vld [vmem:[%s1107 + $0x48] sm:$0xff]
      %v1118 = vld [vmem:[%s1107 + $0x50] sm:$0xff]
      %v1119 = vld [vmem:[%s1107 + $0x58] sm:$0xff]
      %v1120 = vld [vmem:[%s1107 + $0x60] sm:$0xff]
      %v1121 = vld [vmem:[%s1107 + $0x68] sm:$0xff]
      %v1122 = vld [vmem:[%s1107 + $0x70] sm:$0xff]
      %v1123 = vld [vmem:[%s1107 + $0x78] sm:$0xff]
      %1124 = vmatprep.subr.mxu0 0.0
      %1125 = vmatpush1.msra.mxu0 %v1108
      %1126 = vmatprep.subr.mxu0 0.0
      %1127 = vmatpush1.msra.mxu0 %v1109
      %1128 = vmatprep.subr.mxu0 0.0
      %1129 = vmatpush1.msra.mxu0 %v1110
      %1130 = vmatprep.subr.mxu0 0.0
      %1131 = vmatpush1.msra.mxu0 %v1111
      %1132 = vmatprep.subr.mxu0 0.0
      %1133 = vmatpush1.msra.mxu0 %v1112
      %1134 = vmatprep.subr.mxu0 0.0
      %1135 = vmatpush1.msra.mxu0 %v1113
      %1136 = vmatprep.subr.mxu0 0.0
      %1137 = vmatpush1.msra.mxu0 %v1114
      %1138 = vmatprep.subr.mxu0 0.0
      %1139 = vmatpush1.msra.mxu0 %v1115
      %1140 = vmatprep.subr.mxu0 0.0
      %1141 = vmatpush1.msra.mxu0 %v1116
      %1142 = vmatprep.subr.mxu0 0.0
      %1143 = vmatpush1.msra.mxu0 %v1117
      %1144 = vmatprep.subr.mxu0 0.0
      %1145 = vmatpush1.msra.mxu0 %v1118
      %1146 = vmatprep.subr.mxu0 0.0
      %1147 = vmatpush1.msra.mxu0 %v1119
      %1148 = vmatprep.subr.mxu0 0.0
      %1149 = vmatpush1.msra.mxu0 %v1120
      %1150 = vmatprep.subr.mxu0 0.0
      %1151 = vmatpush1.msra.mxu0 %v1121
      %1152 = vmatprep.subr.mxu0 0.0
      %1153 = vmatpush1.msra.mxu0 %v1122
      %1154 = vmatprep.subr.mxu0 0.0
      %1155 = vmatpush1.msra.mxu0 %v1123
      %1156 = vmatprep.subr.mxu0 0.0
      %1157 = vmatpush1.msra.mxu0 0.0
      %1158 = vmatprep.subr.mxu0 0.0
      %1159 = vmatpush1.msra.mxu0 0.0
      %1160 = vmatprep.subr.mxu0 0.0
      %1161 = vmatpush1.msra.mxu0 0.0
      %1162 = vmatprep.subr.mxu0 0.0
      %1163 = vmatpush1.msra.mxu0 0.0
      %1164 = vmatprep.subr.mxu0 0.0
      %1165 = vmatpush1.msra.mxu0 0.0
      %1166 = vmatprep.subr.mxu0 0.0
      %1167 = vmatpush1.msra.mxu0 0.0
      %1168 = vmatprep.subr.mxu0 0.0
      %1169 = vmatpush1.msra.mxu0 0.0
      %1170 = vmatprep.subr.mxu0 0.0
      %1171 = vmatpush1.msra.mxu0 0.0
      %1172 = vmatprep.subr.mxu0 0.0
      %1173 = vmatpush1.msra.mxu0 0.0
      %1174 = vmatprep.subr.mxu0 0.0
      %1175 = vmatpush1.msra.mxu0 0.0
      %1176 = vmatprep.subr.mxu0 0.0
      %1177 = vmatpush1.msra.mxu0 0.0
      %1178 = vmatprep.subr.mxu0 0.0
      %1179 = vmatpush1.msra.mxu0 0.0
      %1180 = vmatprep.subr.mxu0 0.0
      %1181 = vmatpush1.msra.mxu0 0.0
      %1182 = vmatprep.subr.mxu0 0.0
      %1183 = vmatpush1.msra.mxu0 0.0
      %1184 = vmatprep.subr.mxu0 0.0
      %1185 = vmatpush1.msra.mxu0 0.0
      %1186 = vmatprep.subr.mxu0 0.0
      %1187 = vmatpush1.msra.mxu0 0.0
      %1188 = vmatprep.mubr.f32.mxu0 0.0
      %1189 = vmatmul.mubr.f32.gmra.mrb[0].mxu0 %v1099
      %v1190 = vpop.f32.mrb[0].mxu0
      %v1191 = vadd.f32 0.0, %v1190
      %v1192 = vpop.f32.mrb[0].mxu0
      %1193 = vmatprep.mubr.f32.mxu0 0.0
      %1194 = vmatmul.mubr.f32.gmra.mrb[0].mxu0 %v1100
      %v1195 = vpop.f32.mrb[0].mxu0
      %v1196 = vadd.f32 0.0, %v1195
      %v1197 = vpop.f32.mrb[0].mxu0
      %1198 = vmatprep.mubr.f32.mxu0 0.0
      %1199 = vmatmul.mubr.f32.gmra.mrb[0].mxu0 %v1101
      %v1200 = vpop.f32.mrb[0].mxu0
      %v1201 = vadd.f32 0.0, %v1200
      %v1202 = vpop.f32.mrb[0].mxu0
      %1203 = vmatprep.mubr.f32.mxu0 0.0
      %1204 = vmatmul.mubr.f32.gmra.mrb[0].mxu0 %v1102
      %v1205 = vpop.f32.mrb[0].mxu0
      %v1206 = vadd.f32 0.0, %v1205
      %v1207 = vpop.f32.mrb[0].mxu0
      %1208 = vmatprep.mubr.f32.mxu0 0.0
      %1209 = vmatmul.mubr.f32.gmra.mrb[0].mxu0 %v1103
      %v1210 = vpop.f32.mrb[0].mxu0
      %v1211 = vadd.f32 0.0, %v1210
      %v1212 = vpop.f32.mrb[0].mxu0
      %1213 = vmatprep.mubr.f32.mxu0 0.0
      %1214 = vmatmul.mubr.f32.gmra.mrb[0].mxu0 %v1104
      %v1215 = vpop.f32.mrb[0].mxu0
      %v1216 = vadd.f32 0.0, %v1215
      %v1217 = vpop.f32.mrb[0].mxu0
      %1218 = vmatprep.mubr.f32.mxu0 0.0
      %1219 = vmatmul.mubr.f32.gmra.mrb[0].mxu0 %v1105
      %v1220 = vpop.f32.mrb[0].mxu0
      %v1221 = vadd.f32 0.0, %v1220
      %v1222 = vpop.f32.mrb[0].mxu0
      %1223 = vmatprep.mubr.f32.mxu0 0.0
      %1224 = vmatmul.mubr.f32.gmra.mrb[0].mxu0 %v1106
      %v1225 = vpop.f32.mrb[0].mxu0
      %v1226 = vadd.f32 0.0, %v1225
      %v1227 = vpop.f32.mrb[0].mxu0
      %1228 = vdwg.mxu0
      %v1229 = vadd.f32 %v1088, %v1191
      %v1230 = vadd.f32 %v1089, %v1196
      %v1231 = vadd.f32 %v1090, %v1201
      %v1232 = vadd.f32 %v1091, %v1206
      %v1233 = vadd.f32 %v1092, %v1211
      %v1234 = vadd.f32 %v1093, %v1216
      %v1235 = vadd.f32 %v1094, %v1221
      %v1236 = vadd.f32 %v1095, %v1226
      %s1237 = sadd.s32 %s1097, 160
      %s1238 = scalar_lea.vmem %s254, %s1237
      %v1239 = vld [vmem:[%s1238] sm:$0xff]
      %v1240 = vld [vmem:[%s1238 + $0x10] sm:$0xff]
      %v1241 = vld [vmem:[%s1238 + $0x20] sm:$0xff]
      %v1242 = vld [vmem:[%s1238 + $0x30] sm:$0xff]
      %v1243 = vld [vmem:[%s1238 + $0x40] sm:$0xff]
      %v1244 = vld [vmem:[%s1238 + $0x50] sm:$0xff]
      %v1245 = vld [vmem:[%s1238 + $0x60] sm:$0xff]
      %v1246 = vld [vmem:[%s1238 + $0x70] sm:$0xff]
      %s1247 = scalar_lea.vmem %s258, 896
      %v1248 = vld [vmem:[%s1247] sm:$0xff]
      %v1249 = vld [vmem:[%s1247 + $0x8] sm:$0xff]
      %v1250 = vld [vmem:[%s1247 + $0x10] sm:$0xff]
      %v1251 = vld [vmem:[%s1247 + $0x18] sm:$0xff]
      %v1252 = vld [vmem:[%s1247 + $0x20] sm:$0xff]
      %v1253 = vld [vmem:[%s1247 + $0x28] sm:$0xff]
      %v1254 = vld [vmem:[%s1247 + $0x30] sm:$0xff]
      %v1255 = vld [vmem:[%s1247 + $0x38] sm:$0xff]
      %v1256 = vld [vmem:[%s1247 + $0x40] sm:$0xff]
      %v1257 = vld [vmem:[%s1247 + $0x48] sm:$0xff]
      %v1258 = vld [vmem:[%s1247 + $0x50] sm:$0xff]
      %v1259 = vld [vmem:[%s1247 + $0x58] sm:$0xff]
      %v1260 = vld [vmem:[%s1247 + $0x60] sm:$0xff]
      %v1261 = vld [vmem:[%s1247 + $0x68] sm:$0xff]
      %v1262 = vld [vmem:[%s1247 + $0x70] sm:$0xff]
      %v1263 = vld [vmem:[%s1247 + $0x78] sm:$0xff]
      %1264 = vmatprep.subr.mxu0 0.0
      %1265 = vmatpush1.msra.mxu0 %v1248
      %1266 = vmatprep.subr.mxu0 0.0
      %1267 = vmatpush1.msra.mxu0 %v1249
      %1268 = vmatprep.subr.mxu0 0.0
      %1269 = vmatpush1.msra.mxu0 %v1250
      %1270 = vmatprep.subr.mxu0 0.0
      %1271 = vmatpush1.msra.mxu0 %v1251
      %1272 = vmatprep.subr.mxu0 0.0
      %1273 = vmatpush1.msra.mxu0 %v1252
      %1274 = vmatprep.subr.mxu0 0.0
      %1275 = vmatpush1.msra.mxu0 %v1253
      %1276 = vmatprep.subr.mxu0 0.0
      %1277 = vmatpush1.msra.mxu0 %v1254
      %1278 = vmatprep.subr.mxu0 0.0
      %1279 = vmatpush1.msra.mxu0 %v1255
      %1280 = vmatprep.subr.mxu0 0.0
      %1281 = vmatpush1.msra.mxu0 %v1256
      %1282 = vmatprep.subr.mxu0 0.0
      %1283 = vmatpush1.msra.mxu0 %v1257
      %1284 = vmatprep.subr.mxu0 0.0
      %1285 = vmatpush1.msra.mxu0 %v1258
      %1286 = vmatprep.subr.mxu0 0.0
      %1287 = vmatpush1.msra.mxu0 %v1259
      %1288 = vmatprep.subr.mxu0 0.0
      %1289 = vmatpush1.msra.mxu0 %v1260
      %1290 = vmatprep.subr.mxu0 0.0
      %1291 = vmatpush1.msra.mxu0 %v1261
      %1292 = vmatprep.subr.mxu0 0.0
      %1293 = vmatpush1.msra.mxu0 %v1262
      %1294 = vmatprep.subr.mxu0 0.0
      %1295 = vmatpush1.msra.mxu0 %v1263
      %1296 = vmatprep.subr.mxu0 0.0
      %1297 = vmatpush1.msra.mxu0 0.0
      %1298 = vmatprep.subr.mxu0 0.0
      %1299 = vmatpush1.msra.mxu0 0.0
      %1300 = vmatprep.subr.mxu0 0.0
      %1301 = vmatpush1.msra.mxu0 0.0
      %1302 = vmatprep.subr.mxu0 0.0
      %1303 = vmatpush1.msra.mxu0 0.0
      %1304 = vmatprep.subr.mxu0 0.0
      %1305 = vmatpush1.msra.mxu0 0.0
      %1306 = vmatprep.subr.mxu0 0.0
      %1307 = vmatpush1.msra.mxu0 0.0
      %1308 = vmatprep.subr.mxu0 0.0
      %1309 = vmatpush1.msra.mxu0 0.0
      %1310 = vmatprep.subr.mxu0 0.0
      %1311 = vmatpush1.msra.mxu0 0.0
      %1312 = vmatprep.subr.mxu0 0.0
      %1313 = vmatpush1.msra.mxu0 0.0
      %1314 = vmatprep.subr.mxu0 0.0
      %1315 = vmatpush1.msra.mxu0 0.0
      %1316 = vmatprep.subr.mxu0 0.0
      %1317 = vmatpush1.msra.mxu0 0.0
      %1318 = vmatprep.subr.mxu0 0.0
      %1319 = vmatpush1.msra.mxu0 0.0
      %1320 = vmatprep.subr.mxu0 0.0
      %1321 = vmatpush1.msra.mxu0 0.0
      %1322 = vmatprep.subr.mxu0 0.0
      %1323 = vmatpush1.msra.mxu0 0.0
      %1324 = vmatprep.subr.mxu0 0.0
      %1325 = vmatpush1.msra.mxu0 0.0
      %1326 = vmatprep.subr.mxu0 0.0
      %1327 = vmatpush1.msra.mxu0 0.0
      %1328 = vmatprep.mubr.f32.mxu0 0.0
      %1329 = vmatmul.mubr.f32.gmra.mrb[0].mxu0 %v1239
      %v1330 = vpop.f32.mrb[0].mxu0
      %v1331 = vadd.f32 0.0, %v1330
      %v1332 = vpop.f32.mrb[0].mxu0
      %1333 = vmatprep.mubr.f32.mxu0 0.0
      %1334 = vmatmul.mubr.f32.gmra.mrb[0].mxu0 %v1240
      %v1335 = vpop.f32.mrb[0].mxu0
      %v1336 = vadd.f32 0.0, %v1335
      %v1337 = vpop.f32.mrb[0].mxu0
      %1338 = vmatprep.mubr.f32.mxu0 0.0
      %1339 = vmatmul.mubr.f32.gmra.mrb[0].mxu0 %v1241
      %v1340 = vpop.f32.mrb[0].mxu0
      %v1341 = vadd.f32 0.0, %v1340
      %v1342 = vpop.f32.mrb[0].mxu0
      %1343 = vmatprep.mubr.f32.mxu0 0.0
      %1344 = vmatmul.mubr.f32.gmra.mrb[0].mxu0 %v1242
      %v1345 = vpop.f32.mrb[0].mxu0
      %v1346 = vadd.f32 0.0, %v1345
      %v1347 = vpop.f32.mrb[0].mxu0
      %1348 = vmatprep.mubr.f32.mxu0 0.0
      %1349 = vmatmul.mubr.f32.gmra.mrb[0].mxu0 %v1243
      %v1350 = vpop.f32.mrb[0].mxu0
      %v1351 = vadd.f32 0.0, %v1350
      %v1352 = vpop.f32.mrb[0].mxu0
      %1353 = vmatprep.mubr.f32.mxu0 0.0
      %1354 = vmatmul.mubr.f32.gmra.mrb[0].mxu0 %v1244
      %v1355 = vpop.f32.mrb[0].mxu0
      %v1356 = vadd.f32 0.0, %v1355
      %v1357 = vpop.f32.mrb[0].mxu0
      %1358 = vmatprep.mubr.f32.mxu0 0.0
      %1359 = vmatmul.mubr.f32.gmra.mrb[0].mxu0 %v1245
      %v1360 = vpop.f32.mrb[0].mxu0
      %v1361 = vadd.f32 0.0, %v1360
      %v1362 = vpop.f32.mrb[0].mxu0
      %1363 = vmatprep.mubr.f32.mxu0 0.0
      %1364 = vmatmul.mubr.f32.gmra.mrb[0].mxu0 %v1246
      %v1365 = vpop.f32.mrb[0].mxu0
      %v1366 = vadd.f32 0.0, %v1365
      %v1367 = vpop.f32.mrb[0].mxu0
      %1368 = vdwg.mxu0
      %v1369 = vadd.f32 %v1229, %v1331
      %v1370 = vadd.f32 %v1230, %v1336
      %v1371 = vadd.f32 %v1231, %v1341
      %v1372 = vadd.f32 %v1232, %v1346
      %v1373 = vadd.f32 %v1233, %v1351
      %v1374 = vadd.f32 %v1234, %v1356
      %v1375 = vadd.f32 %v1235, %v1361
      %v1376 = vadd.f32 %v1236, %v1366
      %v1377 = vld [vmem:[%s1098 + $0x1] sm:$0xff]
      %v1378 = vld [vmem:[%s1098 + $0x11] sm:$0xff]
      %v1379 = vld [vmem:[%s1098 + $0x21] sm:$0xff]
      %v1380 = vld [vmem:[%s1098 + $0x31] sm:$0xff]
      %v1381 = vld [vmem:[%s1098 + $0x41] sm:$0xff]
      %v1382 = vld [vmem:[%s1098 + $0x51] sm:$0xff]
      %v1383 = vld [vmem:[%s1098 + $0x61] sm:$0xff]
      %v1384 = vld [vmem:[%s1098 + $0x71] sm:$0xff]
      %s1385 = scalar_lea.vmem %s258, 1024
      %v1386 = vld [vmem:[%s1385] sm:$0xff]
      %v1387 = vld [vmem:[%s1385 + $0x8] sm:$0xff]
      %v1388 = vld [vmem:[%s1385 + $0x10] sm:$0xff]
      %v1389 = vld [vmem:[%s1385 + $0x18] sm:$0xff]
      %v1390 = vld [vmem:[%s1385 + $0x20] sm:$0xff]
      %v1391 = vld [vmem:[%s1385 + $0x28] sm:$0xff]
      %v1392 = vld [vmem:[%s1385 + $0x30] sm:$0xff]
      %v1393 = vld [vmem:[%s1385 + $0x38] sm:$0xff]
      %v1394 = vld [vmem:[%s1385 + $0x40] sm:$0xff]
      %v1395 = vld [vmem:[%s1385 + $0x48] sm:$0xff]
      %v1396 = vld [vmem:[%s1385 + $0x50] sm:$0xff]
      %v1397 = vld [vmem:[%s1385 + $0x58] sm:$0xff]
      %v1398 = vld [vmem:[%s1385 + $0x60] sm:$0xff]
      %v1399 = vld [vmem:[%s1385 + $0x68] sm:$0xff]
      %v1400 = vld [vmem:[%s1385 + $0x70] sm:$0xff]
      %v1401 = vld [vmem:[%s1385 + $0x78] sm:$0xff]
      %1402 = vmatprep.subr.mxu0 0.0
      %1403 = vmatpush1.msra.mxu0 %v1386
      %1404 = vmatprep.subr.mxu0 0.0
      %1405 = vmatpush1.msra.mxu0 %v1387
      %1406 = vmatprep.subr.mxu0 0.0
      %1407 = vmatpush1.msra.mxu0 %v1388
      %1408 = vmatprep.subr.mxu0 0.0
      %1409 = vmatpush1.msra.mxu0 %v1389
      %1410 = vmatprep.subr.mxu0 0.0
      %1411 = vmatpush1.msra.mxu0 %v1390
      %1412 = vmatprep.subr.mxu0 0.0
      %1413 = vmatpush1.msra.mxu0 %v1391
      %1414 = vmatprep.subr.mxu0 0.0
      %1415 = vmatpush1.msra.mxu0 %v1392
      %1416 = vmatprep.subr.mxu0 0.0
      %1417 = vmatpush1.msra.mxu0 %v1393
      %1418 = vmatprep.subr.mxu0 0.0
      %1419 = vmatpush1.msra.mxu0 %v1394
      %1420 = vmatprep.subr.mxu0 0.0
      %1421 = vmatpush1.msra.mxu0 %v1395
      %1422 = vmatprep.subr.mxu0 0.0
      %1423 = vmatpush1.msra.mxu0 %v1396
      %1424 = vmatprep.subr.mxu0 0.0
      %1425 = vmatpush1.msra.mxu0 %v1397
      %1426 = vmatprep.subr.mxu0 0.0
      %1427 = vmatpush1.msra.mxu0 %v1398
      %1428 = vmatprep.subr.mxu0 0.0
      %1429 = vmatpush1.msra.mxu0 %v1399
      %1430 = vmatprep.subr.mxu0 0.0
      %1431 = vmatpush1.msra.mxu0 %v1400
      %1432 = vmatprep.subr.mxu0 0.0
      %1433 = vmatpush1.msra.mxu0 %v1401
      %1434 = vmatprep.subr.mxu0 0.0
      %1435 = vmatpush1.msra.mxu0 0.0
      %1436 = vmatprep.subr.mxu0 0.0
      %1437 = vmatpush1.msra.mxu0 0.0
      %1438 = vmatprep.subr.mxu0 0.0
      %1439 = vmatpush1.msra.mxu0 0.0
      %1440 = vmatprep.subr.mxu0 0.0
      %1441 = vmatpush1.msra.mxu0 0.0
      %1442 = vmatprep.subr.mxu0 0.0
      %1443 = vmatpush1.msra.mxu0 0.0
      %1444 = vmatprep.subr.mxu0 0.0
      %1445 = vmatpush1.msra.mxu0 0.0
      %1446 = vmatprep.subr.mxu0 0.0
      %1447 = vmatpush1.msra.mxu0 0.0
      %1448 = vmatprep.subr.mxu0 0.0
      %1449 = vmatpush1.msra.mxu0 0.0
      %1450 = vmatprep.subr.mxu0 0.0
      %1451 = vmatpush1.msra.mxu0 0.0
      %1452 = vmatprep.subr.mxu0 0.0
      %1453 = vmatpush1.msra.mxu0 0.0
      %1454 = vmatprep.subr.mxu0 0.0
      %1455 = vmatpush1.msra.mxu0 0.0
      %1456 = vmatprep.subr.mxu0 0.0
      %1457 = vmatpush1.msra.mxu0 0.0
      %1458 = vmatprep.subr.mxu0 0.0
      %1459 = vmatpush1.msra.mxu0 0.0
      %1460 = vmatprep.subr.mxu0 0.0
      %1461 = vmatpush1.msra.mxu0 0.0
      %1462 = vmatprep.subr.mxu0 0.0
      %1463 = vmatpush1.msra.mxu0 0.0
      %1464 = vmatprep.subr.mxu0 0.0
      %1465 = vmatpush1.msra.mxu0 0.0
      %1466 = vmatprep.mubr.f32.mxu0 0.0
      %1467 = vmatmul.mubr.f32.gmra.mrb[0].mxu0 %v1377
      %v1468 = vpop.f32.mrb[0].mxu0
      %v1469 = vadd.f32 0.0, %v1468
      %v1470 = vpop.f32.mrb[0].mxu0
      %1471 = vmatprep.mubr.f32.mxu0 0.0
      %1472 = vmatmul.mubr.f32.gmra.mrb[0].mxu0 %v1378
      %v1473 = vpop.f32.mrb[0].mxu0
      %v1474 = vadd.f32 0.0, %v1473
      %v1475 = vpop.f32.mrb[0].mxu0
      %1476 = vmatprep.mubr.f32.mxu0 0.0
      %1477 = vmatmul.mubr.f32.gmra.mrb[0].mxu0 %v1379
      %v1478 = vpop.f32.mrb[0].mxu0
      %v1479 = vadd.f32 0.0, %v1478
      %v1480 = vpop.f32.mrb[0].mxu0
      %1481 = vmatprep.mubr.f32.mxu0 0.0
      %1482 = vmatmul.mubr.f32.gmra.mrb[0].mxu0 %v1380
      %v1483 = vpop.f32.mrb[0].mxu0
      %v1484 = vadd.f32 0.0, %v1483
      %v1485 = vpop.f32.mrb[0].mxu0
      %1486 = vmatprep.mubr.f32.mxu0 0.0
      %1487 = vmatmul.mubr.f32.gmra.mrb[0].mxu0 %v1381
      %v1488 = vpop.f32.mrb[0].mxu0
      %v1489 = vadd.f32 0.0, %v1488
      %v1490 = vpop.f32.mrb[0].mxu0
      %1491 = vmatprep.mubr.f32.mxu0 0.0
      %1492 = vmatmul.mubr.f32.gmra.mrb[0].mxu0 %v1382
      %v1493 = vpop.f32.mrb[0].mxu0
      %v1494 = vadd.f32 0.0, %v1493
      %v1495 = vpop.f32.mrb[0].mxu0
      %1496 = vmatprep.mubr.f32.mxu0 0.0
      %1497 = vmatmul.mubr.f32.gmra.mrb[0].mxu0 %v1383
      %v1498 = vpop.f32.mrb[0].mxu0
      %v1499 = vadd.f32 0.0, %v1498
      %v1500 = vpop.f32.mrb[0].mxu0
      %1501 = vmatprep.mubr.f32.mxu0 0.0
      %1502 = vmatmul.mubr.f32.gmra.mrb[0].mxu0 %v1384
      %v1503 = vpop.f32.mrb[0].mxu0
      %v1504 = vadd.f32 0.0, %v1503
      %v1505 = vpop.f32.mrb[0].mxu0
      %1506 = vdwg.mxu0
      %v1507 = vadd.f32 %v1369, %v1469
      %v1508 = vadd.f32 %v1370, %v1474
      %v1509 = vadd.f32 %v1371, %v1479
      %v1510 = vadd.f32 %v1372, %v1484
      %v1511 = vadd.f32 %v1373, %v1489
      %v1512 = vadd.f32 %v1374, %v1494
      %v1513 = vadd.f32 %v1375, %v1499
      %v1514 = vadd.f32 %v1376, %v1504
      %v1515 = vld [vmem:[%s261] sm:$0x1]
      %v1517 = vlaneseq
      %v1518 = vshrl.u32 %v1517, 7
      %v1519 = vsub.s32 0, %v1518
      %v1520 = vrot.slane %v1515, %v1519
      %v1522 = vmul.f32 %v1507, %v1520
      %v1523 = vmul.f32 %v1508, %v1520
      %v1524 = vmul.f32 %v1509, %v1520
      %v1525 = vmul.f32 %v1510, %v1520
      %v1526 = vmul.f32 %v1511, %v1520
      %v1527 = vmul.f32 %v1512, %v1520
      %v1528 = vmul.f32 %v1513, %v1520
      %v1529 = vmul.f32 %v1514, %v1520
      %v1530 = vld [vmem:[%s264] sm:$0x1]
      %v1532 = vlaneseq
      %v1533 = vshrl.u32 %v1532, 7
      %v1534 = vsub.s32 0, %v1533
      %v1535 = vrot.slane %v1530, %v1534
      %v1537 = vadd.f32 %v1522, %v1535
      %v1538 = vadd.f32 %v1523, %v1535
      %v1539 = vadd.f32 %v1524, %v1535
      %v1540 = vadd.f32 %v1525, %v1535
      %v1541 = vadd.f32 %v1526, %v1535
      %v1542 = vadd.f32 %v1527, %v1535
      %v1543 = vadd.f32 %v1528, %v1535
      %v1544 = vadd.f32 %v1529, %v1535
      %v1545 = vmax.f32 %v1537, 0.0
      %v1546 = vmax.f32 %v1538, 0.0
      %v1547 = vmax.f32 %v1539, 0.0
      %v1548 = vmax.f32 %v1540, 0.0
      %v1549 = vmax.f32 %v1541, 0.0
      %v1550 = vmax.f32 %v1542, 0.0
      %v1551 = vmax.f32 %v1543, 0.0
      %v1552 = vmax.f32 %v1544, 0.0
      %1553 = vst [vmem:[%s273] sm:$0xff] %v1545
      %1554 = vst [vmem:[%s273 + $0x8] sm:$0xff] %v1546
      %1555 = vst [vmem:[%s273 + $0x10] sm:$0xff] %v1547
      %1556 = vst [vmem:[%s273 + $0x18] sm:$0xff] %v1548
      %1557 = vst [vmem:[%s273 + $0x20] sm:$0xff] %v1549
      %1558 = vst [vmem:[%s273 + $0x28] sm:$0xff] %v1550
      %1559 = vst [vmem:[%s273 + $0x30] sm:$0xff] %v1551
      %1560 = vst [vmem:[%s273 + $0x38] sm:$0xff] %v1552
      %s1561 = sadd.s32 %s20, %s22
      %s1562 = smul.u32 8, %s1561
      %p1563 = scmp.lt.s32.totalorder %s1562, 15
      %s1564 = scalar_select %p1563, %s1562, 15
      %p1565 = scmp.lt.s32.totalorder %s21, 0
      %s1566 = scalar_select %p1565, %s21, 0
      %s1567 = sadd.s32 %s1566, %s1564
      %s1568 = smul.addr %s1567, 8
      %s1569 = scalar_lea.vmem %s4, %s1568
      // Predicated region
      $region37: #{_lambda_.6} parent=35 // pred_check
        %p1570 = pneg %p160
      $region38: #{_lambda_.6} parent=35 // pred_check_branch
        %1572 = sbr.rel (%p1570) target = $region40
      $region39: #{_lambda_.6} parent=35 // pred_region
        %s1573 = sadd.s32 %s20, %s22
        %s1574 = smul.u32 8, %s1573
      $region40: #{_lambda_.6} parent=35 // pred_fallthru
        _
    $region36: #{_lambda_.6} parent=5 // pred_fallthru
      _
    %p1575 = scmp.le.s32.totalorder 2, %s10
    // Predicated region
    $region41: #{_lambda_.6} parent=5 // pred_check
      %p1576 = pneg %p1575
    $region42: #{_lambda_.6} parent=5 // pred_check_branch
      %1578 = sbr.rel (%p1576) target = $region44
    $region43: #{_lambda_.6} parent=5 // pred_region
      %s1579 = ssub.s32 %s10, 2
      // Predicated region
      $region45: #{_lambda_.6} parent=43 // pred_check
        %p1580 = pneg %p166
      $region46: #{_lambda_.6} parent=43 // pred_check_branch
        %1582 = sbr.rel (%p1580) target = $region48
      $region47: #{_lambda_.6} parent=43 // pred_region
        %s1583 = sadd.s32 %s23, %s25
        %s1584 = smul.u32 8, %s1583
        %p1585 = scmp.lt.s32.totalorder %s1584, 15
        %s1586 = scalar_select %p1585, %s1584, 15
        %p1587 = scmp.lt.s32.totalorder %s24, 0
        %s1588 = scalar_select %p1587, %s24, 0
        %s1589 = sadd.s32 %s1588, %s1586
        %s1590 = smul.addr %s1589, 8
        %s1591 = scalar_lea.vmem %s4, %s1590
      $region48: #{_lambda_.6} parent=43 // pred_fallthru
        _
    $region44: #{_lambda_.6} parent=5 // pred_fallthru
      _
  $region6: #{_lambda_.6} parent=0 // loop_footer
    %s14 = sadd.s32 1, %s10
  $region7: #{_lambda_.6} parent=0 // loop_footer_branch
    %9 = sbr.rel target = $region3
  $region8: #{_lambda_.6} parent=0 // loop_exit
    _

// kernel: _lambda_.7
$region0: #{_lambda_.7}
  #allocation0 [shape = 'u32[]', space=smem, size = 0x4, offset = 0x4, fixed_abs, tag = 'smem constant byte address 0x4 - core index']
  #allocation1 [shape = 'u32[144,128]{1,0:T(1,128)}', space=vmem, size = 0x12000, scoped, tag = 'internal scratch']
  %s0 = inlined_call_operand.vmem [shape: f32[2,1,10,10,128], index: 0, kind: input, shape index: {}]
  %s1 = inlined_call_operand.vmem [shape: f32[9,128,128], index: 1, kind: input, shape index: {}]
  %s2 = inlined_call_operand.vmem [shape: f32[128,128], index: 2, kind: input, shape index: {}]
  %s3 = inlined_call_operand.vmem [shape: f32[128,128], index: 3, kind: output, shape index: {}]
  %s4 = sld [smem:[#allocation0]]
  $region45: #{_lambda_.7} parent=0
    _
  %s6 = ssub.s32 1, %s4
  %s7 = scalar_select 0, %s6, %s4
  loop: start=0, step=1, limit=4
  $region2: #{_lambda_.7} parent=0 // loop_pre_header
    _
  $region3: #{_lambda_.7} parent=0 // loop_header
    %s9 = sphi 0, %s13
    %p10 = scmp.ge.s32.totalorder %s9, 4
    %s16 = sphi 0, %s35
    %s17 = sphi 0, %s31
    %s18 = sphi 0, %s27
    %s19 = sphi 0, %s16
    %s20 = sphi 0, %s17
    %s21 = sphi 0, %s18
    %s22 = sphi 0, %s19
    %s23 = sphi 0, %s20
    %s24 = sphi 0, %s21
    %s38 = sphi 0, %s40
    %s41 = sphi 0, %s38
    %s42 = sphi 0, %s41
    %s58 = sphi 0, %s42
    %s64 = sphi 0, %s66
    %s67 = sphi 0, %s64
    %s68 = sphi 0, %s67
    %s84 = sphi 0, %s68
    %s94 = sphi 0, %s96
    %s97 = sphi 0, %s94
    %s98 = sphi 0, %s97
    %s114 = sphi 0, %s98
    %s124 = sphi 0, %s126
    %s127 = sphi 0, %s124
    %s128 = sphi 0, %s127
    %s144 = sphi 0, %s128
  $region4: #{_lambda_.7} parent=0 // loop_header_branch
    %12 = sbr.rel (%p10) target = $region8
  $region5: #{_lambda_.7} parent=0 // loop_body
    %s14 = ssub.s32 %s9, 1
    %s15 = ssub.s32 %s9, 2
    %s25 = sadd.s32 1, %s18
    %p26 = scmp.ge.s32.totalorder %s25, 1
    %s27 = scalar_select %p26, 0, %s25
    %s28 = sadd.s32 1, %s17
    %s29 = scalar_select %p26, %s28, %s17
    %p30 = scmp.ge.s32.totalorder %s29, 1
    %s31 = scalar_select %p30, 0, %s29
    %s32 = sadd.s32 1, %s16
    %s33 = scalar_select %p30, %s32, %s16
    %p34 = scmp.ge.s32.totalorder %s33, 2
    %s35 = scalar_select %p34, 0, %s33
    %s36 = ssub.s32 %s16, %s35
    %p37 = scmp.eq.s32.totalorder %s36, 0
    %s39 = sadd.s32 %s38, 1
    %s40 = scalar_select %p37, %s38, %s39
    %p43 = pneg %p37
    %p44 = scmp.eq.s32.totalorder %s9, 1
    %p45 = por %p43, %p44
    %p46 = scmp.ne.s32.totalorder %s38, %s41
    %p47 = scmp.eq.s32.totalorder %s9, 0
    %p48 = por %p46, %p47
    %p49 = scmp.ne.s32.totalorder %s38, %s41
    %p50 = scmp.eq.s32.totalorder %s14, 1
    %p51 = por %p49, %p50
    %p52 = scmp.ne.s32.totalorder %s41, %s42
    %p53 = scmp.eq.s32.totalorder %s14, 0
    %p54 = por %p52, %p53
    %p55 = scmp.ne.s32.totalorder %s41, %s42
    %p56 = scmp.eq.s32.totalorder %s15, 1
    %p57 = por %p55, %p56
    %p59 = scmp.ne.s32.totalorder %s42, %s58
    %p60 = scmp.eq.s32.totalorder %s15, 0
    %p61 = por %p59, %p60
    %s62 = ssub.s32 %s17, %s31
    %p63 = scmp.eq.s32.totalorder %s62, 0
    %s65 = sadd.s32 %s64, 1
    %s66 = scalar_select %p63, %s64, %s65
    %p69 = pneg %p63
    %p70 = scmp.eq.s32.totalorder %s9, 1
    %p71 = por %p69, %p70
    %p72 = scmp.ne.s32.totalorder %s64, %s67
    %p73 = scmp.eq.s32.totalorder %s9, 0
    %p74 = por %p72, %p73
    %p75 = scmp.ne.s32.totalorder %s64, %s67
    %p76 = scmp.eq.s32.totalorder %s14, 1
    %p77 = por %p75, %p76
    %p78 = scmp.ne.s32.totalorder %s67, %s68
    %p79 = scmp.eq.s32.totalorder %s14, 0
    %p80 = por %p78, %p79
    %p81 = scmp.ne.s32.totalorder %s67, %s68
    %p82 = scmp.eq.s32.totalorder %s15, 1
    %p83 = por %p81, %p82
    %p85 = scmp.ne.s32.totalorder %s68, %s84
    %p86 = scmp.eq.s32.totalorder %s15, 0
    %p87 = por %p85, %p86
    %s88 = sadd.s32 %s16, %s18
    %s89 = sadd.s32 %s35, %s27
    %s90 = ssub.s32 %s88, %s89
    %s91 = ssub.s32 %s17, %s31
    %s92 = sor.u32 %s90, %s91
    %p93 = scmp.eq.s32.totalorder %s92, 0
    %s95 = sadd.s32 %s94, 1
    %s96 = scalar_select %p93, %s94, %s95
    %p99 = pneg %p93
    %p100 = scmp.eq.s32.totalorder %s9, 1
    %p101 = por %p99, %p100
    %p102 = scmp.ne.s32.totalorder %s94, %s97
    %p103 = scmp.eq.s32.totalorder %s9, 0
    %p104 = por %p102, %p103
    %p105 = scmp.ne.s32.totalorder %s94, %s97
    %p106 = scmp.eq.s32.totalorder %s14, 1
    %p107 = por %p105, %p106
    %p108 = scmp.ne.s32.totalorder %s97, %s98
    %p109 = scmp.eq.s32.totalorder %s14, 0
    %p110 = por %p108, %p109
    %p111 = scmp.ne.s32.totalorder %s97, %s98
    %p112 = scmp.eq.s32.totalorder %s15, 1
    %p113 = por %p111, %p112
    %p115 = scmp.ne.s32.totalorder %s98, %s114
    %p116 = scmp.eq.s32.totalorder %s15, 0
    %p117 = por %p115, %p116
    %s118 = sadd.s32 %s16, %s18
    %s119 = sadd.s32 %s35, %s27
    %s120 = ssub.s32 %s118, %s119
    %s121 = ssub.s32 %s17, %s31
    %s122 = sor.u32 %s120, %s121
    %p123 = scmp.eq.s32.totalorder %s122, 0
    %s125 = sadd.s32 %s124, 1
    %s126 = scalar_select %p123, %s124, %s125
    %p129 = pneg %p123
    %p130 = scmp.eq.s32.totalorder %s9, 1
    %p131 = por %p129, %p130
    %p132 = scmp.ne.s32.totalorder %s124, %s127
    %p133 = scmp.eq.s32.totalorder %s9, 0
    %p134 = por %p132, %p133
    %p135 = scmp.ne.s32.totalorder %s124, %s127
    %p136 = scmp.eq.s32.totalorder %s14, 1
    %p137 = por %p135, %p136
    %p138 = scmp.ne.s32.totalorder %s127, %s128
    %p139 = scmp.eq.s32.totalorder %s14, 0
    %p140 = por %p138, %p139
    %p141 = scmp.ne.s32.totalorder %s127, %s128
    %p142 = scmp.eq.s32.totalorder %s15, 1
    %p143 = por %p141, %p142
    %p145 = scmp.ne.s32.totalorder %s128, %s144
    %p146 = scmp.eq.s32.totalorder %s15, 0
    %p147 = por %p145, %p146
    %p148 = scmp.le.s32.totalorder 1, %s9
    %p149 = scmp.lt.s32.totalorder %s9, 3
    %p150 = pnand %p148, %p149
    %p151 = pneg %p150
    // Predicated region
    $region9: #{_lambda_.7} parent=5 // pred_check
      _
    $region10: #{_lambda_.7} parent=5 // pred_check_branch
      %153 = sbr.rel (%p150) target = $region12
    $region11: #{_lambda_.7} parent=5 // pred_region
      %s154 = ssub.s32 %s9, 1
      // Predicated region
      $region13: #{_lambda_.7} parent=11 // pred_check
        %p155 = pneg %p80
      $region14: #{_lambda_.7} parent=11 // pred_check_branch
        %157 = sbr.rel (%p155) target = $region16
      $region15: #{_lambda_.7} parent=11 // pred_region
        %p158 = scmp.lt.s32.totalorder %s20, 0
        %s159 = scalar_select %p158, %s20, 0
        %s160 = smul.addr %s159, 8
        %s161 = scalar_lea.vmem %s1, %s160
      $region16: #{_lambda_.7} parent=11 // pred_fallthru
        _
    $region12: #{_lambda_.7} parent=5 // pred_fallthru
      _
    %p162 = scmp.lt.s32.totalorder %s9, 2
    // Predicated region
    $region17: #{_lambda_.7} parent=5 // pred_check
      %p163 = pneg %p162
    $region18: #{_lambda_.7} parent=5 // pred_check_branch
      %165 = sbr.rel (%p163) target = $region20
    $region19: #{_lambda_.7} parent=5 // pred_region
      // Predicated region
      $region21: #{_lambda_.7} parent=19 // pred_check
        %p166 = pneg %p48
      $region22: #{_lambda_.7} parent=19 // pred_check_branch
        %168 = sbr.rel (%p166) target = $region24
      $region23: #{_lambda_.7} parent=19 // pred_region
        %p169 = scmp.lt.s32.totalorder %s16, 1
        %s170 = scalar_select %p169, %s16, 1
        %s171 = smul.addr %s170, 20
        %s172 = smul.addr %s171, 8
        %s173 = scalar_lea.vmem %s0, %s172
      $region24: #{_lambda_.7} parent=19 // pred_fallthru
        _
      // Predicated region
      $region25: #{_lambda_.7} parent=19 // pred_check
        %p174 = pneg %p104
      $region26: #{_lambda_.7} parent=19 // pred_check_branch
        %176 = sbr.rel (%p174) target = $region28
      $region27: #{_lambda_.7} parent=19 // pred_region
        %s177 = sadd.s32 %s16, %s18
        %s178 = smul.u32 8, %s177
        %p179 = scmp.lt.s32.totalorder %s178, 15
        %s180 = scalar_select %p179, %s178, 15
        %p181 = scmp.lt.s32.totalorder %s17, 0
        %s182 = scalar_select %p181, %s17, 0
        %s183 = sadd.s32 %s182, %s180
        %s184 = smul.addr %s183, 8
        %s185 = scalar_lea.vmem %s2, %s184
        %s186 = sadd.s32 %s16, %s18
        %s187 = smul.u32 8, %s186
      $region28: #{_lambda_.7} parent=19 // pred_fallthru
        _
    $region20: #{_lambda_.7} parent=5 // pred_fallthru
      _
    %p188 = scmp.le.s32.totalorder 1, %s9
    %p189 = scmp.lt.s32.totalorder %s9, 3
    %p190 = pnand %p188, %p189
    %p191 = pneg %p190
    // Predicated region
    $region29: #{_lambda_.7} parent=5 // pred_check
      _
    $region30: #{_lambda_.7} parent=5 // pred_check_branch
      %193 = sbr.rel (%p190) target = $region32
    $region31: #{_lambda_.7} parent=5 // pred_region
      %s194 = ssub.s32 %s9, 1
      %p195 = scmp.lt.s32.totalorder %s19, 1
      %s196 = scalar_select %p195, %s19, 1
      %s197 = smul.addr %s196, 20
      %s198 = smul.addr %s197, 8
      %s199 = scalar_lea.vmem %s0, %s198
      %p200 = pneg %p54
      %p201 = pneg %p51
      %p202 = scmp.lt.s32.totalorder %s20, 0
      %s203 = scalar_select %p202, %s20, 0
      %s204 = smul.addr %s203, 8
      %s205 = scalar_lea.vmem %s1, %s204
      %p206 = pneg %p80
      %p207 = pneg %p77
      %s208 = sadd.s32 %s19, %s21
      %s209 = smul.u32 8, %s208
      %p210 = scmp.lt.s32.totalorder %s209, 15
      %s211 = scalar_select %p210, %s209, 15
      %p212 = scmp.lt.s32.totalorder %s20, 0
      %s213 = scalar_select %p212, %s20, 0
      %s214 = sadd.s32 %s213, %s211
      %s215 = smul.addr %s214, 8
      %s216 = scalar_lea.vmem %s2, %s215
      %p217 = pneg %p110
      %p218 = pneg %p107
      %p219 = pneg %p140
      %p220 = pneg %p137
      %s221 = sadd.s32 %s19, %s21
      %s222 = smul.u32 8, %s221
      %p223 = scmp.lt.s32.totalorder %s222, 15
      %s224 = scalar_select %p223, %s222, 15
      %p225 = scmp.lt.s32.totalorder %s20, 0
      %s226 = scalar_select %p225, %s20, 0
      %s227 = sadd.s32 %s226, %s224
      %s228 = smul.addr %s227, 8
      %s229 = scalar_lea.vmem %s3, %s228
      %p230 = scmp.lt.s32.totalorder %s19, 1
      %s231 = scalar_select %p230, %s19, 1
      %s232 = smul.addr %s231, 20
      %s233 = smul.addr %s232, 8
      %s234 = scalar_lea.vmem %s0, %s233
      %p235 = scmp.lt.s32.totalorder %s20, 0
      %s236 = scalar_select %p235, %s20, 0
      %s237 = smul.addr %s236, 8
      %s238 = scalar_lea.vmem %s1, %s237
      %s239 = sadd.s32 %s19, %s21
      %s240 = smul.u32 8, %s239
      %p241 = scmp.lt.s32.totalorder %s240, 15
      %s242 = scalar_select %p241, %s240, 15
      %p243 = scmp.lt.s32.totalorder %s20, 0
      %s244 = scalar_select %p243, %s20, 0
      %s245 = sadd.s32 %s244, %s242
      %s246 = smul.addr %s245, 8
      %s247 = scalar_lea.vmem %s2, %s246
      %s248 = sadd.s32 %s19, %s21
      %s249 = smul.u32 8, %s248
      %s250 = sadd.s32 %s19, %s21
      %s251 = smul.u32 8, %s250
      %p252 = scmp.lt.s32.totalorder %s251, 15
      %s253 = scalar_select %p252, %s251, 15
      %p254 = scmp.lt.s32.totalorder %s20, 0
      %s255 = scalar_select %p254, %s20, 0
      %s256 = sadd.s32 %s255, %s253
      %s257 = smul.addr %s256, 8
      %s258 = scalar_lea.vmem %s3, %s257
      %s259 = sadd.s32 %s19, %s21
      %s260 = smul.u32 8, %s259
      %s261 = smul.u32 %s21, 8
      %s262 = smul.u32 %s261, 16
      %s263 = scalar_lea.vmem %s234, %s262
      %v264 = vld [vmem:[%s263] sm:$0xff]
      %v265 = vld [vmem:[%s263 + $0x10] sm:$0xff]
      %v266 = vld [vmem:[%s263 + $0x20] sm:$0xff]
      %v267 = vld [vmem:[%s263 + $0x30] sm:$0xff]
      %v268 = vld [vmem:[%s263 + $0x40] sm:$0xff]
      %v269 = vld [vmem:[%s263 + $0x50] sm:$0xff]
      %v270 = vld [vmem:[%s263 + $0x60] sm:$0xff]
      %v271 = vld [vmem:[%s263 + $0x70] sm:$0xff]
      %v272 = vld [vmem:[%s238] sm:$0xff]
      %v273 = vld [vmem:[%s238 + $0x8] sm:$0xff]
      %v274 = vld [vmem:[%s238 + $0x10] sm:$0xff]
      %v275 = vld [vmem:[%s238 + $0x18] sm:$0xff]
      %v276 = vld [vmem:[%s238 + $0x20] sm:$0xff]
      %v277 = vld [vmem:[%s238 + $0x28] sm:$0xff]
      %v278 = vld [vmem:[%s238 + $0x30] sm:$0xff]
      %v279 = vld [vmem:[%s238 + $0x38] sm:$0xff]
      %v280 = vld [vmem:[%s238 + $0x40] sm:$0xff]
      %v281 = vld [vmem:[%s238 + $0x48] sm:$0xff]
      %v282 = vld [vmem:[%s238 + $0x50] sm:$0xff]
      %v283 = vld [vmem:[%s238 + $0x58] sm:$0xff]
      %v284 = vld [vmem:[%s238 + $0x60] sm:$0xff]
      %v285 = vld [vmem:[%s238 + $0x68] sm:$0xff]
      %v286 = vld [vmem:[%s238 + $0x70] sm:$0xff]
      %v287 = vld [vmem:[%s238 + $0x78] sm:$0xff]
      %v288 = vld [vmem:[%s263 + $0x1] sm:$0xff]
      %v289 = vld [vmem:[%s263 + $0x11] sm:$0xff]
      %v290 = vld [vmem:[%s263 + $0x21] sm:$0xff]
      %v291 = vld [vmem:[%s263 + $0x31] sm:$0xff]
      %v292 = vld [vmem:[%s263 + $0x41] sm:$0xff]
      %v293 = vld [vmem:[%s263 + $0x51] sm:$0xff]
      %v294 = vld [vmem:[%s263 + $0x61] sm:$0xff]
      %v295 = vld [vmem:[%s263 + $0x71] sm:$0xff]
      %s296 = scalar_lea.vmem %s238, 128
      %v297 = vld [vmem:[%s296] sm:$0xff]
      %v298 = vld [vmem:[%s296 + $0x8] sm:$0xff]
      %v299 = vld [vmem:[%s296 + $0x10] sm:$0xff]
      %v300 = vld [vmem:[%s296 + $0x18] sm:$0xff]
      %v301 = vld [vmem:[%s296 + $0x20] sm:$0xff]
      %v302 = vld [vmem:[%s296 + $0x28] sm:$0xff]
      %v303 = vld [vmem:[%s296 + $0x30] sm:$0xff]
      %v304 = vld [vmem:[%s296 + $0x38] sm:$0xff]
      %v305 = vld [vmem:[%s296 + $0x40] sm:$0xff]
      %v306 = vld [vmem:[%s296 + $0x48] sm:$0xff]
      %v307 = vld [vmem:[%s296 + $0x50] sm:$0xff]
      %v308 = vld [vmem:[%s296 + $0x58] sm:$0xff]
      %v309 = vld [vmem:[%s296 + $0x60] sm:$0xff]
      %v310 = vld [vmem:[%s296 + $0x68] sm:$0xff]
      %v311 = vld [vmem:[%s296 + $0x70] sm:$0xff]
      %v312 = vld [vmem:[%s296 + $0x78] sm:$0xff]
      %313 = vmatprep.subr.mxu0 0.0
      %314 = vmatpush1.msra.mxu0 %v297
      %315 = vmatprep.subr.mxu0 0.0
      %316 = vmatpush1.msra.mxu0 %v298
      %317 = vmatprep.subr.mxu0 0.0
      %318 = vmatpush1.msra.mxu0 %v299
      %319 = vmatprep.subr.mxu0 0.0
      %320 = vmatpush1.msra.mxu0 %v300
      %321 = vmatprep.subr.mxu0 0.0
      %322 = vmatpush1.msra.mxu0 %v301
      %323 = vmatprep.subr.mxu0 0.0
      %324 = vmatpush1.msra.mxu0 %v302
      %325 = vmatprep.subr.mxu0 0.0
      %326 = vmatpush1.msra.mxu0 %v303
      %327 = vmatprep.subr.mxu0 0.0
      %328 = vmatpush1.msra.mxu0 %v304
      %329 = vmatprep.subr.mxu0 0.0
      %330 = vmatpush1.msra.mxu0 %v305
      %331 = vmatprep.subr.mxu0 0.0
      %332 = vmatpush1.msra.mxu0 %v306
      %333 = vmatprep.subr.mxu0 0.0
      %334 = vmatpush1.msra.mxu0 %v307
      %335 = vmatprep.subr.mxu0 0.0
      %336 = vmatpush1.msra.mxu0 %v308
      %337 = vmatprep.subr.mxu0 0.0
      %338 = vmatpush1.msra.mxu0 %v309
      %339 = vmatprep.subr.mxu0 0.0
      %340 = vmatpush1.msra.mxu0 %v310
      %341 = vmatprep.subr.mxu0 0.0
      %342 = vmatpush1.msra.mxu0 %v311
      %343 = vmatprep.subr.mxu0 0.0
      %344 = vmatpush1.msra.mxu0 %v312
      %345 = vmatprep.subr.mxu0 0.0
      %346 = vmatpush1.msra.mxu0 0.0
      %347 = vmatprep.subr.mxu0 0.0
      %348 = vmatpush1.msra.mxu0 0.0
      %349 = vmatprep.subr.mxu0 0.0
      %350 = vmatpush1.msra.mxu0 0.0
      %351 = vmatprep.subr.mxu0 0.0
      %352 = vmatpush1.msra.mxu0 0.0
      %353 = vmatprep.subr.mxu0 0.0
      %354 = vmatpush1.msra.mxu0 0.0
      %355 = vmatprep.subr.mxu0 0.0
      %356 = vmatpush1.msra.mxu0 0.0
      %357 = vmatprep.subr.mxu0 0.0
      %358 = vmatpush1.msra.mxu0 0.0
      %359 = vmatprep.subr.mxu0 0.0
      %360 = vmatpush1.msra.mxu0 0.0
      %361 = vmatprep.subr.mxu0 0.0
      %362 = vmatpush1.msra.mxu0 0.0
      %363 = vmatprep.subr.mxu0 0.0
      %364 = vmatpush1.msra.mxu0 0.0
      %365 = vmatprep.subr.mxu0 0.0
      %366 = vmatpush1.msra.mxu0 0.0
      %367 = vmatprep.subr.mxu0 0.0
      %368 = vmatpush1.msra.mxu0 0.0
      %369 = vmatprep.subr.mxu0 0.0
      %370 = vmatpush1.msra.mxu0 0.0
      %371 = vmatprep.subr.mxu0 0.0
      %372 = vmatpush1.msra.mxu0 0.0
      %373 = vmatprep.subr.mxu0 0.0
      %374 = vmatpush1.msra.mxu0 0.0
      %375 = vmatprep.subr.mxu0 0.0
      %376 = vmatpush1.msra.mxu0 0.0
      %377 = vmatprep.mubr.f32.mxu0 0.0
      %378 = vmatmul.mubr.f32.gmra.mrb[0].mxu0 %v288
      %v379 = vpop.f32.mrb[0].mxu0
      %v380 = vadd.f32 0.0, %v379
      %v381 = vpop.f32.mrb[0].mxu0
      %382 = vmatprep.mubr.f32.mxu0 0.0
      %383 = vmatmul.mubr.f32.gmra.mrb[0].mxu0 %v289
      %v384 = vpop.f32.mrb[0].mxu0
      %v385 = vadd.f32 0.0, %v384
      %v386 = vpop.f32.mrb[0].mxu0
      %387 = vmatprep.mubr.f32.mxu0 0.0
      %388 = vmatmul.mubr.f32.gmra.mrb[0].mxu0 %v290
      %v389 = vpop.f32.mrb[0].mxu0
      %v390 = vadd.f32 0.0, %v389
      %v391 = vpop.f32.mrb[0].mxu0
      %392 = vmatprep.mubr.f32.mxu0 0.0
      %393 = vmatmul.mubr.f32.gmra.mrb[0].mxu0 %v291
      %v394 = vpop.f32.mrb[0].mxu0
      %v395 = vadd.f32 0.0, %v394
      %v396 = vpop.f32.mrb[0].mxu0
      %397 = vmatprep.mubr.f32.mxu0 0.0
      %398 = vmatmul.mubr.f32.gmra.mrb[0].mxu0 %v292
      %v399 = vpop.f32.mrb[0].mxu0
      %v400 = vadd.f32 0.0, %v399
      %v401 = vpop.f32.mrb[0].mxu0
      %402 = vmatprep.mubr.f32.mxu0 0.0
      %403 = vmatmul.mubr.f32.gmra.mrb[0].mxu0 %v293
      %v404 = vpop.f32.mrb[0].mxu0
      %v405 = vadd.f32 0.0, %v404
      %v406 = vpop.f32.mrb[0].mxu0
      %407 = vmatprep.mubr.f32.mxu0 0.0
      %408 = vmatmul.mubr.f32.gmra.mrb[0].mxu0 %v294
      %v409 = vpop.f32.mrb[0].mxu0
      %v410 = vadd.f32 0.0, %v409
      %v411 = vpop.f32.mrb[0].mxu0
      %412 = vmatprep.mubr.f32.mxu0 0.0
      %413 = vmatmul.mubr.f32.gmra.mrb[0].mxu0 %v295
      %v414 = vpop.f32.mrb[0].mxu0
      %v415 = vadd.f32 0.0, %v414
      %v416 = vpop.f32.mrb[0].mxu0
      %417 = vdwg.mxu0
      %418 = vmatprep.subr.mxu0 0.0
      %419 = vmatpush1.msra.mxu0 %v272
      %420 = vmatprep.subr.mxu0 0.0
      %421 = vmatpush1.msra.mxu0 %v273
      %422 = vmatprep.subr.mxu0 0.0
      %423 = vmatpush1.msra.mxu0 %v274
      %424 = vmatprep.subr.mxu0 0.0
      %425 = vmatpush1.msra.mxu0 %v275
      %426 = vmatprep.subr.mxu0 0.0
      %427 = vmatpush1.msra.mxu0 %v276
      %428 = vmatprep.subr.mxu0 0.0
      %429 = vmatpush1.msra.mxu0 %v277
      %430 = vmatprep.subr.mxu0 0.0
      %431 = vmatpush1.msra.mxu0 %v278
      %432 = vmatprep.subr.mxu0 0.0
      %433 = vmatpush1.msra.mxu0 %v279
      %434 = vmatprep.subr.mxu0 0.0
      %435 = vmatpush1.msra.mxu0 %v280
      %436 = vmatprep.subr.mxu0 0.0
      %437 = vmatpush1.msra.mxu0 %v281
      %438 = vmatprep.subr.mxu0 0.0
      %439 = vmatpush1.msra.mxu0 %v282
      %440 = vmatprep.subr.mxu0 0.0
      %441 = vmatpush1.msra.mxu0 %v283
      %442 = vmatprep.subr.mxu0 0.0
      %443 = vmatpush1.msra.mxu0 %v284
      %444 = vmatprep.subr.mxu0 0.0
      %445 = vmatpush1.msra.mxu0 %v285
      %446 = vmatprep.subr.mxu0 0.0
      %447 = vmatpush1.msra.mxu0 %v286
      %448 = vmatprep.subr.mxu0 0.0
      %449 = vmatpush1.msra.mxu0 %v287
      %450 = vmatprep.subr.mxu0 0.0
      %451 = vmatpush1.msra.mxu0 0.0
      %452 = vmatprep.subr.mxu0 0.0
      %453 = vmatpush1.msra.mxu0 0.0
      %454 = vmatprep.subr.mxu0 0.0
      %455 = vmatpush1.msra.mxu0 0.0
      %456 = vmatprep.subr.mxu0 0.0
      %457 = vmatpush1.msra.mxu0 0.0
      %458 = vmatprep.subr.mxu0 0.0
      %459 = vmatpush1.msra.mxu0 0.0
      %460 = vmatprep.subr.mxu0 0.0
      %461 = vmatpush1.msra.mxu0 0.0
      %462 = vmatprep.subr.mxu0 0.0
      %463 = vmatpush1.msra.mxu0 0.0
      %464 = vmatprep.subr.mxu0 0.0
      %465 = vmatpush1.msra.mxu0 0.0
      %466 = vmatprep.subr.mxu0 0.0
      %467 = vmatpush1.msra.mxu0 0.0
      %468 = vmatprep.subr.mxu0 0.0
      %469 = vmatpush1.msra.mxu0 0.0
      %470 = vmatprep.subr.mxu0 0.0
      %471 = vmatpush1.msra.mxu0 0.0
      %472 = vmatprep.subr.mxu0 0.0
      %473 = vmatpush1.msra.mxu0 0.0
      %474 = vmatprep.subr.mxu0 0.0
      %475 = vmatpush1.msra.mxu0 0.0
      %476 = vmatprep.subr.mxu0 0.0
      %477 = vmatpush1.msra.mxu0 0.0
      %478 = vmatprep.subr.mxu0 0.0
      %479 = vmatpush1.msra.mxu0 0.0
      %480 = vmatprep.subr.mxu0 0.0
      %481 = vmatpush1.msra.mxu0 0.0
      %482 = vmatprep.mubr.f32.mxu0 0.0
      %483 = vmatmul.mubr.f32.gmra.mrb[0].mxu0 %v264
      %v484 = vpop.f32.mrb[0].mxu0
      %v485 = vadd.f32 %v380, %v484
      %v486 = vpop.f32.mrb[0].mxu0
      %487 = vmatprep.mubr.f32.mxu0 0.0
      %488 = vmatmul.mubr.f32.gmra.mrb[0].mxu0 %v265
      %v489 = vpop.f32.mrb[0].mxu0
      %v490 = vadd.f32 %v385, %v489
      %v491 = vpop.f32.mrb[0].mxu0
      %492 = vmatprep.mubr.f32.mxu0 0.0
      %493 = vmatmul.mubr.f32.gmra.mrb[0].mxu0 %v266
      %v494 = vpop.f32.mrb[0].mxu0
      %v495 = vadd.f32 %v390, %v494
      %v496 = vpop.f32.mrb[0].mxu0
      %497 = vmatprep.mubr.f32.mxu0 0.0
      %498 = vmatmul.mubr.f32.gmra.mrb[0].mxu0 %v267
      %v499 = vpop.f32.mrb[0].mxu0
      %v500 = vadd.f32 %v395, %v499
      %v501 = vpop.f32.mrb[0].mxu0
      %502 = vmatprep.mubr.f32.mxu0 0.0
      %503 = vmatmul.mubr.f32.gmra.mrb[0].mxu0 %v268
      %v504 = vpop.f32.mrb[0].mxu0
      %v505 = vadd.f32 %v400, %v504
      %v506 = vpop.f32.mrb[0].mxu0
      %507 = vmatprep.mubr.f32.mxu0 0.0
      %508 = vmatmul.mubr.f32.gmra.mrb[0].mxu0 %v269
      %v509 = vpop.f32.mrb[0].mxu0
      %v510 = vadd.f32 %v405, %v509
      %v511 = vpop.f32.mrb[0].mxu0
      %512 = vmatprep.mubr.f32.mxu0 0.0
      %513 = vmatmul.mubr.f32.gmra.mrb[0].mxu0 %v270
      %v514 = vpop.f32.mrb[0].mxu0
      %v515 = vadd.f32 %v410, %v514
      %v516 = vpop.f32.mrb[0].mxu0
      %517 = vmatprep.mubr.f32.mxu0 0.0
      %518 = vmatmul.mubr.f32.gmra.mrb[0].mxu0 %v271
      %v519 = vpop.f32.mrb[0].mxu0
      %v520 = vadd.f32 %v415, %v519
      %v521 = vpop.f32.mrb[0].mxu0
      %522 = vdwg.mxu0
      %v523 = vld [vmem:[%s263 + $0x2] sm:$0xff]
      %v524 = vld [vmem:[%s263 + $0x12] sm:$0xff]
      %v525 = vld [vmem:[%s263 + $0x22] sm:$0xff]
      %v526 = vld [vmem:[%s263 + $0x32] sm:$0xff]
      %v527 = vld [vmem:[%s263 + $0x42] sm:$0xff]
      %v528 = vld [vmem:[%s263 + $0x52] sm:$0xff]
      %v529 = vld [vmem:[%s263 + $0x62] sm:$0xff]
      %v530 = vld [vmem:[%s263 + $0x72] sm:$0xff]
      %s531 = scalar_lea.vmem %s238, 256
      %v532 = vld [vmem:[%s531] sm:$0xff]
      %v533 = vld [vmem:[%s531 + $0x8] sm:$0xff]
      %v534 = vld [vmem:[%s531 + $0x10] sm:$0xff]
      %v535 = vld [vmem:[%s531 + $0x18] sm:$0xff]
      %v536 = vld [vmem:[%s531 + $0x20] sm:$0xff]
      %v537 = vld [vmem:[%s531 + $0x28] sm:$0xff]
      %v538 = vld [vmem:[%s531 + $0x30] sm:$0xff]
      %v539 = vld [vmem:[%s531 + $0x38] sm:$0xff]
      %v540 = vld [vmem:[%s531 + $0x40] sm:$0xff]
      %v541 = vld [vmem:[%s531 + $0x48] sm:$0xff]
      %v542 = vld [vmem:[%s531 + $0x50] sm:$0xff]
      %v543 = vld [vmem:[%s531 + $0x58] sm:$0xff]
      %v544 = vld [vmem:[%s531 + $0x60] sm:$0xff]
      %v545 = vld [vmem:[%s531 + $0x68] sm:$0xff]
      %v546 = vld [vmem:[%s531 + $0x70] sm:$0xff]
      %v547 = vld [vmem:[%s531 + $0x78] sm:$0xff]
      %548 = vmatprep.subr.mxu0 0.0
      %549 = vmatpush1.msra.mxu0 %v532
      %550 = vmatprep.subr.mxu0 0.0
      %551 = vmatpush1.msra.mxu0 %v533
      %552 = vmatprep.subr.mxu0 0.0
      %553 = vmatpush1.msra.mxu0 %v534
      %554 = vmatprep.subr.mxu0 0.0
      %555 = vmatpush1.msra.mxu0 %v535
      %556 = vmatprep.subr.mxu0 0.0
      %557 = vmatpush1.msra.mxu0 %v536
      %558 = vmatprep.subr.mxu0 0.0
      %559 = vmatpush1.msra.mxu0 %v537
      %560 = vmatprep.subr.mxu0 0.0
      %561 = vmatpush1.msra.mxu0 %v538
      %562 = vmatprep.subr.mxu0 0.0
      %563 = vmatpush1.msra.mxu0 %v539
      %564 = vmatprep.subr.mxu0 0.0
      %565 = vmatpush1.msra.mxu0 %v540
      %566 = vmatprep.subr.mxu0 0.0
      %567 = vmatpush1.msra.mxu0 %v541
      %568 = vmatprep.subr.mxu0 0.0
      %569 = vmatpush1.msra.mxu0 %v542
      %570 = vmatprep.subr.mxu0 0.0
      %571 = vmatpush1.msra.mxu0 %v543
      %572 = vmatprep.subr.mxu0 0.0
      %573 = vmatpush1.msra.mxu0 %v544
      %574 = vmatprep.subr.mxu0 0.0
      %575 = vmatpush1.msra.mxu0 %v545
      %576 = vmatprep.subr.mxu0 0.0
      %577 = vmatpush1.msra.mxu0 %v546
      %578 = vmatprep.subr.mxu0 0.0
      %579 = vmatpush1.msra.mxu0 %v547
      %580 = vmatprep.subr.mxu0 0.0
      %581 = vmatpush1.msra.mxu0 0.0
      %582 = vmatprep.subr.mxu0 0.0
      %583 = vmatpush1.msra.mxu0 0.0
      %584 = vmatprep.subr.mxu0 0.0
      %585 = vmatpush1.msra.mxu0 0.0
      %586 = vmatprep.subr.mxu0 0.0
      %587 = vmatpush1.msra.mxu0 0.0
      %588 = vmatprep.subr.mxu0 0.0
      %589 = vmatpush1.msra.mxu0 0.0
      %590 = vmatprep.subr.mxu0 0.0
      %591 = vmatpush1.msra.mxu0 0.0
      %592 = vmatprep.subr.mxu0 0.0
      %593 = vmatpush1.msra.mxu0 0.0
      %594 = vmatprep.subr.mxu0 0.0
      %595 = vmatpush1.msra.mxu0 0.0
      %596 = vmatprep.subr.mxu0 0.0
      %597 = vmatpush1.msra.mxu0 0.0
      %598 = vmatprep.subr.mxu0 0.0
      %599 = vmatpush1.msra.mxu0 0.0
      %600 = vmatprep.subr.mxu0 0.0
      %601 = vmatpush1.msra.mxu0 0.0
      %602 = vmatprep.subr.mxu0 0.0
      %603 = vmatpush1.msra.mxu0 0.0
      %604 = vmatprep.subr.mxu0 0.0
      %605 = vmatpush1.msra.mxu0 0.0
      %606 = vmatprep.subr.mxu0 0.0
      %607 = vmatpush1.msra.mxu0 0.0
      %608 = vmatprep.subr.mxu0 0.0
      %609 = vmatpush1.msra.mxu0 0.0
      %610 = vmatprep.subr.mxu0 0.0
      %611 = vmatpush1.msra.mxu0 0.0
      %612 = vmatprep.mubr.f32.mxu0 0.0
      %613 = vmatmul.mubr.f32.gmra.mrb[0].mxu0 %v523
      %v614 = vpop.f32.mrb[0].mxu0
      %v615 = vadd.f32 0.0, %v614
      %v616 = vpop.f32.mrb[0].mxu0
      %617 = vmatprep.mubr.f32.mxu0 0.0
      %618 = vmatmul.mubr.f32.gmra.mrb[0].mxu0 %v524
      %v619 = vpop.f32.mrb[0].mxu0
      %v620 = vadd.f32 0.0, %v619
      %v621 = vpop.f32.mrb[0].mxu0
      %622 = vmatprep.mubr.f32.mxu0 0.0
      %623 = vmatmul.mubr.f32.gmra.mrb[0].mxu0 %v525
      %v624 = vpop.f32.mrb[0].mxu0
      %v625 = vadd.f32 0.0, %v624
      %v626 = vpop.f32.mrb[0].mxu0
      %627 = vmatprep.mubr.f32.mxu0 0.0
      %628 = vmatmul.mubr.f32.gmra.mrb[0].mxu0 %v526
      %v629 = vpop.f32.mrb[0].mxu0
      %v630 = vadd.f32 0.0, %v629
      %v631 = vpop.f32.mrb[0].mxu0
      %632 = vmatprep.mubr.f32.mxu0 0.0
      %633 = vmatmul.mubr.f32.gmra.mrb[0].mxu0 %v527
      %v634 = vpop.f32.mrb[0].mxu0
      %v635 = vadd.f32 0.0, %v634
      %v636 = vpop.f32.mrb[0].mxu0
      %637 = vmatprep.mubr.f32.mxu0 0.0
      %638 = vmatmul.mubr.f32.gmra.mrb[0].mxu0 %v528
      %v639 = vpop.f32.mrb[0].mxu0
      %v640 = vadd.f32 0.0, %v639
      %v641 = vpop.f32.mrb[0].mxu0
      %642 = vmatprep.mubr.f32.mxu0 0.0
      %643 = vmatmul.mubr.f32.gmra.mrb[0].mxu0 %v529
      %v644 = vpop.f32.mrb[0].mxu0
      %v645 = vadd.f32 0.0, %v644
      %v646 = vpop.f32.mrb[0].mxu0
      %647 = vmatprep.mubr.f32.mxu0 0.0
      %648 = vmatmul.mubr.f32.gmra.mrb[0].mxu0 %v530
      %v649 = vpop.f32.mrb[0].mxu0
      %v650 = vadd.f32 0.0, %v649
      %v651 = vpop.f32.mrb[0].mxu0
      %652 = vdwg.mxu0
      %v653 = vadd.f32 %v485, %v615
      %v654 = vadd.f32 %v490, %v620
      %v655 = vadd.f32 %v495, %v625
      %v656 = vadd.f32 %v500, %v630
      %v657 = vadd.f32 %v505, %v635
      %v658 = vadd.f32 %v510, %v640
      %v659 = vadd.f32 %v515, %v645
      %v660 = vadd.f32 %v520, %v650
      %s661 = sadd.s32 %s261, 1
      %s662 = smul.u32 %s661, 16
      %s663 = scalar_lea.vmem %s234, %s662
      %v664 = vld [vmem:[%s663] sm:$0xff]
      %v665 = vld [vmem:[%s663 + $0x10] sm:$0xff]
      %v666 = vld [vmem:[%s663 + $0x20] sm:$0xff]
      %v667 = vld [vmem:[%s663 + $0x30] sm:$0xff]
      %v668 = vld [vmem:[%s663 + $0x40] sm:$0xff]
      %v669 = vld [vmem:[%s663 + $0x50] sm:$0xff]
      %v670 = vld [vmem:[%s663 + $0x60] sm:$0xff]
      %v671 = vld [vmem:[%s663 + $0x70] sm:$0xff]
      %s672 = scalar_lea.vmem %s238, 384
      %v673 = vld [vmem:[%s672] sm:$0xff]
      %v674 = vld [vmem:[%s672 + $0x8] sm:$0xff]
      %v675 = vld [vmem:[%s672 + $0x10] sm:$0xff]
      %v676 = vld [vmem:[%s672 + $0x18] sm:$0xff]
      %v677 = vld [vmem:[%s672 + $0x20] sm:$0xff]
      %v678 = vld [vmem:[%s672 + $0x28] sm:$0xff]
      %v679 = vld [vmem:[%s672 + $0x30] sm:$0xff]
      %v680 = vld [vmem:[%s672 + $0x38] sm:$0xff]
      %v681 = vld [vmem:[%s672 + $0x40] sm:$0xff]
      %v682 = vld [vmem:[%s672 + $0x48] sm:$0xff]
      %v683 = vld [vmem:[%s672 + $0x50] sm:$0xff]
      %v684 = vld [vmem:[%s672 + $0x58] sm:$0xff]
      %v685 = vld [vmem:[%s672 + $0x60] sm:$0xff]
      %v686 = vld [vmem:[%s672 + $0x68] sm:$0xff]
      %v687 = vld [vmem:[%s672 + $0x70] sm:$0xff]
      %v688 = vld [vmem:[%s672 + $0x78] sm:$0xff]
      %689 = vmatprep.subr.mxu0 0.0
      %690 = vmatpush1.msra.mxu0 %v673
      %691 = vmatprep.subr.mxu0 0.0
      %692 = vmatpush1.msra.mxu0 %v674
      %693 = vmatprep.subr.mxu0 0.0
      %694 = vmatpush1.msra.mxu0 %v675
      %695 = vmatprep.subr.mxu0 0.0
      %696 = vmatpush1.msra.mxu0 %v676
      %697 = vmatprep.subr.mxu0 0.0
      %698 = vmatpush1.msra.mxu0 %v677
      %699 = vmatprep.subr.mxu0 0.0
      %700 = vmatpush1.msra.mxu0 %v678
      %701 = vmatprep.subr.mxu0 0.0
      %702 = vmatpush1.msra.mxu0 %v679
      %703 = vmatprep.subr.mxu0 0.0
      %704 = vmatpush1.msra.mxu0 %v680
      %705 = vmatprep.subr.mxu0 0.0
      %706 = vmatpush1.msra.mxu0 %v681
      %707 = vmatprep.subr.mxu0 0.0
      %708 = vmatpush1.msra.mxu0 %v682
      %709 = vmatprep.subr.mxu0 0.0
      %710 = vmatpush1.msra.mxu0 %v683
      %711 = vmatprep.subr.mxu0 0.0
      %712 = vmatpush1.msra.mxu0 %v684
      %713 = vmatprep.subr.mxu0 0.0
      %714 = vmatpush1.msra.mxu0 %v685
      %715 = vmatprep.subr.mxu0 0.0
      %716 = vmatpush1.msra.mxu0 %v686
      %717 = vmatprep.subr.mxu0 0.0
      %718 = vmatpush1.msra.mxu0 %v687
      %719 = vmatprep.subr.mxu0 0.0
      %720 = vmatpush1.msra.mxu0 %v688
      %721 = vmatprep.subr.mxu0 0.0
      %722 = vmatpush1.msra.mxu0 0.0
      %723 = vmatprep.subr.mxu0 0.0
      %724 = vmatpush1.msra.mxu0 0.0
      %725 = vmatprep.subr.mxu0 0.0
      %726 = vmatpush1.msra.mxu0 0.0
      %727 = vmatprep.subr.mxu0 0.0
      %728 = vmatpush1.msra.mxu0 0.0
      %729 = vmatprep.subr.mxu0 0.0
      %730 = vmatpush1.msra.mxu0 0.0
      %731 = vmatprep.subr.mxu0 0.0
      %732 = vmatpush1.msra.mxu0 0.0
      %733 = vmatprep.subr.mxu0 0.0
      %734 = vmatpush1.msra.mxu0 0.0
      %735 = vmatprep.subr.mxu0 0.0
      %736 = vmatpush1.msra.mxu0 0.0
      %737 = vmatprep.subr.mxu0 0.0
      %738 = vmatpush1.msra.mxu0 0.0
      %739 = vmatprep.subr.mxu0 0.0
      %740 = vmatpush1.msra.mxu0 0.0
      %741 = vmatprep.subr.mxu0 0.0
      %742 = vmatpush1.msra.mxu0 0.0
      %743 = vmatprep.subr.mxu0 0.0
      %744 = vmatpush1.msra.mxu0 0.0
      %745 = vmatprep.subr.mxu0 0.0
      %746 = vmatpush1.msra.mxu0 0.0
      %747 = vmatprep.subr.mxu0 0.0
      %748 = vmatpush1.msra.mxu0 0.0
      %749 = vmatprep.subr.mxu0 0.0
      %750 = vmatpush1.msra.mxu0 0.0
      %751 = vmatprep.subr.mxu0 0.0
      %752 = vmatpush1.msra.mxu0 0.0
      %753 = vmatprep.mubr.f32.mxu0 0.0
      %754 = vmatmul.mubr.f32.gmra.mrb[0].mxu0 %v664
      %v755 = vpop.f32.mrb[0].mxu0
      %v756 = vadd.f32 0.0, %v755
      %v757 = vpop.f32.mrb[0].mxu0
      %758 = vmatprep.mubr.f32.mxu0 0.0
      %759 = vmatmul.mubr.f32.gmra.mrb[0].mxu0 %v665
      %v760 = vpop.f32.mrb[0].mxu0
      %v761 = vadd.f32 0.0, %v760
      %v762 = vpop.f32.mrb[0].mxu0
      %763 = vmatprep.mubr.f32.mxu0 0.0
      %764 = vmatmul.mubr.f32.gmra.mrb[0].mxu0 %v666
      %v765 = vpop.f32.mrb[0].mxu0
      %v766 = vadd.f32 0.0, %v765
      %v767 = vpop.f32.mrb[0].mxu0
      %768 = vmatprep.mubr.f32.mxu0 0.0
      %769 = vmatmul.mubr.f32.gmra.mrb[0].mxu0 %v667
      %v770 = vpop.f32.mrb[0].mxu0
      %v771 = vadd.f32 0.0, %v770
      %v772 = vpop.f32.mrb[0].mxu0
      %773 = vmatprep.mubr.f32.mxu0 0.0
      %774 = vmatmul.mubr.f32.gmra.mrb[0].mxu0 %v668
      %v775 = vpop.f32.mrb[0].mxu0
      %v776 = vadd.f32 0.0, %v775
      %v777 = vpop.f32.mrb[0].mxu0
      %778 = vmatprep.mubr.f32.mxu0 0.0
      %779 = vmatmul.mubr.f32.gmra.mrb[0].mxu0 %v669
      %v780 = vpop.f32.mrb[0].mxu0
      %v781 = vadd.f32 0.0, %v780
      %v782 = vpop.f32.mrb[0].mxu0
      %783 = vmatprep.mubr.f32.mxu0 0.0
      %784 = vmatmul.mubr.f32.gmra.mrb[0].mxu0 %v670
      %v785 = vpop.f32.mrb[0].mxu0
      %v786 = vadd.f32 0.0, %v785
      %v787 = vpop.f32.mrb[0].mxu0
      %788 = vmatprep.mubr.f32.mxu0 0.0
      %789 = vmatmul.mubr.f32.gmra.mrb[0].mxu0 %v671
      %v790 = vpop.f32.mrb[0].mxu0
      %v791 = vadd.f32 0.0, %v790
      %v792 = vpop.f32.mrb[0].mxu0
      %793 = vdwg.mxu0
      %v794 = vadd.f32 %v653, %v756
      %v795 = vadd.f32 %v654, %v761
      %v796 = vadd.f32 %v655, %v766
      %v797 = vadd.f32 %v656, %v771
      %v798 = vadd.f32 %v657, %v776
      %v799 = vadd.f32 %v658, %v781
      %v800 = vadd.f32 %v659, %v786
      %v801 = vadd.f32 %v660, %v791
      %v802 = vld [vmem:[%s663 + $0x1] sm:$0xff]
      %v803 = vld [vmem:[%s663 + $0x11] sm:$0xff]
      %v804 = vld [vmem:[%s663 + $0x21] sm:$0xff]
      %v805 = vld [vmem:[%s663 + $0x31] sm:$0xff]
      %v806 = vld [vmem:[%s663 + $0x41] sm:$0xff]
      %v807 = vld [vmem:[%s663 + $0x51] sm:$0xff]
      %v808 = vld [vmem:[%s663 + $0x61] sm:$0xff]
      %v809 = vld [vmem:[%s663 + $0x71] sm:$0xff]
      %s810 = scalar_lea.vmem %s238, 512
      %v811 = vld [vmem:[%s810] sm:$0xff]
      %v812 = vld [vmem:[%s810 + $0x8] sm:$0xff]
      %v813 = vld [vmem:[%s810 + $0x10] sm:$0xff]
      %v814 = vld [vmem:[%s810 + $0x18] sm:$0xff]
      %v815 = vld [vmem:[%s810 + $0x20] sm:$0xff]
      %v816 = vld [vmem:[%s810 + $0x28] sm:$0xff]
      %v817 = vld [vmem:[%s810 + $0x30] sm:$0xff]
      %v818 = vld [vmem:[%s810 + $0x38] sm:$0xff]
      %v819 = vld [vmem:[%s810 + $0x40] sm:$0xff]
      %v820 = vld [vmem:[%s810 + $0x48] sm:$0xff]
      %v821 = vld [vmem:[%s810 + $0x50] sm:$0xff]
      %v822 = vld [vmem:[%s810 + $0x58] sm:$0xff]
      %v823 = vld [vmem:[%s810 + $0x60] sm:$0xff]
      %v824 = vld [vmem:[%s810 + $0x68] sm:$0xff]
      %v825 = vld [vmem:[%s810 + $0x70] sm:$0xff]
      %v826 = vld [vmem:[%s810 + $0x78] sm:$0xff]
      %827 = vmatprep.subr.mxu0 0.0
      %828 = vmatpush1.msra.mxu0 %v811
      %829 = vmatprep.subr.mxu0 0.0
      %830 = vmatpush1.msra.mxu0 %v812
      %831 = vmatprep.subr.mxu0 0.0
      %832 = vmatpush1.msra.mxu0 %v813
      %833 = vmatprep.subr.mxu0 0.0
      %834 = vmatpush1.msra.mxu0 %v814
      %835 = vmatprep.subr.mxu0 0.0
      %836 = vmatpush1.msra.mxu0 %v815
      %837 = vmatprep.subr.mxu0 0.0
      %838 = vmatpush1.msra.mxu0 %v816
      %839 = vmatprep.subr.mxu0 0.0
      %840 = vmatpush1.msra.mxu0 %v817
      %841 = vmatprep.subr.mxu0 0.0
      %842 = vmatpush1.msra.mxu0 %v818
      %843 = vmatprep.subr.mxu0 0.0
      %844 = vmatpush1.msra.mxu0 %v819
      %845 = vmatprep.subr.mxu0 0.0
      %846 = vmatpush1.msra.mxu0 %v820
      %847 = vmatprep.subr.mxu0 0.0
      %848 = vmatpush1.msra.mxu0 %v821
      %849 = vmatprep.subr.mxu0 0.0
      %850 = vmatpush1.msra.mxu0 %v822
      %851 = vmatprep.subr.mxu0 0.0
      %852 = vmatpush1.msra.mxu0 %v823
      %853 = vmatprep.subr.mxu0 0.0
      %854 = vmatpush1.msra.mxu0 %v824
      %855 = vmatprep.subr.mxu0 0.0
      %856 = vmatpush1.msra.mxu0 %v825
      %857 = vmatprep.subr.mxu0 0.0
      %858 = vmatpush1.msra.mxu0 %v826
      %859 = vmatprep.subr.mxu0 0.0
      %860 = vmatpush1.msra.mxu0 0.0
      %861 = vmatprep.subr.mxu0 0.0
      %862 = vmatpush1.msra.mxu0 0.0
      %863 = vmatprep.subr.mxu0 0.0
      %864 = vmatpush1.msra.mxu0 0.0
      %865 = vmatprep.subr.mxu0 0.0
      %866 = vmatpush1.msra.mxu0 0.0
      %867 = vmatprep.subr.mxu0 0.0
      %868 = vmatpush1.msra.mxu0 0.0
      %869 = vmatprep.subr.mxu0 0.0
      %870 = vmatpush1.msra.mxu0 0.0
      %871 = vmatprep.subr.mxu0 0.0
      %872 = vmatpush1.msra.mxu0 0.0
      %873 = vmatprep.subr.mxu0 0.0
      %874 = vmatpush1.msra.mxu0 0.0
      %875 = vmatprep.subr.mxu0 0.0
      %876 = vmatpush1.msra.mxu0 0.0
      %877 = vmatprep.subr.mxu0 0.0
      %878 = vmatpush1.msra.mxu0 0.0
      %879 = vmatprep.subr.mxu0 0.0
      %880 = vmatpush1.msra.mxu0 0.0
      %881 = vmatprep.subr.mxu0 0.0
      %882 = vmatpush1.msra.mxu0 0.0
      %883 = vmatprep.subr.mxu0 0.0
      %884 = vmatpush1.msra.mxu0 0.0
      %885 = vmatprep.subr.mxu0 0.0
      %886 = vmatpush1.msra.mxu0 0.0
      %887 = vmatprep.subr.mxu0 0.0
      %888 = vmatpush1.msra.mxu0 0.0
      %889 = vmatprep.subr.mxu0 0.0
      %890 = vmatpush1.msra.mxu0 0.0
      %891 = vmatprep.mubr.f32.mxu0 0.0
      %892 = vmatmul.mubr.f32.gmra.mrb[0].mxu0 %v802
      %v893 = vpop.f32.mrb[0].mxu0
      %v894 = vadd.f32 0.0, %v893
      %v895 = vpop.f32.mrb[0].mxu0
      %896 = vmatprep.mubr.f32.mxu0 0.0
      %897 = vmatmul.mubr.f32.gmra.mrb[0].mxu0 %v803
      %v898 = vpop.f32.mrb[0].mxu0
      %v899 = vadd.f32 0.0, %v898
      %v900 = vpop.f32.mrb[0].mxu0
      %901 = vmatprep.mubr.f32.mxu0 0.0
      %902 = vmatmul.mubr.f32.gmra.mrb[0].mxu0 %v804
      %v903 = vpop.f32.mrb[0].mxu0
      %v904 = vadd.f32 0.0, %v903
      %v905 = vpop.f32.mrb[0].mxu0
      %906 = vmatprep.mubr.f32.mxu0 0.0
      %907 = vmatmul.mubr.f32.gmra.mrb[0].mxu0 %v805
      %v908 = vpop.f32.mrb[0].mxu0
      %v909 = vadd.f32 0.0, %v908
      %v910 = vpop.f32.mrb[0].mxu0
      %911 = vmatprep.mubr.f32.mxu0 0.0
      %912 = vmatmul.mubr.f32.gmra.mrb[0].mxu0 %v806
      %v913 = vpop.f32.mrb[0].mxu0
      %v914 = vadd.f32 0.0, %v913
      %v915 = vpop.f32.mrb[0].mxu0
      %916 = vmatprep.mubr.f32.mxu0 0.0
      %917 = vmatmul.mubr.f32.gmra.mrb[0].mxu0 %v807
      %v918 = vpop.f32.mrb[0].mxu0
      %v919 = vadd.f32 0.0, %v918
      %v920 = vpop.f32.mrb[0].mxu0
      %921 = vmatprep.mubr.f32.mxu0 0.0
      %922 = vmatmul.mubr.f32.gmra.mrb[0].mxu0 %v808
      %v923 = vpop.f32.mrb[0].mxu0
      %v924 = vadd.f32 0.0, %v923
      %v925 = vpop.f32.mrb[0].mxu0
      %926 = vmatprep.mubr.f32.mxu0 0.0
      %927 = vmatmul.mubr.f32.gmra.mrb[0].mxu0 %v809
      %v928 = vpop.f32.mrb[0].mxu0
      %v929 = vadd.f32 0.0, %v928
      %v930 = vpop.f32.mrb[0].mxu0
      %931 = vdwg.mxu0
      %v932 = vadd.f32 %v794, %v894
      %v933 = vadd.f32 %v795, %v899
      %v934 = vadd.f32 %v796, %v904
      %v935 = vadd.f32 %v797, %v909
      %v936 = vadd.f32 %v798, %v914
      %v937 = vadd.f32 %v799, %v919
      %v938 = vadd.f32 %v800, %v924
      %v939 = vadd.f32 %v801, %v929
      %v940 = vld [vmem:[%s663 + $0x2] sm:$0xff]
      %v941 = vld [vmem:[%s663 + $0x12] sm:$0xff]
      %v942 = vld [vmem:[%s663 + $0x22] sm:$0xff]
      %v943 = vld [vmem:[%s663 + $0x32] sm:$0xff]
      %v944 = vld [vmem:[%s663 + $0x42] sm:$0xff]
      %v945 = vld [vmem:[%s663 + $0x52] sm:$0xff]
      %v946 = vld [vmem:[%s663 + $0x62] sm:$0xff]
      %v947 = vld [vmem:[%s663 + $0x72] sm:$0xff]
      %s948 = scalar_lea.vmem %s238, 640
      %v949 = vld [vmem:[%s948] sm:$0xff]
      %v950 = vld [vmem:[%s948 + $0x8] sm:$0xff]
      %v951 = vld [vmem:[%s948 + $0x10] sm:$0xff]
      %v952 = vld [vmem:[%s948 + $0x18] sm:$0xff]
      %v953 = vld [vmem:[%s948 + $0x20] sm:$0xff]
      %v954 = vld [vmem:[%s948 + $0x28] sm:$0xff]
      %v955 = vld [vmem:[%s948 + $0x30] sm:$0xff]
      %v956 = vld [vmem:[%s948 + $0x38] sm:$0xff]
      %v957 = vld [vmem:[%s948 + $0x40] sm:$0xff]
      %v958 = vld [vmem:[%s948 + $0x48] sm:$0xff]
      %v959 = vld [vmem:[%s948 + $0x50] sm:$0xff]
      %v960 = vld [vmem:[%s948 + $0x58] sm:$0xff]
      %v961 = vld [vmem:[%s948 + $0x60] sm:$0xff]
      %v962 = vld [vmem:[%s948 + $0x68] sm:$0xff]
      %v963 = vld [vmem:[%s948 + $0x70] sm:$0xff]
      %v964 = vld [vmem:[%s948 + $0x78] sm:$0xff]
      %965 = vmatprep.subr.mxu0 0.0
      %966 = vmatpush1.msra.mxu0 %v949
      %967 = vmatprep.subr.mxu0 0.0
      %968 = vmatpush1.msra.mxu0 %v950
      %969 = vmatprep.subr.mxu0 0.0
      %970 = vmatpush1.msra.mxu0 %v951
      %971 = vmatprep.subr.mxu0 0.0
      %972 = vmatpush1.msra.mxu0 %v952
      %973 = vmatprep.subr.mxu0 0.0
      %974 = vmatpush1.msra.mxu0 %v953
      %975 = vmatprep.subr.mxu0 0.0
      %976 = vmatpush1.msra.mxu0 %v954
      %977 = vmatprep.subr.mxu0 0.0
      %978 = vmatpush1.msra.mxu0 %v955
      %979 = vmatprep.subr.mxu0 0.0
      %980 = vmatpush1.msra.mxu0 %v956
      %981 = vmatprep.subr.mxu0 0.0
      %982 = vmatpush1.msra.mxu0 %v957
      %983 = vmatprep.subr.mxu0 0.0
      %984 = vmatpush1.msra.mxu0 %v958
      %985 = vmatprep.subr.mxu0 0.0
      %986 = vmatpush1.msra.mxu0 %v959
      %987 = vmatprep.subr.mxu0 0.0
      %988 = vmatpush1.msra.mxu0 %v960
      %989 = vmatprep.subr.mxu0 0.0
      %990 = vmatpush1.msra.mxu0 %v961
      %991 = vmatprep.subr.mxu0 0.0
      %992 = vmatpush1.msra.mxu0 %v962
      %993 = vmatprep.subr.mxu0 0.0
      %994 = vmatpush1.msra.mxu0 %v963
      %995 = vmatprep.subr.mxu0 0.0
      %996 = vmatpush1.msra.mxu0 %v964
      %997 = vmatprep.subr.mxu0 0.0
      %998 = vmatpush1.msra.mxu0 0.0
      %999 = vmatprep.subr.mxu0 0.0
      %1000 = vmatpush1.msra.mxu0 0.0
      %1001 = vmatprep.subr.mxu0 0.0
      %1002 = vmatpush1.msra.mxu0 0.0
      %1003 = vmatprep.subr.mxu0 0.0
      %1004 = vmatpush1.msra.mxu0 0.0
      %1005 = vmatprep.subr.mxu0 0.0
      %1006 = vmatpush1.msra.mxu0 0.0
      %1007 = vmatprep.subr.mxu0 0.0
      %1008 = vmatpush1.msra.mxu0 0.0
      %1009 = vmatprep.subr.mxu0 0.0
      %1010 = vmatpush1.msra.mxu0 0.0
      %1011 = vmatprep.subr.mxu0 0.0
      %1012 = vmatpush1.msra.mxu0 0.0
      %1013 = vmatprep.subr.mxu0 0.0
      %1014 = vmatpush1.msra.mxu0 0.0
      %1015 = vmatprep.subr.mxu0 0.0
      %1016 = vmatpush1.msra.mxu0 0.0
      %1017 = vmatprep.subr.mxu0 0.0
      %1018 = vmatpush1.msra.mxu0 0.0
      %1019 = vmatprep.subr.mxu0 0.0
      %1020 = vmatpush1.msra.mxu0 0.0
      %1021 = vmatprep.subr.mxu0 0.0
      %1022 = vmatpush1.msra.mxu0 0.0
      %1023 = vmatprep.subr.mxu0 0.0
      %1024 = vmatpush1.msra.mxu0 0.0
      %1025 = vmatprep.subr.mxu0 0.0
      %1026 = vmatpush1.msra.mxu0 0.0
      %1027 = vmatprep.subr.mxu0 0.0
      %1028 = vmatpush1.msra.mxu0 0.0
      %1029 = vmatprep.mubr.f32.mxu0 0.0
      %1030 = vmatmul.mubr.f32.gmra.mrb[0].mxu0 %v940
      %v1031 = vpop.f32.mrb[0].mxu0
      %v1032 = vadd.f32 0.0, %v1031
      %v1033 = vpop.f32.mrb[0].mxu0
      %1034 = vmatprep.mubr.f32.mxu0 0.0
      %1035 = vmatmul.mubr.f32.gmra.mrb[0].mxu0 %v941
      %v1036 = vpop.f32.mrb[0].mxu0
      %v1037 = vadd.f32 0.0, %v1036
      %v1038 = vpop.f32.mrb[0].mxu0
      %1039 = vmatprep.mubr.f32.mxu0 0.0
      %1040 = vmatmul.mubr.f32.gmra.mrb[0].mxu0 %v942
      %v1041 = vpop.f32.mrb[0].mxu0
      %v1042 = vadd.f32 0.0, %v1041
      %v1043 = vpop.f32.mrb[0].mxu0
      %1044 = vmatprep.mubr.f32.mxu0 0.0
      %1045 = vmatmul.mubr.f32.gmra.mrb[0].mxu0 %v943
      %v1046 = vpop.f32.mrb[0].mxu0
      %v1047 = vadd.f32 0.0, %v1046
      %v1048 = vpop.f32.mrb[0].mxu0
      %1049 = vmatprep.mubr.f32.mxu0 0.0
      %1050 = vmatmul.mubr.f32.gmra.mrb[0].mxu0 %v944
      %v1051 = vpop.f32.mrb[0].mxu0
      %v1052 = vadd.f32 0.0, %v1051
      %v1053 = vpop.f32.mrb[0].mxu0
      %1054 = vmatprep.mubr.f32.mxu0 0.0
      %1055 = vmatmul.mubr.f32.gmra.mrb[0].mxu0 %v945
      %v1056 = vpop.f32.mrb[0].mxu0
      %v1057 = vadd.f32 0.0, %v1056
      %v1058 = vpop.f32.mrb[0].mxu0
      %1059 = vmatprep.mubr.f32.mxu0 0.0
      %1060 = vmatmul.mubr.f32.gmra.mrb[0].mxu0 %v946
      %v1061 = vpop.f32.mrb[0].mxu0
      %v1062 = vadd.f32 0.0, %v1061
      %v1063 = vpop.f32.mrb[0].mxu0
      %1064 = vmatprep.mubr.f32.mxu0 0.0
      %1065 = vmatmul.mubr.f32.gmra.mrb[0].mxu0 %v947
      %v1066 = vpop.f32.mrb[0].mxu0
      %v1067 = vadd.f32 0.0, %v1066
      %v1068 = vpop.f32.mrb[0].mxu0
      %1069 = vdwg.mxu0
      %v1070 = vadd.f32 %v932, %v1032
      %v1071 = vadd.f32 %v933, %v1037
      %v1072 = vadd.f32 %v934, %v1042
      %v1073 = vadd.f32 %v935, %v1047
      %v1074 = vadd.f32 %v936, %v1052
      %v1075 = vadd.f32 %v937, %v1057
      %v1076 = vadd.f32 %v938, %v1062
      %v1077 = vadd.f32 %v939, %v1067
      %s1078 = sadd.s32 %s261, 2
      %s1079 = smul.u32 %s1078, 16
      %s1080 = scalar_lea.vmem %s234, %s1079
      %v1081 = vld [vmem:[%s1080] sm:$0xff]
      %v1082 = vld [vmem:[%s1080 + $0x10] sm:$0xff]
      %v1083 = vld [vmem:[%s1080 + $0x20] sm:$0xff]
      %v1084 = vld [vmem:[%s1080 + $0x30] sm:$0xff]
      %v1085 = vld [vmem:[%s1080 + $0x40] sm:$0xff]
      %v1086 = vld [vmem:[%s1080 + $0x50] sm:$0xff]
      %v1087 = vld [vmem:[%s1080 + $0x60] sm:$0xff]
      %v1088 = vld [vmem:[%s1080 + $0x70] sm:$0xff]
      %s1089 = scalar_lea.vmem %s238, 768
      %v1090 = vld [vmem:[%s1089] sm:$0xff]
      %v1091 = vld [vmem:[%s1089 + $0x8] sm:$0xff]
      %v1092 = vld [vmem:[%s1089 + $0x10] sm:$0xff]
      %v1093 = vld [vmem:[%s1089 + $0x18] sm:$0xff]
      %v1094 = vld [vmem:[%s1089 + $0x20] sm:$0xff]
      %v1095 = vld [vmem:[%s1089 + $0x28] sm:$0xff]
      %v1096 = vld [vmem:[%s1089 + $0x30] sm:$0xff]
      %v1097 = vld [vmem:[%s1089 + $0x38] sm:$0xff]
      %v1098 = vld [vmem:[%s1089 + $0x40] sm:$0xff]
      %v1099 = vld [vmem:[%s1089 + $0x48] sm:$0xff]
      %v1100 = vld [vmem:[%s1089 + $0x50] sm:$0xff]
      %v1101 = vld [vmem:[%s1089 + $0x58] sm:$0xff]
      %v1102 = vld [vmem:[%s1089 + $0x60] sm:$0xff]
      %v1103 = vld [vmem:[%s1089 + $0x68] sm:$0xff]
      %v1104 = vld [vmem:[%s1089 + $0x70] sm:$0xff]
      %v1105 = vld [vmem:[%s1089 + $0x78] sm:$0xff]
      %1106 = vmatprep.subr.mxu0 0.0
      %1107 = vmatpush1.msra.mxu0 %v1090
      %1108 = vmatprep.subr.mxu0 0.0
      %1109 = vmatpush1.msra.mxu0 %v1091
      %1110 = vmatprep.subr.mxu0 0.0
      %1111 = vmatpush1.msra.mxu0 %v1092
      %1112 = vmatprep.subr.mxu0 0.0
      %1113 = vmatpush1.msra.mxu0 %v1093
      %1114 = vmatprep.subr.mxu0 0.0
      %1115 = vmatpush1.msra.mxu0 %v1094
      %1116 = vmatprep.subr.mxu0 0.0
      %1117 = vmatpush1.msra.mxu0 %v1095
      %1118 = vmatprep.subr.mxu0 0.0
      %1119 = vmatpush1.msra.mxu0 %v1096
      %1120 = vmatprep.subr.mxu0 0.0
      %1121 = vmatpush1.msra.mxu0 %v1097
      %1122 = vmatprep.subr.mxu0 0.0
      %1123 = vmatpush1.msra.mxu0 %v1098
      %1124 = vmatprep.subr.mxu0 0.0
      %1125 = vmatpush1.msra.mxu0 %v1099
      %1126 = vmatprep.subr.mxu0 0.0
      %1127 = vmatpush1.msra.mxu0 %v1100
      %1128 = vmatprep.subr.mxu0 0.0
      %1129 = vmatpush1.msra.mxu0 %v1101
      %1130 = vmatprep.subr.mxu0 0.0
      %1131 = vmatpush1.msra.mxu0 %v1102
      %1132 = vmatprep.subr.mxu0 0.0
      %1133 = vmatpush1.msra.mxu0 %v1103
      %1134 = vmatprep.subr.mxu0 0.0
      %1135 = vmatpush1.msra.mxu0 %v1104
      %1136 = vmatprep.subr.mxu0 0.0
      %1137 = vmatpush1.msra.mxu0 %v1105
      %1138 = vmatprep.subr.mxu0 0.0
      %1139 = vmatpush1.msra.mxu0 0.0
      %1140 = vmatprep.subr.mxu0 0.0
      %1141 = vmatpush1.msra.mxu0 0.0
      %1142 = vmatprep.subr.mxu0 0.0
      %1143 = vmatpush1.msra.mxu0 0.0
      %1144 = vmatprep.subr.mxu0 0.0
      %1145 = vmatpush1.msra.mxu0 0.0
      %1146 = vmatprep.subr.mxu0 0.0
      %1147 = vmatpush1.msra.mxu0 0.0
      %1148 = vmatprep.subr.mxu0 0.0
      %1149 = vmatpush1.msra.mxu0 0.0
      %1150 = vmatprep.subr.mxu0 0.0
      %1151 = vmatpush1.msra.mxu0 0.0
      %1152 = vmatprep.subr.mxu0 0.0
      %1153 = vmatpush1.msra.mxu0 0.0
      %1154 = vmatprep.subr.mxu0 0.0
      %1155 = vmatpush1.msra.mxu0 0.0
      %1156 = vmatprep.subr.mxu0 0.0
      %1157 = vmatpush1.msra.mxu0 0.0
      %1158 = vmatprep.subr.mxu0 0.0
      %1159 = vmatpush1.msra.mxu0 0.0
      %1160 = vmatprep.subr.mxu0 0.0
      %1161 = vmatpush1.msra.mxu0 0.0
      %1162 = vmatprep.subr.mxu0 0.0
      %1163 = vmatpush1.msra.mxu0 0.0
      %1164 = vmatprep.subr.mxu0 0.0
      %1165 = vmatpush1.msra.mxu0 0.0
      %1166 = vmatprep.subr.mxu0 0.0
      %1167 = vmatpush1.msra.mxu0 0.0
      %1168 = vmatprep.subr.mxu0 0.0
      %1169 = vmatpush1.msra.mxu0 0.0
      %1170 = vmatprep.mubr.f32.mxu0 0.0
      %1171 = vmatmul.mubr.f32.gmra.mrb[0].mxu0 %v1081
      %v1172 = vpop.f32.mrb[0].mxu0
      %v1173 = vadd.f32 0.0, %v1172
      %v1174 = vpop.f32.mrb[0].mxu0
      %1175 = vmatprep.mubr.f32.mxu0 0.0
      %1176 = vmatmul.mubr.f32.gmra.mrb[0].mxu0 %v1082
      %v1177 = vpop.f32.mrb[0].mxu0
      %v1178 = vadd.f32 0.0, %v1177
      %v1179 = vpop.f32.mrb[0].mxu0
      %1180 = vmatprep.mubr.f32.mxu0 0.0
      %1181 = vmatmul.mubr.f32.gmra.mrb[0].mxu0 %v1083
      %v1182 = vpop.f32.mrb[0].mxu0
      %v1183 = vadd.f32 0.0, %v1182
      %v1184 = vpop.f32.mrb[0].mxu0
      %1185 = vmatprep.mubr.f32.mxu0 0.0
      %1186 = vmatmul.mubr.f32.gmra.mrb[0].mxu0 %v1084
      %v1187 = vpop.f32.mrb[0].mxu0
      %v1188 = vadd.f32 0.0, %v1187
      %v1189 = vpop.f32.mrb[0].mxu0
      %1190 = vmatprep.mubr.f32.mxu0 0.0
      %1191 = vmatmul.mubr.f32.gmra.mrb[0].mxu0 %v1085
      %v1192 = vpop.f32.mrb[0].mxu0
      %v1193 = vadd.f32 0.0, %v1192
      %v1194 = vpop.f32.mrb[0].mxu0
      %1195 = vmatprep.mubr.f32.mxu0 0.0
      %1196 = vmatmul.mubr.f32.gmra.mrb[0].mxu0 %v1086
      %v1197 = vpop.f32.mrb[0].mxu0
      %v1198 = vadd.f32 0.0, %v1197
      %v1199 = vpop.f32.mrb[0].mxu0
      %1200 = vmatprep.mubr.f32.mxu0 0.0
      %1201 = vmatmul.mubr.f32.gmra.mrb[0].mxu0 %v1087
      %v1202 = vpop.f32.mrb[0].mxu0
      %v1203 = vadd.f32 0.0, %v1202
      %v1204 = vpop.f32.mrb[0].mxu0
      %1205 = vmatprep.mubr.f32.mxu0 0.0
      %1206 = vmatmul.mubr.f32.gmra.mrb[0].mxu0 %v1088
      %v1207 = vpop.f32.mrb[0].mxu0
      %v1208 = vadd.f32 0.0, %v1207
      %v1209 = vpop.f32.mrb[0].mxu0
      %1210 = vdwg.mxu0
      %v1211 = vadd.f32 %v1070, %v1173
      %v1212 = vadd.f32 %v1071, %v1178
      %v1213 = vadd.f32 %v1072, %v1183
      %v1214 = vadd.f32 %v1073, %v1188
      %v1215 = vadd.f32 %v1074, %v1193
      %v1216 = vadd.f32 %v1075, %v1198
      %v1217 = vadd.f32 %v1076, %v1203
      %v1218 = vadd.f32 %v1077, %v1208
      %v1219 = vld [vmem:[%s1080 + $0x1] sm:$0xff]
      %v1220 = vld [vmem:[%s1080 + $0x11] sm:$0xff]
      %v1221 = vld [vmem:[%s1080 + $0x21] sm:$0xff]
      %v1222 = vld [vmem:[%s1080 + $0x31] sm:$0xff]
      %v1223 = vld [vmem:[%s1080 + $0x41] sm:$0xff]
      %v1224 = vld [vmem:[%s1080 + $0x51] sm:$0xff]
      %v1225 = vld [vmem:[%s1080 + $0x61] sm:$0xff]
      %v1226 = vld [vmem:[%s1080 + $0x71] sm:$0xff]
      %s1227 = scalar_lea.vmem %s238, 896
      %v1228 = vld [vmem:[%s1227] sm:$0xff]
      %v1229 = vld [vmem:[%s1227 + $0x8] sm:$0xff]
      %v1230 = vld [vmem:[%s1227 + $0x10] sm:$0xff]
      %v1231 = vld [vmem:[%s1227 + $0x18] sm:$0xff]
      %v1232 = vld [vmem:[%s1227 + $0x20] sm:$0xff]
      %v1233 = vld [vmem:[%s1227 + $0x28] sm:$0xff]
      %v1234 = vld [vmem:[%s1227 + $0x30] sm:$0xff]
      %v1235 = vld [vmem:[%s1227 + $0x38] sm:$0xff]
      %v1236 = vld [vmem:[%s1227 + $0x40] sm:$0xff]
      %v1237 = vld [vmem:[%s1227 + $0x48] sm:$0xff]
      %v1238 = vld [vmem:[%s1227 + $0x50] sm:$0xff]
      %v1239 = vld [vmem:[%s1227 + $0x58] sm:$0xff]
      %v1240 = vld [vmem:[%s1227 + $0x60] sm:$0xff]
      %v1241 = vld [vmem:[%s1227 + $0x68] sm:$0xff]
      %v1242 = vld [vmem:[%s1227 + $0x70] sm:$0xff]
      %v1243 = vld [vmem:[%s1227 + $0x78] sm:$0xff]
      %1244 = vmatprep.subr.mxu0 0.0
      %1245 = vmatpush1.msra.mxu0 %v1228
      %1246 = vmatprep.subr.mxu0 0.0
      %1247 = vmatpush1.msra.mxu0 %v1229
      %1248 = vmatprep.subr.mxu0 0.0
      %1249 = vmatpush1.msra.mxu0 %v1230
      %1250 = vmatprep.subr.mxu0 0.0
      %1251 = vmatpush1.msra.mxu0 %v1231
      %1252 = vmatprep.subr.mxu0 0.0
      %1253 = vmatpush1.msra.mxu0 %v1232
      %1254 = vmatprep.subr.mxu0 0.0
      %1255 = vmatpush1.msra.mxu0 %v1233
      %1256 = vmatprep.subr.mxu0 0.0
      %1257 = vmatpush1.msra.mxu0 %v1234
      %1258 = vmatprep.subr.mxu0 0.0
      %1259 = vmatpush1.msra.mxu0 %v1235
      %1260 = vmatprep.subr.mxu0 0.0
      %1261 = vmatpush1.msra.mxu0 %v1236
      %1262 = vmatprep.subr.mxu0 0.0
      %1263 = vmatpush1.msra.mxu0 %v1237
      %1264 = vmatprep.subr.mxu0 0.0
      %1265 = vmatpush1.msra.mxu0 %v1238
      %1266 = vmatprep.subr.mxu0 0.0
      %1267 = vmatpush1.msra.mxu0 %v1239
      %1268 = vmatprep.subr.mxu0 0.0
      %1269 = vmatpush1.msra.mxu0 %v1240
      %1270 = vmatprep.subr.mxu0 0.0
      %1271 = vmatpush1.msra.mxu0 %v1241
      %1272 = vmatprep.subr.mxu0 0.0
      %1273 = vmatpush1.msra.mxu0 %v1242
      %1274 = vmatprep.subr.mxu0 0.0
      %1275 = vmatpush1.msra.mxu0 %v1243
      %1276 = vmatprep.subr.mxu0 0.0
      %1277 = vmatpush1.msra.mxu0 0.0
      %1278 = vmatprep.subr.mxu0 0.0
      %1279 = vmatpush1.msra.mxu0 0.0
      %1280 = vmatprep.subr.mxu0 0.0
      %1281 = vmatpush1.msra.mxu0 0.0
      %1282 = vmatprep.subr.mxu0 0.0
      %1283 = vmatpush1.msra.mxu0 0.0
      %1284 = vmatprep.subr.mxu0 0.0
      %1285 = vmatpush1.msra.mxu0 0.0
      %1286 = vmatprep.subr.mxu0 0.0
      %1287 = vmatpush1.msra.mxu0 0.0
      %1288 = vmatprep.subr.mxu0 0.0
      %1289 = vmatpush1.msra.mxu0 0.0
      %1290 = vmatprep.subr.mxu0 0.0
      %1291 = vmatpush1.msra.mxu0 0.0
      %1292 = vmatprep.subr.mxu0 0.0
      %1293 = vmatpush1.msra.mxu0 0.0
      %1294 = vmatprep.subr.mxu0 0.0
      %1295 = vmatpush1.msra.mxu0 0.0
      %1296 = vmatprep.subr.mxu0 0.0
      %1297 = vmatpush1.msra.mxu0 0.0
      %1298 = vmatprep.subr.mxu0 0.0
      %1299 = vmatpush1.msra.mxu0 0.0
      %1300 = vmatprep.subr.mxu0 0.0
      %1301 = vmatpush1.msra.mxu0 0.0
      %1302 = vmatprep.subr.mxu0 0.0
      %1303 = vmatpush1.msra.mxu0 0.0
      %1304 = vmatprep.subr.mxu0 0.0
      %1305 = vmatpush1.msra.mxu0 0.0
      %1306 = vmatprep.subr.mxu0 0.0
      %1307 = vmatpush1.msra.mxu0 0.0
      %1308 = vmatprep.mubr.f32.mxu0 0.0
      %1309 = vmatmul.mubr.f32.gmra.mrb[0].mxu0 %v1219
      %v1310 = vpop.f32.mrb[0].mxu0
      %v1311 = vadd.f32 0.0, %v1310
      %v1312 = vpop.f32.mrb[0].mxu0
      %1313 = vmatprep.mubr.f32.mxu0 0.0
      %1314 = vmatmul.mubr.f32.gmra.mrb[0].mxu0 %v1220
      %v1315 = vpop.f32.mrb[0].mxu0
      %v1316 = vadd.f32 0.0, %v1315
      %v1317 = vpop.f32.mrb[0].mxu0
      %1318 = vmatprep.mubr.f32.mxu0 0.0
      %1319 = vmatmul.mubr.f32.gmra.mrb[0].mxu0 %v1221
      %v1320 = vpop.f32.mrb[0].mxu0
      %v1321 = vadd.f32 0.0, %v1320
      %v1322 = vpop.f32.mrb[0].mxu0
      %1323 = vmatprep.mubr.f32.mxu0 0.0
      %1324 = vmatmul.mubr.f32.gmra.mrb[0].mxu0 %v1222
      %v1325 = vpop.f32.mrb[0].mxu0
      %v1326 = vadd.f32 0.0, %v1325
      %v1327 = vpop.f32.mrb[0].mxu0
      %1328 = vmatprep.mubr.f32.mxu0 0.0
      %1329 = vmatmul.mubr.f32.gmra.mrb[0].mxu0 %v1223
      %v1330 = vpop.f32.mrb[0].mxu0
      %v1331 = vadd.f32 0.0, %v1330
      %v1332 = vpop.f32.mrb[0].mxu0
      %1333 = vmatprep.mubr.f32.mxu0 0.0
      %1334 = vmatmul.mubr.f32.gmra.mrb[0].mxu0 %v1224
      %v1335 = vpop.f32.mrb[0].mxu0
      %v1336 = vadd.f32 0.0, %v1335
      %v1337 = vpop.f32.mrb[0].mxu0
      %1338 = vmatprep.mubr.f32.mxu0 0.0
      %1339 = vmatmul.mubr.f32.gmra.mrb[0].mxu0 %v1225
      %v1340 = vpop.f32.mrb[0].mxu0
      %v1341 = vadd.f32 0.0, %v1340
      %v1342 = vpop.f32.mrb[0].mxu0
      %1343 = vmatprep.mubr.f32.mxu0 0.0
      %1344 = vmatmul.mubr.f32.gmra.mrb[0].mxu0 %v1226
      %v1345 = vpop.f32.mrb[0].mxu0
      %v1346 = vadd.f32 0.0, %v1345
      %v1347 = vpop.f32.mrb[0].mxu0
      %1348 = vdwg.mxu0
      %v1349 = vadd.f32 %v1211, %v1311
      %v1350 = vadd.f32 %v1212, %v1316
      %v1351 = vadd.f32 %v1213, %v1321
      %v1352 = vadd.f32 %v1214, %v1326
      %v1353 = vadd.f32 %v1215, %v1331
      %v1354 = vadd.f32 %v1216, %v1336
      %v1355 = vadd.f32 %v1217, %v1341
      %v1356 = vadd.f32 %v1218, %v1346
      %v1357 = vld [vmem:[%s1080 + $0x2] sm:$0xff]
      %v1358 = vld [vmem:[%s1080 + $0x12] sm:$0xff]
      %v1359 = vld [vmem:[%s1080 + $0x22] sm:$0xff]
      %v1360 = vld [vmem:[%s1080 + $0x32] sm:$0xff]
      %v1361 = vld [vmem:[%s1080 + $0x42] sm:$0xff]
      %v1362 = vld [vmem:[%s1080 + $0x52] sm:$0xff]
      %v1363 = vld [vmem:[%s1080 + $0x62] sm:$0xff]
      %v1364 = vld [vmem:[%s1080 + $0x72] sm:$0xff]
      %s1365 = scalar_lea.vmem %s238, 1024
      %v1366 = vld [vmem:[%s1365] sm:$0xff]
      %v1367 = vld [vmem:[%s1365 + $0x8] sm:$0xff]
      %v1368 = vld [vmem:[%s1365 + $0x10] sm:$0xff]
      %v1369 = vld [vmem:[%s1365 + $0x18] sm:$0xff]
      %v1370 = vld [vmem:[%s1365 + $0x20] sm:$0xff]
      %v1371 = vld [vmem:[%s1365 + $0x28] sm:$0xff]
      %v1372 = vld [vmem:[%s1365 + $0x30] sm:$0xff]
      %v1373 = vld [vmem:[%s1365 + $0x38] sm:$0xff]
      %v1374 = vld [vmem:[%s1365 + $0x40] sm:$0xff]
      %v1375 = vld [vmem:[%s1365 + $0x48] sm:$0xff]
      %v1376 = vld [vmem:[%s1365 + $0x50] sm:$0xff]
      %v1377 = vld [vmem:[%s1365 + $0x58] sm:$0xff]
      %v1378 = vld [vmem:[%s1365 + $0x60] sm:$0xff]
      %v1379 = vld [vmem:[%s1365 + $0x68] sm:$0xff]
      %v1380 = vld [vmem:[%s1365 + $0x70] sm:$0xff]
      %v1381 = vld [vmem:[%s1365 + $0x78] sm:$0xff]
      %1382 = vmatprep.subr.mxu0 0.0
      %1383 = vmatpush1.msra.mxu0 %v1366
      %1384 = vmatprep.subr.mxu0 0.0
      %1385 = vmatpush1.msra.mxu0 %v1367
      %1386 = vmatprep.subr.mxu0 0.0
      %1387 = vmatpush1.msra.mxu0 %v1368
      %1388 = vmatprep.subr.mxu0 0.0
      %1389 = vmatpush1.msra.mxu0 %v1369
      %1390 = vmatprep.subr.mxu0 0.0
      %1391 = vmatpush1.msra.mxu0 %v1370
      %1392 = vmatprep.subr.mxu0 0.0
      %1393 = vmatpush1.msra.mxu0 %v1371
      %1394 = vmatprep.subr.mxu0 0.0
      %1395 = vmatpush1.msra.mxu0 %v1372
      %1396 = vmatprep.subr.mxu0 0.0
      %1397 = vmatpush1.msra.mxu0 %v1373
      %1398 = vmatprep.subr.mxu0 0.0
      %1399 = vmatpush1.msra.mxu0 %v1374
      %1400 = vmatprep.subr.mxu0 0.0
      %1401 = vmatpush1.msra.mxu0 %v1375
      %1402 = vmatprep.subr.mxu0 0.0
      %1403 = vmatpush1.msra.mxu0 %v1376
      %1404 = vmatprep.subr.mxu0 0.0
      %1405 = vmatpush1.msra.mxu0 %v1377
      %1406 = vmatprep.subr.mxu0 0.0
      %1407 = vmatpush1.msra.mxu0 %v1378
      %1408 = vmatprep.subr.mxu0 0.0
      %1409 = vmatpush1.msra.mxu0 %v1379
      %1410 = vmatprep.subr.mxu0 0.0
      %1411 = vmatpush1.msra.mxu0 %v1380
      %1412 = vmatprep.subr.mxu0 0.0
      %1413 = vmatpush1.msra.mxu0 %v1381
      %1414 = vmatprep.subr.mxu0 0.0
      %1415 = vmatpush1.msra.mxu0 0.0
      %1416 = vmatprep.subr.mxu0 0.0
      %1417 = vmatpush1.msra.mxu0 0.0
      %1418 = vmatprep.subr.mxu0 0.0
      %1419 = vmatpush1.msra.mxu0 0.0
      %1420 = vmatprep.subr.mxu0 0.0
      %1421 = vmatpush1.msra.mxu0 0.0
      %1422 = vmatprep.subr.mxu0 0.0
      %1423 = vmatpush1.msra.mxu0 0.0
      %1424 = vmatprep.subr.mxu0 0.0
      %1425 = vmatpush1.msra.mxu0 0.0
      %1426 = vmatprep.subr.mxu0 0.0
      %1427 = vmatpush1.msra.mxu0 0.0
      %1428 = vmatprep.subr.mxu0 0.0
      %1429 = vmatpush1.msra.mxu0 0.0
      %1430 = vmatprep.subr.mxu0 0.0
      %1431 = vmatpush1.msra.mxu0 0.0
      %1432 = vmatprep.subr.mxu0 0.0
      %1433 = vmatpush1.msra.mxu0 0.0
      %1434 = vmatprep.subr.mxu0 0.0
      %1435 = vmatpush1.msra.mxu0 0.0
      %1436 = vmatprep.subr.mxu0 0.0
      %1437 = vmatpush1.msra.mxu0 0.0
      %1438 = vmatprep.subr.mxu0 0.0
      %1439 = vmatpush1.msra.mxu0 0.0
      %1440 = vmatprep.subr.mxu0 0.0
      %1441 = vmatpush1.msra.mxu0 0.0
      %1442 = vmatprep.subr.mxu0 0.0
      %1443 = vmatpush1.msra.mxu0 0.0
      %1444 = vmatprep.subr.mxu0 0.0
      %1445 = vmatpush1.msra.mxu0 0.0
      %1446 = vmatprep.mubr.f32.mxu0 0.0
      %1447 = vmatmul.mubr.f32.gmra.mrb[0].mxu0 %v1357
      %v1448 = vpop.f32.mrb[0].mxu0
      %v1449 = vadd.f32 0.0, %v1448
      %v1450 = vpop.f32.mrb[0].mxu0
      %1451 = vmatprep.mubr.f32.mxu0 0.0
      %1452 = vmatmul.mubr.f32.gmra.mrb[0].mxu0 %v1358
      %v1453 = vpop.f32.mrb[0].mxu0
      %v1454 = vadd.f32 0.0, %v1453
      %v1455 = vpop.f32.mrb[0].mxu0
      %1456 = vmatprep.mubr.f32.mxu0 0.0
      %1457 = vmatmul.mubr.f32.gmra.mrb[0].mxu0 %v1359
      %v1458 = vpop.f32.mrb[0].mxu0
      %v1459 = vadd.f32 0.0, %v1458
      %v1460 = vpop.f32.mrb[0].mxu0
      %1461 = vmatprep.mubr.f32.mxu0 0.0
      %1462 = vmatmul.mubr.f32.gmra.mrb[0].mxu0 %v1360
      %v1463 = vpop.f32.mrb[0].mxu0
      %v1464 = vadd.f32 0.0, %v1463
      %v1465 = vpop.f32.mrb[0].mxu0
      %1466 = vmatprep.mubr.f32.mxu0 0.0
      %1467 = vmatmul.mubr.f32.gmra.mrb[0].mxu0 %v1361
      %v1468 = vpop.f32.mrb[0].mxu0
      %v1469 = vadd.f32 0.0, %v1468
      %v1470 = vpop.f32.mrb[0].mxu0
      %1471 = vmatprep.mubr.f32.mxu0 0.0
      %1472 = vmatmul.mubr.f32.gmra.mrb[0].mxu0 %v1362
      %v1473 = vpop.f32.mrb[0].mxu0
      %v1474 = vadd.f32 0.0, %v1473
      %v1475 = vpop.f32.mrb[0].mxu0
      %1476 = vmatprep.mubr.f32.mxu0 0.0
      %1477 = vmatmul.mubr.f32.gmra.mrb[0].mxu0 %v1363
      %v1478 = vpop.f32.mrb[0].mxu0
      %v1479 = vadd.f32 0.0, %v1478
      %v1480 = vpop.f32.mrb[0].mxu0
      %1481 = vmatprep.mubr.f32.mxu0 0.0
      %1482 = vmatmul.mubr.f32.gmra.mrb[0].mxu0 %v1364
      %v1483 = vpop.f32.mrb[0].mxu0
      %v1484 = vadd.f32 0.0, %v1483
      %v1485 = vpop.f32.mrb[0].mxu0
      %1486 = vdwg.mxu0
      %v1487 = vadd.f32 %v1349, %v1449
      %v1488 = vadd.f32 %v1350, %v1454
      %v1489 = vadd.f32 %v1351, %v1459
      %v1490 = vadd.f32 %v1352, %v1464
      %v1491 = vadd.f32 %v1353, %v1469
      %v1492 = vadd.f32 %v1354, %v1474
      %v1493 = vadd.f32 %v1355, %v1479
      %v1494 = vadd.f32 %v1356, %v1484
      %v1495 = vld [vmem:[%s247] sm:$0xff]
      %v1496 = vld [vmem:[%s247 + $0x8] sm:$0xff]
      %v1497 = vld [vmem:[%s247 + $0x10] sm:$0xff]
      %v1498 = vld [vmem:[%s247 + $0x18] sm:$0xff]
      %v1499 = vld [vmem:[%s247 + $0x20] sm:$0xff]
      %v1500 = vld [vmem:[%s247 + $0x28] sm:$0xff]
      %v1501 = vld [vmem:[%s247 + $0x30] sm:$0xff]
      %v1502 = vld [vmem:[%s247 + $0x38] sm:$0xff]
      %v1503 = vadd.f32 %v1487, %v1495
      %v1504 = vadd.f32 %v1488, %v1496
      %v1505 = vadd.f32 %v1489, %v1497
      %v1506 = vadd.f32 %v1490, %v1498
      %v1507 = vadd.f32 %v1491, %v1499
      %v1508 = vadd.f32 %v1492, %v1500
      %v1509 = vadd.f32 %v1493, %v1501
      %v1510 = vadd.f32 %v1494, %v1502
      %1511 = vst [vmem:[%s258] sm:$0xff] %v1503
      %1512 = vst [vmem:[%s258 + $0x8] sm:$0xff] %v1504
      %1513 = vst [vmem:[%s258 + $0x10] sm:$0xff] %v1505
      %1514 = vst [vmem:[%s258 + $0x18] sm:$0xff] %v1506
      %1515 = vst [vmem:[%s258 + $0x20] sm:$0xff] %v1507
      %1516 = vst [vmem:[%s258 + $0x28] sm:$0xff] %v1508
      %1517 = vst [vmem:[%s258 + $0x30] sm:$0xff] %v1509
      %1518 = vst [vmem:[%s258 + $0x38] sm:$0xff] %v1510
      %s1519 = sadd.s32 %s19, %s21
      %s1520 = smul.u32 8, %s1519
      %p1521 = scmp.lt.s32.totalorder %s1520, 15
      %s1522 = scalar_select %p1521, %s1520, 15
      %p1523 = scmp.lt.s32.totalorder %s20, 0
      %s1524 = scalar_select %p1523, %s20, 0
      %s1525 = sadd.s32 %s1524, %s1522
      %s1526 = smul.addr %s1525, 8
      %s1527 = scalar_lea.vmem %s3, %s1526
      // Predicated region
      $region33: #{_lambda_.7} parent=31 // pred_check
        %p1528 = pneg %p137
      $region34: #{_lambda_.7} parent=31 // pred_check_branch
        %1530 = sbr.rel (%p1528) target = $region36
      $region35: #{_lambda_.7} parent=31 // pred_region
        %s1531 = sadd.s32 %s19, %s21
        %s1532 = smul.u32 8, %s1531
      $region36: #{_lambda_.7} parent=31 // pred_fallthru
        _
    $region32: #{_lambda_.7} parent=5 // pred_fallthru
      _
    %p1533 = scmp.le.s32.totalorder 2, %s9
    // Predicated region
    $region37: #{_lambda_.7} parent=5 // pred_check
      %p1534 = pneg %p1533
    $region38: #{_lambda_.7} parent=5 // pred_check_branch
      %1536 = sbr.rel (%p1534) target = $region40
    $region39: #{_lambda_.7} parent=5 // pred_region
      %s1537 = ssub.s32 %s9, 2
      // Predicated region
      $region41: #{_lambda_.7} parent=39 // pred_check
        %p1538 = pneg %p143
      $region42: #{_lambda_.7} parent=39 // pred_check_branch
        %1540 = sbr.rel (%p1538) target = $region44
      $region43: #{_lambda_.7} parent=39 // pred_region
        %s1541 = sadd.s32 %s22, %s24
        %s1542 = smul.u32 8, %s1541
        %p1543 = scmp.lt.s32.totalorder %s1542, 15
        %s1544 = scalar_select %p1543, %s1542, 15
        %p1545 = scmp.lt.s32.totalorder %s23, 0
        %s1546 = scalar_select %p1545, %s23, 0
        %s1547 = sadd.s32 %s1546, %s1544
        %s1548 = smul.addr %s1547, 8
        %s1549 = scalar_lea.vmem %s3, %s1548
      $region44: #{_lambda_.7} parent=39 // pred_fallthru
        _
    $region40: #{_lambda_.7} parent=5 // pred_fallthru
      _
  $region6: #{_lambda_.7} parent=0 // loop_footer
    %s13 = sadd.s32 1, %s9
  $region7: #{_lambda_.7} parent=0 // loop_footer_branch
    %8 = sbr.rel target = $region3
  $region8: #{_lambda_.7} parent=0 // loop_exit
    _

</llo_original>
